<compile_context>
chip_gen: v7x
topology: tpu7x:2x2x1
jax: 0.10.0
libtpu: 0.0.40
codegen_flags: <defaults>
</compile_context>

<pallas_src>
import functools

import jax
import jax.numpy as jnp
from jax import lax
from jax.experimental import pallas as pl
from jax.experimental.pallas import tpu as pltpu

LOG_2PI = float(jnp.log(2.0 * jnp.pi))


# --------------------------------------------------------------------------- #
# Kernel
# --------------------------------------------------------------------------- #
def _policy_kernel(x_ref, w1_ref, b1_ref, w2_ref, b2_ref, w3_ref, b3_ref,
                   logstd_ref, eps_ref, *rest, precision, have_a):
    """One batch-row tile: MLP -> mu, sample pi, packed log-probs."""
    if have_a:
        a_ref, out_ref = rest
    else:
        (out_ref,) = rest

    wdt = w1_ref.dtype  # bf16 (fast MXU path) or f32 (HIGHEST precision path)

    # ---- MLP: f32 accumulate on the MXU, f32 elementwise on the VPU/EUP ----
    x = x_ref[...].astype(wdt)
    h = jnp.tanh(
        jnp.dot(x, w1_ref[...], preferred_element_type=jnp.float32,
                precision=precision) + b1_ref[...])
    h = jnp.tanh(
        jnp.dot(h.astype(wdt), w2_ref[...], preferred_element_type=jnp.float32,
                precision=precision) + b2_ref[...])
    mu = (jnp.dot(h.astype(wdt), w3_ref[...], preferred_element_type=jnp.float32,
                  precision=precision) + b3_ref[...])

    # ---- Gaussian policy ----
    log_std = logstd_ref[...]            # (1, A), broadcasts over the batch tile
    std = jnp.exp(log_std)               # EUP
    eps = eps_ref[...]
    pi = mu + std * eps

    act_dim = log_std.shape[-1]
    # Hoisted constant: added once AFTER the axis-1 reduction (shape (1,1)).
    lp_const = -jnp.sum(log_std, axis=1, keepdims=True) - 0.5 * act_dim * LOG_2PI

    # logp(pi): (pi - mu)/std == eps exactly -> no extra (TB,A) chain.
    logp_pi = -0.5 * jnp.sum(eps * eps, axis=1, keepdims=True) + lp_const

    if have_a:
        inv_std = jnp.exp(-log_std)      # EUP; avoids a divide/reciprocal
        z = (a_ref[...] - mu) * inv_std
        logp = -0.5 * jnp.sum(z * z, axis=1, keepdims=True) + lp_const
        out_ref[...] = jnp.concatenate([pi, logp, logp_pi], axis=1)   # (TB, A+2)
    else:
        out_ref[...] = jnp.concatenate([pi, logp_pi], axis=1)         # (TB, A+1)


# --------------------------------------------------------------------------- #
# Tile / VMEM sizing helpers
# --------------------------------------------------------------------------- #
def _vmem_limit_bytes():
    """Generation-aware scoped-VMEM request (v5e/v6e: 64 MiB, v7x: 32 MiB)."""
    try:
        cap = int(pltpu.get_tpu_info().vmem_capacity_bytes)
    except Exception:
        cap = 64 * 1024 * 1024  # conservative (v7x per-TC physical VMEM)
    return max(16 * 1024 * 1024, min(cap // 2, 64 * 1024 * 1024))


def _choose_batch_tile(B, per_row_bytes, batch_tile, tile_budget_bytes):
    """Largest multiple-of-8 row tile that fits the budget; >=2 tiles when B>=9."""
    if B <= 8:
        return B  # block == full batch dim satisfies the (8,128) rule
    cap = max(8, tile_budget_bytes // max(per_row_bytes, 1))
    tb = min(batch_tile, cap)
    # Guarantee at least 2 grid steps so v7x's two TensorCores both get work.
    half = -(-B // 2)
    half8 = -(-half // 8) * 8
    tb = min(tb, half8)
    return max(8, (tb // 8) * 8)


# --------------------------------------------------------------------------- #
# Wrapper
# --------------------------------------------------------------------------- #
def mlp_gaussian_policy_forward(params, x, eps, a=None, *,
                                use_bf16_matmul=True, batch_tile=4096):
    """Returns (pi, logp, logp_pi) matching the PyTorch module's forward.

    params: dict with W1,b1,W2,b2,W3,b3,log_std (weights stored [in, out]).
    x: [B, obs_dim] f32.  eps: [B, act_dim] f32 standard-normal noise.
    a: optional [B, act_dim] f32 actions (logp is None if a is None).
    use_bf16_matmul: bf16 operands into the MXU (single pass, f32 accumulate);
                     False -> f32 operands with Precision.HIGHEST.
    """
    B, obs_dim = x.shape
    h1 = params["W1"].shape[1]
    h2 = params["W2"].shape[1]
    A = params["W3"].shape[1]
    have_a = a is not None
    lp_cols = 2 if have_a else 1
    out_cols = A + lp_cols

    w_dtype = jnp.bfloat16 if use_bf16_matmul else jnp.float32
    precision = lax.Precision.DEFAULT if use_bf16_matmul else lax.Precision.HIGHEST

    W1 = params["W1"].astype(w_dtype)
    W2 = params["W2"].astype(w_dtype)
    W3 = params["W3"].astype(w_dtype)
    b1 = params["b1"].reshape(1, -1).astype(jnp.float32)
    b2 = params["b2"].reshape(1, -1).astype(jnp.float32)
    b3 = params["b3"].reshape(1, -1).astype(jnp.float32)
    log_std = params["log_std"].reshape(1, -1).astype(jnp.float32)

    # VMEM-aware batch tile: double-buffered ins/outs + live hidden intermediates.
    vmem_limit = _vmem_limit_bytes()
    per_row = 4 * (2 * (obs_dim + A + (A if have_a else 0))   # x, eps, (a), 2 buffers
                   + 2 * out_cols                              # packed output, 2 buffers
                   + h1 + h2 + 3 * A)                          # live f32 intermediates
    TB = _choose_batch_tile(B, per_row, batch_tile, vmem_limit // 2)
    grid = (pl.cdiv(B, TB),)

    kernel = functools.partial(_policy_kernel, precision=precision, have_a=have_a)

    def batch_spec(ncols):
        return pl.BlockSpec((TB, ncols), lambda i: (i, 0))

    weights = (W1, b1, W2, b2, W3, b3, log_std)
    inputs = (x,) + weights + (eps,)
    if have_a:
        inputs = inputs + (a,)

    def build_and_call(single_buffer_resident):
        def resident_spec(arr):
            nd = arr.ndim
            kw = {}
            if single_buffer_resident:
                # Constant index_map -> never re-fetched; skip the second buffer.
                kw["pipeline_mode"] = pl.Buffered(1)
            return pl.BlockSpec(arr.shape, lambda i, _nd=nd: (0,) * _nd, **kw)

        in_specs = ([batch_spec(obs_dim)]
                    + [resident_spec(w) for w in weights]
                    + [batch_spec(A)])
        if have_a:
            in_specs = in_specs + [batch_spec(A)]

        return pl.pallas_call(
            kernel,
            grid=grid,
            in_specs=in_specs,
            out_specs=batch_spec(out_cols),
            out_shape=jax.ShapeDtypeStruct((B, out_cols), jnp.float32),
            compiler_params=pltpu.CompilerParams(
                dimension_semantics=("parallel",),   # shard batch tiles across TCs
                vmem_limit_bytes=vmem_limit,
            ),
        )(*inputs)

    try:
        out = build_and_call(True)
    except Exception:
        # Fallback if single-buffered resident specs are rejected by this JAX version.
        out = build_and_call(False)

    pi = out[:, :A]
    if have_a:
        return pi, out[:, A], out[:, A + 1]
    return pi, None, out[:, A]


# --------------------------------------------------------------------------- #
# Reference + init (PyTorch-equivalent)
# --------------------------------------------------------------------------- #
def init_params(key, obs_dim, hidden_sizes, act_dim):
    """PyTorch-style uniform weight init, zero bias, log_std = -0.5 (as in the module)."""
    sizes = [obs_dim] + list(hidden_sizes) + [act_dim]
    params = {}
    keys = jax.random.split(key, len(sizes) - 1)
    for i, (fan_in, fan_out) in enumerate(zip(sizes[:-1], sizes[1:])):
        bound = 1.0 / jnp.sqrt(jnp.float32(fan_in))
        params[f"W{i+1}"] = jax.random.uniform(
            keys[i], (fan_in, fan_out), jnp.float32, -bound, bound)
        params[f"b{i+1}"] = jnp.zeros((fan_out,), jnp.float32)
    params["log_std"] = -0.5 * jnp.ones((act_dim,), jnp.float32)
    return params


def reference_forward(params, x, eps, a):
    """Pure-JAX reference (HIGHEST-precision matmuls so the f32 check is meaningful)."""
    hp = lax.Precision.HIGHEST
    h = jnp.tanh(jnp.dot(x, params["W1"], precision=hp) + params["b1"])
    h = jnp.tanh(jnp.dot(h, params["W2"], precision=hp) + params["b2"])
    mu = jnp.dot(h, params["W3"], precision=hp) + params["b3"]
    log_std = params["log_std"]
    std = jnp.exp(log_std)
    pi = mu + std * eps

    def lp(v):
        z = (v - mu) / std
        return jnp.sum(-0.5 * z * z - log_std - 0.5 * LOG_2PI, axis=1)

    return pi, lp(a), lp(pi)


# --------------------------------------------------------------------------- #
# Self-test
# --------------------------------------------------------------------------- #
if __name__ == "__main__":
    key = jax.random.PRNGKey(0)
    k_param, k_x, k_eps, k_a, k_x2, k_eps2, k_a2 = jax.random.split(key, 7)

    obs_dim, act_dim = 16, 4
    hidden_sizes = (32, 32)
    params = init_params(k_param, obs_dim, hidden_sizes, act_dim)

    # --- small batch (single tile) ---
    batch = 2
    x = jax.random.normal(k_x, (batch, obs_dim), jnp.float32)
    eps = jax.random.normal(k_eps, (batch, act_dim), jnp.float32)
    a = jax.random.normal(k_a, (batch, act_dim), jnp.float32)
    pi_r, logp_r, logp_pi_r = reference_forward(params, x, eps, a)

    # f32 (HIGHEST precision) path, a provided: tight tolerance.
    pi, logp, logp_pi = mlp_gaussian_policy_forward(
        params, x, eps, a=a, use_bf16_matmul=False)
    jax.block_until_ready((pi, logp, logp_pi))
    assert jnp.allclose(pi, pi_r, atol=1e-5), "pi mismatch (f32)"
    assert jnp.allclose(logp, logp_r, atol=1e-5), "logp mismatch (f32)"
    assert jnp.allclose(logp_pi, logp_pi_r, atol=1e-5), "logp_pi mismatch (f32)"

    # a=None path: no `a` DMA, no logp compute/store.
    pi2, logp2, logp_pi2 = mlp_gaussian_policy_forward(
        params, x, eps, a=None, use_bf16_matmul=False)
    jax.block_until_ready((pi2, logp_pi2))
    assert logp2 is None
    assert jnp.allclose(pi2, pi_r, atol=1e-5), "pi (no-a) mismatch"
    assert jnp.allclose(logp_pi2, logp_pi_r, atol=1e-5), "logp_pi (no-a) mismatch"

    # Default fast path: bf16 operands into the MXU (looser tolerance).
    pi3, logp3, logp_pi3 = mlp_gaussian_policy_forward(params, x, eps, a=a)
    jax.block_until_ready((pi3, logp3, logp_pi3))
    assert jnp.allclose(pi3, pi_r, atol=1e-1), "pi (bf16) mismatch"
    assert jnp.allclose(logp3, logp_r, atol=1e-1), "logp (bf16) mismatch"
    assert jnp.allclose(logp_pi3, logp_pi_r, atol=1e-1), "logp_pi (bf16) mismatch"

    # --- medium batch: exercises >=2 row tiles (megacore) + a partial last tile ---
    batch2 = 200
    x_l = jax.random.normal(k_x2, (batch2, obs_dim), jnp.float32)
    eps_l = jax.random.normal(k_eps2, (batch2, act_dim), jnp.float32)
    a_l = jax.random.normal(k_a2, (batch2, act_dim), jnp.float32)
    pi_lr, logp_lr, logp_pi_lr = reference_forward(params, x_l, eps_l, a_l)

    pi_l, logp_l, logp_pi_l = mlp_gaussian_policy_forward(
        params, x_l, eps_l, a=a_l, use_bf16_matmul=False)
    jax.block_until_ready((pi_l, logp_l, logp_pi_l))
    assert jnp.allclose(pi_l, pi_lr, atol=1e-5), "pi mismatch (tiled)"
    assert jnp.allclose(logp_l, logp_lr, atol=1e-5), "logp mismatch (tiled)"
    assert jnp.allclose(logp_pi_l, logp_pi_lr, atol=1e-5), "logp_pi mismatch (tiled)"

    print("KERNEL_OK")
</pallas_src>

<mosaic_0001>
module attributes {stable_mosaic.version = 11 : i64} {
  func.func @_policy_kernel(%arg0: i32, %arg1: memref<2x16xf32, #tpu.memory_space<vmem>>, %arg2: memref<16x32xf32, #tpu.memory_space<vmem>>, %arg3: memref<1x32xf32, #tpu.memory_space<vmem>>, %arg4: memref<32x32xf32, #tpu.memory_space<vmem>>, %arg5: memref<1x32xf32, #tpu.memory_space<vmem>>, %arg6: memref<32x4xf32, #tpu.memory_space<vmem>>, %arg7: memref<1x4xf32, #tpu.memory_space<vmem>>, %arg8: memref<1x4xf32, #tpu.memory_space<vmem>>, %arg9: memref<2x4xf32, #tpu.memory_space<vmem>>, %arg10: memref<2x4xf32, #tpu.memory_space<vmem>>, %arg11: memref<2x6xf32, #tpu.memory_space<vmem>>) attributes {dimension_semantics = [#tpu.dimension_semantics<parallel>], iteration_bounds = array<i64: 1>, scalar_prefetch = 0 : i64, scratch_operands = 0 : i64, tpu.core_type = #tpu.core_type<tc>, window_params = [{transform_indices = @transform_0, window_bounds = array<i64: 2, 16>}, {pipeline_mode = #tpu.pipeline_mode<synchronous>, transform_indices = @transform_1, window_bounds = array<i64: 16, 32>}, {pipeline_mode = #tpu.pipeline_mode<synchronous>, transform_indices = @transform_2, window_bounds = array<i64: 1, 32>}, {pipeline_mode = #tpu.pipeline_mode<synchronous>, transform_indices = @transform_3, window_bounds = array<i64: 32, 32>}, {pipeline_mode = #tpu.pipeline_mode<synchronous>, transform_indices = @transform_4, window_bounds = array<i64: 1, 32>}, {pipeline_mode = #tpu.pipeline_mode<synchronous>, transform_indices = @transform_5, window_bounds = array<i64: 32, 4>}, {pipeline_mode = #tpu.pipeline_mode<synchronous>, transform_indices = @transform_6, window_bounds = array<i64: 1, 4>}, {pipeline_mode = #tpu.pipeline_mode<synchronous>, transform_indices = @transform_7, window_bounds = array<i64: 1, 4>}, {transform_indices = @transform_8, window_bounds = array<i64: 2, 4>}, {transform_indices = @transform_9, window_bounds = array<i64: 2, 4>}, {transform_indices = @transform_10, window_bounds = array<i64: 2, 6>}]} {
    %c0 = arith.constant 0 : index
    %c0_0 = arith.constant 0 : index
    %0 = vector.load %arg1[%c0, %c0_0] : memref<2x16xf32, #tpu.memory_space<vmem>>, vector<2x16xf32>
    %c0_1 = arith.constant 0 : index
    %c0_2 = arith.constant 0 : index
    %1 = vector.load %arg2[%c0_1, %c0_2] : memref<16x32xf32, #tpu.memory_space<vmem>>, vector<16x32xf32>
    %cst = arith.constant dense<0.000000e+00> : vector<2x32xf32>
    %2 = tpu.matmul %0, %1, %cst {dimension_numbers = #tpu.dot_dimension_numbers<[1], [0], [0], [1], [0, 0, 1, 1], [], []>, precision = #tpu.contract_precision<fp32>} : vector<2x16xf32>, vector<16x32xf32>, vector<2x32xf32> -> vector<2x32xf32>
    %c0_3 = arith.constant 0 : index
    %c0_4 = arith.constant 0 : index
    %3 = vector.load %arg3[%c0_3, %c0_4] : memref<1x32xf32, #tpu.memory_space<vmem>>, vector<1x32xf32>
    %4 = vector.broadcast %3 : vector<1x32xf32> to vector<2x32xf32>
    %5 = arith.addf %2, %4 : vector<2x32xf32>
    %6 = math.tanh %5 : vector<2x32xf32>
    %c0_5 = arith.constant 0 : index
    %c0_6 = arith.constant 0 : index
    %7 = vector.load %arg4[%c0_5, %c0_6] : memref<32x32xf32, #tpu.memory_space<vmem>>, vector<32x32xf32>
    %cst_7 = arith.constant dense<0.000000e+00> : vector<2x32xf32>
    %8 = tpu.matmul %6, %7, %cst_7 {dimension_numbers = #tpu.dot_dimension_numbers<[1], [0], [0], [1], [0, 0, 1, 1], [], []>, precision = #tpu.contract_precision<fp32>} : vector<2x32xf32>, vector<32x32xf32>, vector<2x32xf32> -> vector<2x32xf32>
    %c0_8 = arith.constant 0 : index
    %c0_9 = arith.constant 0 : index
    %9 = vector.load %arg5[%c0_8, %c0_9] : memref<1x32xf32, #tpu.memory_space<vmem>>, vector<1x32xf32>
    %10 = vector.broadcast %9 : vector<1x32xf32> to vector<2x32xf32>
    %11 = arith.addf %8, %10 : vector<2x32xf32>
    %12 = math.tanh %11 : vector<2x32xf32>
    %c0_10 = arith.constant 0 : index
    %c0_11 = arith.constant 0 : index
    %13 = vector.load %arg6[%c0_10, %c0_11] : memref<32x4xf32, #tpu.memory_space<vmem>>, vector<32x4xf32>
    %cst_12 = arith.constant dense<0.000000e+00> : vector<2x4xf32>
    %14 = tpu.matmul %12, %13, %cst_12 {dimension_numbers = #tpu.dot_dimension_numbers<[1], [0], [0], [1], [0, 0, 1, 1], [], []>, precision = #tpu.contract_precision<fp32>} : vector<2x32xf32>, vector<32x4xf32>, vector<2x4xf32> -> vector<2x4xf32>
    %c0_13 = arith.constant 0 : index
    %c0_14 = arith.constant 0 : index
    %15 = vector.load %arg7[%c0_13, %c0_14] : memref<1x4xf32, #tpu.memory_space<vmem>>, vector<1x4xf32>
    %16 = vector.broadcast %15 : vector<1x4xf32> to vector<2x4xf32>
    %17 = arith.addf %14, %16 : vector<2x4xf32>
    %c0_15 = arith.constant 0 : index
    %c0_16 = arith.constant 0 : index
    %18 = vector.load %arg8[%c0_15, %c0_16] : memref<1x4xf32, #tpu.memory_space<vmem>>, vector<1x4xf32>
    %19 = math.exp %18 : vector<1x4xf32>
    %c0_17 = arith.constant 0 : index
    %c0_18 = arith.constant 0 : index
    %20 = vector.load %arg9[%c0_17, %c0_18] : memref<2x4xf32, #tpu.memory_space<vmem>>, vector<2x4xf32>
    %21 = vector.broadcast %19 : vector<1x4xf32> to vector<2x4xf32>
    %22 = arith.mulf %21, %20 : vector<2x4xf32>
    %23 = arith.addf %17, %22 : vector<2x4xf32>
    %cst_19 = arith.constant dense<0.000000e+00> : vector<1xf32>
    %24 = vector.multi_reduction <add>, %18, %cst_19 [1] : vector<1x4xf32> to vector<1xf32>
    %25 = vector.shape_cast %24 : vector<1xf32> to vector<1x1xf32>
    %cst_20 = arith.constant 0.000000e+00 : f32
    %26 = vector.broadcast %cst_20 : f32 to vector<1x1xf32>
    %27 = arith.subf %26, %25 : vector<1x1xf32>
    %cst_21 = arith.constant 3.67575407 : f32
    %28 = vector.broadcast %cst_21 : f32 to vector<1x1xf32>
    %29 = arith.subf %27, %28 : vector<1x1xf32>
    %30 = arith.mulf %20, %20 : vector<2x4xf32>
    %cst_22 = arith.constant dense<0.000000e+00> : vector<2xf32>
    %31 = vector.multi_reduction <add>, %30, %cst_22 [1] : vector<2x4xf32> to vector<2xf32>
    %32 = vector.shape_cast %31 : vector<2xf32> to vector<2x1xf32>
    %cst_23 = arith.constant -5.000000e-01 : f32
    %33 = vector.broadcast %cst_23 : f32 to vector<2x1xf32>
    %34 = arith.mulf %33, %32 : vector<2x1xf32>
    %35 = vector.broadcast %29 : vector<1x1xf32> to vector<2x1xf32>
    %36 = arith.addf %34, %35 : vector<2x1xf32>
    %cst_24 = arith.constant 0.000000e+00 : f32
    %37 = vector.broadcast %cst_24 : f32 to vector<1x4xf32>
    %38 = arith.subf %37, %18 : vector<1x4xf32>
    %39 = math.exp %38 : vector<1x4xf32>
    %c0_25 = arith.constant 0 : index
    %c0_26 = arith.constant 0 : index
    %40 = vector.load %arg10[%c0_25, %c0_26] : memref<2x4xf32, #tpu.memory_space<vmem>>, vector<2x4xf32>
    %41 = arith.subf %40, %17 : vector<2x4xf32>
    %42 = vector.broadcast %39 : vector<1x4xf32> to vector<2x4xf32>
    %43 = arith.mulf %41, %42 : vector<2x4xf32>
    %44 = arith.mulf %43, %43 : vector<2x4xf32>
    %cst_27 = arith.constant dense<0.000000e+00> : vector<2xf32>
    %45 = vector.multi_reduction <add>, %44, %cst_27 [1] : vector<2x4xf32> to vector<2xf32>
    %46 = vector.shape_cast %45 : vector<2xf32> to vector<2x1xf32>
    %cst_28 = arith.constant -5.000000e-01 : f32
    %47 = vector.broadcast %cst_28 : f32 to vector<2x1xf32>
    %48 = arith.mulf %47, %46 : vector<2x1xf32>
    %49 = vector.broadcast %29 : vector<1x1xf32> to vector<2x1xf32>
    %50 = arith.addf %48, %49 : vector<2x1xf32>
    %51 = tpu.concatenate %23, %50, %36 in 1 : vector<2x4xf32>, vector<2x1xf32>, vector<2x1xf32> -> vector<2x6xf32>
    %c0_29 = arith.constant 0 : index
    %c0_30 = arith.constant 0 : index
    %52 = vector.load %arg11[%c0_29, %c0_30] : memref<2x6xf32, #tpu.memory_space<vmem>>, vector<2x6xf32>
    tpu.vector_store %arg11[%c0_29, %c0_30], %51 {strides = array<i32>} : memref<2x6xf32, #tpu.memory_space<vmem>>, vector<2x6xf32>,
    return
  }
  func.func @transform_0(%arg0: i32) -> (i32, i32) {
    %c0_i32 = arith.constant 0 : i32
    %c0_i32_0 = arith.constant 0 : i32
    return %arg0, %c0_i32 : i32, i32
  }
  func.func @transform_1(%arg0: i32) -> (i32, i32) {
    %c0_i32 = arith.constant 0 : i32
    %c0_i32_0 = arith.constant 0 : i32
    %c0_i32_1 = arith.constant 0 : i32
    return %c0_i32, %c0_i32_0 : i32, i32
  }
  func.func @transform_2(%arg0: i32) -> (i32, i32) {
    %c0_i32 = arith.constant 0 : i32
    %c0_i32_0 = arith.constant 0 : i32
    %c0_i32_1 = arith.constant 0 : i32
    return %c0_i32, %c0_i32_0 : i32, i32
  }
  func.func @transform_3(%arg0: i32) -> (i32, i32) {
    %c0_i32 = arith.constant 0 : i32
    %c0_i32_0 = arith.constant 0 : i32
    %c0_i32_1 = arith.constant 0 : i32
    return %c0_i32, %c0_i32_0 : i32, i32
  }
  func.func @transform_4(%arg0: i32) -> (i32, i32) {
    %c0_i32 = arith.constant 0 : i32
    %c0_i32_0 = arith.constant 0 : i32
    %c0_i32_1 = arith.constant 0 : i32
    return %c0_i32, %c0_i32_0 : i32, i32
  }
  func.func @transform_5(%arg0: i32) -> (i32, i32) {
    %c0_i32 = arith.constant 0 : i32
    %c0_i32_0 = arith.constant 0 : i32
    %c0_i32_1 = arith.constant 0 : i32
    return %c0_i32, %c0_i32_0 : i32, i32
  }
  func.func @transform_6(%arg0: i32) -> (i32, i32) {
    %c0_i32 = arith.constant 0 : i32
    %c0_i32_0 = arith.constant 0 : i32
    %c0_i32_1 = arith.constant 0 : i32
    return %c0_i32, %c0_i32_0 : i32, i32
  }
  func.func @transform_7(%arg0: i32) -> (i32, i32) {
    %c0_i32 = arith.constant 0 : i32
    %c0_i32_0 = arith.constant 0 : i32
    %c0_i32_1 = arith.constant 0 : i32
    return %c0_i32, %c0_i32_0 : i32, i32
  }
  func.func @transform_8(%arg0: i32) -> (i32, i32) {
    %c0_i32 = arith.constant 0 : i32
    %c0_i32_0 = arith.constant 0 : i32
    return %arg0, %c0_i32 : i32, i32
  }
  func.func @transform_9(%arg0: i32) -> (i32, i32) {
    %c0_i32 = arith.constant 0 : i32
    %c0_i32_0 = arith.constant 0 : i32
    return %arg0, %c0_i32 : i32, i32
  }
  func.func @transform_10(%arg0: i32) -> (i32, i32) {
    %c0_i32 = arith.constant 0 : i32
    %c0_i32_0 = arith.constant 0 : i32
    return %arg0, %c0_i32 : i32, i32
  }
}

module attributes {stable_mosaic.version = 11 : i64} {
  func.func @_policy_kernel(%arg0: i32, %arg1: memref<2x16xf32, #tpu.memory_space<vmem>>, %arg2: memref<16x32xf32, #tpu.memory_space<vmem>>, %arg3: memref<1x32xf32, #tpu.memory_space<vmem>>, %arg4: memref<32x32xf32, #tpu.memory_space<vmem>>, %arg5: memref<1x32xf32, #tpu.memory_space<vmem>>, %arg6: memref<32x4xf32, #tpu.memory_space<vmem>>, %arg7: memref<1x4xf32, #tpu.memory_space<vmem>>, %arg8: memref<1x4xf32, #tpu.memory_space<vmem>>, %arg9: memref<2x4xf32, #tpu.memory_space<vmem>>, %arg10: memref<2x4xf32, #tpu.memory_space<vmem>>, %arg11: memref<2x6xf32, #tpu.memory_space<vmem>>) attributes {dimension_semantics = [#tpu.dimension_semantics<parallel>], iteration_bounds = array<i64: 1>, scalar_prefetch = 0 : i64, scratch_operands = 0 : i64, tpu.core_type = #tpu.core_type<tc>, window_params = [{transform_indices = @transform_0, window_bounds = array<i64: 2, 16>}, {pipeline_mode = #tpu.pipeline_mode<synchronous>, transform_indices = @transform_1, window_bounds = array<i64: 16, 32>}, {pipeline_mode = #tpu.pipeline_mode<synchronous>, transform_indices = @transform_2, window_bounds = array<i64: 1, 32>}, {pipeline_mode = #tpu.pipeline_mode<synchronous>, transform_indices = @transform_3, window_bounds = array<i64: 32, 32>}, {pipeline_mode = #tpu.pipeline_mode<synchronous>, transform_indices = @transform_4, window_bounds = array<i64: 1, 32>}, {pipeline_mode = #tpu.pipeline_mode<synchronous>, transform_indices = @transform_5, window_bounds = array<i64: 32, 4>}, {pipeline_mode = #tpu.pipeline_mode<synchronous>, transform_indices = @transform_6, window_bounds = array<i64: 1, 4>}, {pipeline_mode = #tpu.pipeline_mode<synchronous>, transform_indices = @transform_7, window_bounds = array<i64: 1, 4>}, {transform_indices = @transform_8, window_bounds = array<i64: 2, 4>}, {transform_indices = @transform_9, window_bounds = array<i64: 2, 4>}, {transform_indices = @transform_10, window_bounds = array<i64: 2, 6>}]} {
    %c0 = arith.constant 0 : index
    %c0_0 = arith.constant 0 : index
    %0 = vector.load %arg1[%c0, %c0_0] : memref<2x16xf32, #tpu.memory_space<vmem>>, vector<2x16xf32>
    %c0_1 = arith.constant 0 : index
    %c0_2 = arith.constant 0 : index
    %1 = vector.load %arg2[%c0_1, %c0_2] : memref<16x32xf32, #tpu.memory_space<vmem>>, vector<16x32xf32>
    %cst = arith.constant dense<0.000000e+00> : vector<2x32xf32>
    %2 = tpu.matmul %0, %1, %cst {dimension_numbers = #tpu.dot_dimension_numbers<[1], [0], [0], [1], [0, 0, 1, 1], [], []>, precision = #tpu.contract_precision<fp32>} : vector<2x16xf32>, vector<16x32xf32>, vector<2x32xf32> -> vector<2x32xf32>
    %c0_3 = arith.constant 0 : index
    %c0_4 = arith.constant 0 : index
    %3 = vector.load %arg3[%c0_3, %c0_4] : memref<1x32xf32, #tpu.memory_space<vmem>>, vector<1x32xf32>
    %4 = vector.broadcast %3 : vector<1x32xf32> to vector<2x32xf32>
    %5 = arith.addf %2, %4 : vector<2x32xf32>
    %6 = math.tanh %5 : vector<2x32xf32>
    %c0_5 = arith.constant 0 : index
    %c0_6 = arith.constant 0 : index
    %7 = vector.load %arg4[%c0_5, %c0_6] : memref<32x32xf32, #tpu.memory_space<vmem>>, vector<32x32xf32>
    %cst_7 = arith.constant dense<0.000000e+00> : vector<2x32xf32>
    %8 = tpu.matmul %6, %7, %cst_7 {dimension_numbers = #tpu.dot_dimension_numbers<[1], [0], [0], [1], [0, 0, 1, 1], [], []>, precision = #tpu.contract_precision<fp32>} : vector<2x32xf32>, vector<32x32xf32>, vector<2x32xf32> -> vector<2x32xf32>
    %c0_8 = arith.constant 0 : index
    %c0_9 = arith.constant 0 : index
    %9 = vector.load %arg5[%c0_8, %c0_9] : memref<1x32xf32, #tpu.memory_space<vmem>>, vector<1x32xf32>
    %10 = vector.broadcast %9 : vector<1x32xf32> to vector<2x32xf32>
    %11 = arith.addf %8, %10 : vector<2x32xf32>
    %12 = math.tanh %11 : vector<2x32xf32>
    %c0_10 = arith.constant 0 : index
    %c0_11 = arith.constant 0 : index
    %13 = vector.load %arg6[%c0_10, %c0_11] : memref<32x4xf32, #tpu.memory_space<vmem>>, vector<32x4xf32>
    %cst_12 = arith.constant dense<0.000000e+00> : vector<2x4xf32>
    %14 = tpu.matmul %12, %13, %cst_12 {dimension_numbers = #tpu.dot_dimension_numbers<[1], [0], [0], [1], [0, 0, 1, 1], [], []>, precision = #tpu.contract_precision<fp32>} : vector<2x32xf32>, vector<32x4xf32>, vector<2x4xf32> -> vector<2x4xf32>
    %c0_13 = arith.constant 0 : index
    %c0_14 = arith.constant 0 : index
    %15 = vector.load %arg7[%c0_13, %c0_14] : memref<1x4xf32, #tpu.memory_space<vmem>>, vector<1x4xf32>
    %16 = vector.broadcast %15 : vector<1x4xf32> to vector<2x4xf32>
    %17 = arith.addf %14, %16 : vector<2x4xf32>
    %c0_15 = arith.constant 0 : index
    %c0_16 = arith.constant 0 : index
    %18 = vector.load %arg8[%c0_15, %c0_16] : memref<1x4xf32, #tpu.memory_space<vmem>>, vector<1x4xf32>
    %19 = math.exp %18 : vector<1x4xf32>
    %c0_17 = arith.constant 0 : index
    %c0_18 = arith.constant 0 : index
    %20 = vector.load %arg9[%c0_17, %c0_18] : memref<2x4xf32, #tpu.memory_space<vmem>>, vector<2x4xf32>
    %21 = vector.broadcast %19 : vector<1x4xf32> to vector<2x4xf32>
    %22 = arith.mulf %21, %20 : vector<2x4xf32>
    %23 = arith.addf %17, %22 : vector<2x4xf32>
    %cst_19 = arith.constant dense<0.000000e+00> : vector<1xf32>
    %24 = vector.multi_reduction <add>, %18, %cst_19 [1] : vector<1x4xf32> to vector<1xf32>
    %25 = vector.shape_cast %24 : vector<1xf32> to vector<1x1xf32>
    %cst_20 = arith.constant 0.000000e+00 : f32
    %26 = vector.broadcast %cst_20 : f32 to vector<1x1xf32>
    %27 = arith.subf %26, %25 : vector<1x1xf32>
    %cst_21 = arith.constant 3.67575407 : f32
    %28 = vector.broadcast %cst_21 : f32 to vector<1x1xf32>
    %29 = arith.subf %27, %28 : vector<1x1xf32>
    %30 = arith.mulf %20, %20 : vector<2x4xf32>
    %cst_22 = arith.constant dense<0.000000e+00> : vector<2xf32>
    %31 = vector.multi_reduction <add>, %30, %cst_22 [1] : vector<2x4xf32> to vector<2xf32>
    %32 = vector.shape_cast %31 : vector<2xf32> to vector<2x1xf32>
    %cst_23 = arith.constant -5.000000e-01 : f32
    %33 = vector.broadcast %cst_23 : f32 to vector<2x1xf32>
    %34 = arith.mulf %33, %32 : vector<2x1xf32>
    %35 = vector.broadcast %29 : vector<1x1xf32> to vector<2x1xf32>
    %36 = arith.addf %34, %35 : vector<2x1xf32>
    %cst_24 = arith.constant 0.000000e+00 : f32
    %37 = vector.broadcast %cst_24 : f32 to vector<1x4xf32>
    %38 = arith.subf %37, %18 : vector<1x4xf32>
    %39 = math.exp %38 : vector<1x4xf32>
    %c0_25 = arith.constant 0 : index
    %c0_26 = arith.constant 0 : index
    %40 = vector.load %arg10[%c0_25, %c0_26] : memref<2x4xf32, #tpu.memory_space<vmem>>, vector<2x4xf32>
    %41 = arith.subf %40, %17 : vector<2x4xf32>
    %42 = vector.broadcast %39 : vector<1x4xf32> to vector<2x4xf32>
    %43 = arith.mulf %41, %42 : vector<2x4xf32>
    %44 = arith.mulf %43, %43 : vector<2x4xf32>
    %cst_27 = arith.constant dense<0.000000e+00> : vector<2xf32>
    %45 = vector.multi_reduction <add>, %44, %cst_27 [1] : vector<2x4xf32> to vector<2xf32>
    %46 = vector.shape_cast %45 : vector<2xf32> to vector<2x1xf32>
    %cst_28 = arith.constant -5.000000e-01 : f32
    %47 = vector.broadcast %cst_28 : f32 to vector<2x1xf32>
    %48 = arith.mulf %47, %46 : vector<2x1xf32>
    %49 = vector.broadcast %29 : vector<1x1xf32> to vector<2x1xf32>
    %50 = arith.addf %48, %49 : vector<2x1xf32>
    %51 = tpu.concatenate %23, %50, %36 in 1 : vector<2x4xf32>, vector<2x1xf32>, vector<2x1xf32> -> vector<2x6xf32>
    %c0_29 = arith.constant 0 : index
    %c0_30 = arith.constant 0 : index
    %52 = vector.load %arg11[%c0_29, %c0_30] : memref<2x6xf32, #tpu.memory_space<vmem>>, vector<2x6xf32>
    tpu.vector_store %arg11[%c0_29, %c0_30], %51 {strides = array<i32>} : memref<2x6xf32, #tpu.memory_space<vmem>>, vector<2x6xf32>,
    return
  }
  func.func @transform_0(%arg0: i32) -> (i32, i32) {
    %c0_i32 = arith.constant 0 : i32
    %c0_i32_0 = arith.constant 0 : i32
    return %arg0, %c0_i32 : i32, i32
  }
  func.func @transform_1(%arg0: i32) -> (i32, i32) {
    %c0_i32 = arith.constant 0 : i32
    %c0_i32_0 = arith.constant 0 : i32
    %c0_i32_1 = arith.constant 0 : i32
    return %c0_i32, %c0_i32_0 : i32, i32
  }
  func.func @transform_2(%arg0: i32) -> (i32, i32) {
    %c0_i32 = arith.constant 0 : i32
    %c0_i32_0 = arith.constant 0 : i32
    %c0_i32_1 = arith.constant 0 : i32
    return %c0_i32, %c0_i32_0 : i32, i32
  }
  func.func @transform_3(%arg0: i32) -> (i32, i32) {
    %c0_i32 = arith.constant 0 : i32
    %c0_i32_0 = arith.constant 0 : i32
    %c0_i32_1 = arith.constant 0 : i32
    return %c0_i32, %c0_i32_0 : i32, i32
  }
  func.func @transform_4(%arg0: i32) -> (i32, i32) {
    %c0_i32 = arith.constant 0 : i32
    %c0_i32_0 = arith.constant 0 : i32
    %c0_i32_1 = arith.constant 0 : i32
    return %c0_i32, %c0_i32_0 : i32, i32
  }
  func.func @transform_5(%arg0: i32) -> (i32, i32) {
    %c0_i32 = arith.constant 0 : i32
    %c0_i32_0 = arith.constant 0 : i32
    %c0_i32_1 = arith.constant 0 : i32
    return %c0_i32, %c0_i32_0 : i32, i32
  }
  func.func @transform_6(%arg0: i32) -> (i32, i32) {
    %c0_i32 = arith.constant 0 : i32
    %c0_i32_0 = arith.constant 0 : i32
    %c0_i32_1 = arith.constant 0 : i32
    return %c0_i32, %c0_i32_0 : i32, i32
  }
  func.func @transform_7(%arg0: i32) -> (i32, i32) {
    %c0_i32 = arith.constant 0 : i32
    %c0_i32_0 = arith.constant 0 : i32
    %c0_i32_1 = arith.constant 0 : i32
    return %c0_i32, %c0_i32_0 : i32, i32
  }
  func.func @transform_8(%arg0: i32) -> (i32, i32) {
    %c0_i32 = arith.constant 0 : i32
    %c0_i32_0 = arith.constant 0 : i32
    return %arg0, %c0_i32 : i32, i32
  }
  func.func @transform_9(%arg0: i32) -> (i32, i32) {
    %c0_i32 = arith.constant 0 : i32
    %c0_i32_0 = arith.constant 0 : i32
    return %arg0, %c0_i32 : i32, i32
  }
  func.func @transform_10(%arg0: i32) -> (i32, i32) {
    %c0_i32 = arith.constant 0 : i32
    %c0_i32_0 = arith.constant 0 : i32
    return %arg0, %c0_i32 : i32, i32
  }
}

</mosaic_0001>

<llo_original>
// kernel: tpu_custom_call.1
$region0: #{tpu_custom_call.1}
  #allocation0 [shape = 'u32[]', space=smem, size = 0x4, offset = 0x4, fixed_abs, tag = 'smem constant byte address 0x4 - core index']
  #allocation1 [shape = 'u32[144,128]{1,0:T(1,128)}', space=vmem, size = 0x12000, scoped, tag = 'internal scratch']
  %s0 = inlined_call_operand.vmem [shape: f32[2,16], index: 0, kind: input, shape index: {}]
  %s1 = inlined_call_operand.hbm [shape: f32[16,32], index: 1, kind: input, shape index: {}]
  %s2 = inlined_call_operand.vmem [shape: f32[1,32], index: 2, kind: input, shape index: {}]
  %s3 = inlined_call_operand.vmem [shape: f32[32,32], index: 3, kind: input, shape index: {}]
  %s4 = inlined_call_operand.vmem [shape: f32[1,32], index: 4, kind: input, shape index: {}]
  %s5 = inlined_call_operand.vmem [shape: f32[32,4], index: 5, kind: input, shape index: {}]
  %s6 = inlined_call_operand.vmem [shape: f32[1,4], index: 6, kind: input, shape index: {}]
  %s7 = inlined_call_operand.vmem [shape: f32[1,4], index: 7, kind: input, shape index: {}]
  %s8 = inlined_call_operand.vmem [shape: f32[2,4], index: 8, kind: input, shape index: {}]
  %s9 = inlined_call_operand.vmem [shape: f32[2,4], index: 9, kind: input, shape index: {}]
  %s10 = inlined_call_operand.hbm [shape: f32[2,6], index: 10, kind: output, shape index: {}]
  %s11 = sld [smem:[#allocation0]]
  $region54: #{tpu_custom_call.1} parent=0
    _
  %s13 = ssub.s32 1, %s11
  %s14 = scalar_select 0, %s13, %s11
  $region1: #{tpu_custom_call.1} parent=0
    #allocation2 [shape = 'u8[8192]{0}', space=vmem, size = 0x2000, scoped, tag = 'input window, operand 1, single buffered']
    #allocation3 [shape = 's32[1]{0}', space=sflag, size = 0x4, scoped, tag = 'scoped memory for tpu_custom_call.1']
    #allocation4 [shape = 's32[1]{0}', space=sflag, size = 0x4, scoped, tag = 'scoped memory for tpu_custom_call.1']
    #allocation5 [shape = 'u8[1024]{0}', space=vmem, size = 0x400, scoped, tag = 'output window, operand 0, single buffered']
    %15 = vsyncpa [#allocation3], 0
    %16 = vsyncpa [#allocation4], 0
    // Predicated region
    $region2: #{tpu_custom_call.1} parent=1 // pred_check
      _
    $region3: #{tpu_custom_call.1} parent=1 // pred_check_branch
      %18 = sbr.rel (0) target = $region5
    $region4: #{tpu_custom_call.1} parent=1 // pred_region
      _
    $region5: #{tpu_custom_call.1} parent=1 // pred_fallthru
      _
    // Predicated region
    $region6: #{tpu_custom_call.1} parent=1 // pred_check
      _
    $region7: #{tpu_custom_call.1} parent=1 // pred_check_branch
      %20 = sbr.rel (0) target = $region9
    $region8: #{tpu_custom_call.1} parent=1 // pred_region
      %s22 = ssub.s32 256, 256
      %23 = vsyncadd [#allocation3], %s22
      %s24 = sshll.u32 [#allocation2], 4
      %s25 = int_to_ptr.vmem [resolvable:$true] %s24
      %30 = dma.hbm_to_vmem [thread:$0]  %s1, 256, %s25, [#allocation3], 128, 128, 8
    $region9: #{tpu_custom_call.1} parent=1 // pred_fallthru
      _
    // Predicated region
    $region10: #{tpu_custom_call.1} parent=1 // pred_check
      _
    $region11: #{tpu_custom_call.1} parent=1 // pred_check_branch
      %32 = sbr.rel (0) target = $region13
    $region12: #{tpu_custom_call.1} parent=1 // pred_region
      _
    $region13: #{tpu_custom_call.1} parent=1 // pred_fallthru
      _
    // Predicated region
    $region14: #{tpu_custom_call.1} parent=1 // pred_check
      _
    $region15: #{tpu_custom_call.1} parent=1 // pred_check_branch
      %34 = sbr.rel (0) target = $region17
    $region16: #{tpu_custom_call.1} parent=1 // pred_region
      _
    $region17: #{tpu_custom_call.1} parent=1 // pred_fallthru
      _
    // Predicated region
    $region18: #{tpu_custom_call.1} parent=1 // pred_check
      _
    $region19: #{tpu_custom_call.1} parent=1 // pred_check_branch
      %36 = sbr.rel (0) target = $region21
    $region20: #{tpu_custom_call.1} parent=1 // pred_region
      _
    $region21: #{tpu_custom_call.1} parent=1 // pred_fallthru
      _
    // Predicated region
    $region22: #{tpu_custom_call.1} parent=1 // pred_check
      _
    $region23: #{tpu_custom_call.1} parent=1 // pred_check_branch
      %38 = sbr.rel (0) target = $region25
    $region24: #{tpu_custom_call.1} parent=1 // pred_region
      _
    $region25: #{tpu_custom_call.1} parent=1 // pred_fallthru
      _
    // Predicated region
    $region26: #{tpu_custom_call.1} parent=1 // pred_check
      _
    $region27: #{tpu_custom_call.1} parent=1 // pred_check_branch
      %40 = sbr.rel (0) target = $region29
    $region28: #{tpu_custom_call.1} parent=1 // pred_region
      _
    $region29: #{tpu_custom_call.1} parent=1 // pred_fallthru
      _
    // Predicated region
    $region30: #{tpu_custom_call.1} parent=1 // pred_check
      _
    $region31: #{tpu_custom_call.1} parent=1 // pred_check_branch
      %42 = sbr.rel (0) target = $region33
    $region32: #{tpu_custom_call.1} parent=1 // pred_region
      _
    $region33: #{tpu_custom_call.1} parent=1 // pred_fallthru
      _
    // Predicated region
    $region34: #{tpu_custom_call.1} parent=1 // pred_check
      _
    $region35: #{tpu_custom_call.1} parent=1 // pred_check_branch
      %44 = sbr.rel (0) target = $region37
    $region36: #{tpu_custom_call.1} parent=1 // pred_region
      _
    $region37: #{tpu_custom_call.1} parent=1 // pred_fallthru
      _
    // Predicated region
    $region38: #{tpu_custom_call.1} parent=1 // pred_check
      _
    $region39: #{tpu_custom_call.1} parent=1 // pred_check_branch
      %46 = sbr.rel (0) target = $region41
    $region40: #{tpu_custom_call.1} parent=1 // pred_region
      _
    $region41: #{tpu_custom_call.1} parent=1 // pred_fallthru
      _
    // Predicated region
    $region42: #{tpu_custom_call.1} parent=1 // pred_check
      _
    $region43: #{tpu_custom_call.1} parent=1 // pred_check_branch
      %48 = sbr.rel (0) target = $region45
    $region44: #{tpu_custom_call.1} parent=1 // pred_region
      %49 = dma.done [#allocation3], 256
    $region45: #{tpu_custom_call.1} parent=1 // pred_fallthru
      _
    %v50 = vld [vmem:[%s0] sm:$0x3]
    %v51 = vld [vmem:[#allocation2] sm:$0xff]
    %v52 = vld [vmem:[#allocation2 + $0x8] sm:$0xff]
    %v53 = vld [vmem:[%s2] sm:$0x1]
    %v55 = vlaneseq
    %v56 = vshrl.u32 %v55, 7
    %v57 = vsub.s32 0, %v56
    %v58 = vrot.slane %v53, %v57
    %vm60 = vcmask 130048
    %v62 = vsel %vm60, %v50, 0
    %64 = vmatprep.subr.mxu0 0.0
    %v65 = vand.u32 %v51, 4294901760
    %66 = vmatpush1.msra.mxu0 %v65
    %67 = vmatprep.subr.mxu0 0.0
    %v68 = vand.u32 %v52, 4294901760
    %69 = vmatpush1.msra.mxu0 %v68
    %70 = vmatprep.subr.mxu0 0.0
    %71 = vmatpush1.msra.mxu0 0.0
    %72 = vmatprep.subr.mxu0 0.0
    %73 = vmatpush1.msra.mxu0 0.0
    %74 = vmatprep.subr.mxu0 0.0
    %75 = vmatpush1.msra.mxu0 0.0
    %76 = vmatprep.subr.mxu0 0.0
    %77 = vmatpush1.msra.mxu0 0.0
    %78 = vmatprep.subr.mxu0 0.0
    %79 = vmatpush1.msra.mxu0 0.0
    %80 = vmatprep.subr.mxu0 0.0
    %81 = vmatpush1.msra.mxu0 0.0
    %82 = vmatprep.subr.mxu0 0.0
    %83 = vmatpush1.msra.mxu0 0.0
    %84 = vmatprep.subr.mxu0 0.0
    %85 = vmatpush1.msra.mxu0 0.0
    %86 = vmatprep.subr.mxu0 0.0
    %87 = vmatpush1.msra.mxu0 0.0
    %88 = vmatprep.subr.mxu0 0.0
    %89 = vmatpush1.msra.mxu0 0.0
    %90 = vmatprep.subr.mxu0 0.0
    %91 = vmatpush1.msra.mxu0 0.0
    %92 = vmatprep.subr.mxu0 0.0
    %93 = vmatpush1.msra.mxu0 0.0
    %94 = vmatprep.subr.mxu0 0.0
    %95 = vmatpush1.msra.mxu0 0.0
    %96 = vmatprep.subr.mxu0 0.0
    %97 = vmatpush1.msra.mxu0 0.0
    %98 = vmatprep.subr.mxu0 0.0
    %99 = vmatpush1.msra.mxu0 0.0
    %100 = vmatprep.subr.mxu0 0.0
    %101 = vmatpush1.msra.mxu0 0.0
    %102 = vmatprep.subr.mxu0 0.0
    %103 = vmatpush1.msra.mxu0 0.0
    %104 = vmatprep.subr.mxu0 0.0
    %105 = vmatpush1.msra.mxu0 0.0
    %106 = vmatprep.subr.mxu0 0.0
    %107 = vmatpush1.msra.mxu0 0.0
    %108 = vmatprep.subr.mxu0 0.0
    %109 = vmatpush1.msra.mxu0 0.0
    %110 = vmatprep.subr.mxu0 0.0
    %111 = vmatpush1.msra.mxu0 0.0
    %112 = vmatprep.subr.mxu0 0.0
    %113 = vmatpush1.msra.mxu0 0.0
    %114 = vmatprep.subr.mxu0 0.0
    %115 = vmatpush1.msra.mxu0 0.0
    %116 = vmatprep.subr.mxu0 0.0
    %117 = vmatpush1.msra.mxu0 0.0
    %118 = vmatprep.subr.mxu0 0.0
    %119 = vmatpush1.msra.mxu0 0.0
    %120 = vmatprep.subr.mxu0 0.0
    %121 = vmatpush1.msra.mxu0 0.0
    %122 = vmatprep.subr.mxu0 0.0
    %123 = vmatpush1.msra.mxu0 0.0
    %124 = vmatprep.subr.mxu0 0.0
    %125 = vmatpush1.msra.mxu0 0.0
    %126 = vmatprep.subr.mxu0 0.0
    %127 = vmatpush1.msra.mxu0 0.0
    %128 = vmatprep.subr.mxu0 0.0
    %129 = vmatpush1.msra.mxu0 0.0
    %130 = vmatprep.mubr.f32.mxu0 0.0
    %v131 = vand.u32 %v62, 4294901760
    %v132 = vsub.f32 %v62, %v131
    %v133 = vand.u32 %v132, 4294901760
    %v134 = vsub.f32 %v132, %v133
    %v135 = vand.u32 %v134, 4294901760
    %136 = vmatmul.mubr.f32.gmra.mrb[0].mxu0 %v135
    %v137 = vpop.f32.mrb[0].mxu0
    %v138 = vadd.f32 %v58, %v137
    %v139 = vpop.f32.mrb[0].mxu0
    %140 = vdwg.mxu0
    %141 = vmatprep.subr.mxu0 0.0
    %v142 = vand.u32 %v51, 4294901760
    %v143 = vsub.f32 %v51, %v142
    %v144 = vand.u32 %v143, 4294901760
    %v145 = vsub.f32 %v143, %v144
    %v146 = vand.u32 %v145, 4294901760
    %147 = vmatpush1.msra.mxu0 %v146
    %148 = vmatprep.subr.mxu0 0.0
    %v149 = vand.u32 %v52, 4294901760
    %v150 = vsub.f32 %v52, %v149
    %v151 = vand.u32 %v150, 4294901760
    %v152 = vsub.f32 %v150, %v151
    %v153 = vand.u32 %v152, 4294901760
    %154 = vmatpush1.msra.mxu0 %v153
    %155 = vmatprep.subr.mxu0 0.0
    %156 = vmatpush1.msra.mxu0 0.0
    %157 = vmatprep.subr.mxu0 0.0
    %158 = vmatpush1.msra.mxu0 0.0
    %159 = vmatprep.subr.mxu0 0.0
    %160 = vmatpush1.msra.mxu0 0.0
    %161 = vmatprep.subr.mxu0 0.0
    %162 = vmatpush1.msra.mxu0 0.0
    %163 = vmatprep.subr.mxu0 0.0
    %164 = vmatpush1.msra.mxu0 0.0
    %165 = vmatprep.subr.mxu0 0.0
    %166 = vmatpush1.msra.mxu0 0.0
    %167 = vmatprep.subr.mxu0 0.0
    %168 = vmatpush1.msra.mxu0 0.0
    %169 = vmatprep.subr.mxu0 0.0
    %170 = vmatpush1.msra.mxu0 0.0
    %171 = vmatprep.subr.mxu0 0.0
    %172 = vmatpush1.msra.mxu0 0.0
    %173 = vmatprep.subr.mxu0 0.0
    %174 = vmatpush1.msra.mxu0 0.0
    %175 = vmatprep.subr.mxu0 0.0
    %176 = vmatpush1.msra.mxu0 0.0
    %177 = vmatprep.subr.mxu0 0.0
    %178 = vmatpush1.msra.mxu0 0.0
    %179 = vmatprep.subr.mxu0 0.0
    %180 = vmatpush1.msra.mxu0 0.0
    %181 = vmatprep.subr.mxu0 0.0
    %182 = vmatpush1.msra.mxu0 0.0
    %183 = vmatprep.subr.mxu0 0.0
    %184 = vmatpush1.msra.mxu0 0.0
    %185 = vmatprep.subr.mxu0 0.0
    %186 = vmatpush1.msra.mxu0 0.0
    %187 = vmatprep.subr.mxu0 0.0
    %188 = vmatpush1.msra.mxu0 0.0
    %189 = vmatprep.subr.mxu0 0.0
    %190 = vmatpush1.msra.mxu0 0.0
    %191 = vmatprep.subr.mxu0 0.0
    %192 = vmatpush1.msra.mxu0 0.0
    %193 = vmatprep.subr.mxu0 0.0
    %194 = vmatpush1.msra.mxu0 0.0
    %195 = vmatprep.subr.mxu0 0.0
    %196 = vmatpush1.msra.mxu0 0.0
    %197 = vmatprep.subr.mxu0 0.0
    %198 = vmatpush1.msra.mxu0 0.0
    %199 = vmatprep.subr.mxu0 0.0
    %200 = vmatpush1.msra.mxu0 0.0
    %201 = vmatprep.subr.mxu0 0.0
    %202 = vmatpush1.msra.mxu0 0.0
    %203 = vmatprep.subr.mxu0 0.0
    %204 = vmatpush1.msra.mxu0 0.0
    %205 = vmatprep.subr.mxu0 0.0
    %206 = vmatpush1.msra.mxu0 0.0
    %207 = vmatprep.subr.mxu0 0.0
    %208 = vmatpush1.msra.mxu0 0.0
    %209 = vmatprep.subr.mxu0 0.0
    %210 = vmatpush1.msra.mxu0 0.0
    %211 = vmatprep.subr.mxu0 0.0
    %212 = vmatpush1.msra.mxu0 0.0
    %213 = vmatprep.subr.mxu0 0.0
    %214 = vmatpush1.msra.mxu0 0.0
    %215 = vmatprep.mubr.f32.mxu0 0.0
    %v216 = vand.u32 %v62, 4294901760
    %217 = vmatmul.mubr.f32.gmra.mrb[0].mxu0 %v216
    %v218 = vpop.f32.mrb[0].mxu0
    %v219 = vadd.f32 %v138, %v218
    %v220 = vpop.f32.mrb[0].mxu0
    %221 = vdwg.mxu0
    %222 = vmatprep.subr.mxu0 0.0
    %v223 = vand.u32 %v51, 4294901760
    %v224 = vsub.f32 %v51, %v223
    %225 = vmatpush1.msra.mxu0 %v224
    %226 = vmatprep.subr.mxu0 0.0
    %v227 = vand.u32 %v52, 4294901760
    %v228 = vsub.f32 %v52, %v227
    %229 = vmatpush1.msra.mxu0 %v228
    %230 = vmatprep.subr.mxu0 0.0
    %231 = vmatpush1.msra.mxu0 0.0
    %232 = vmatprep.subr.mxu0 0.0
    %233 = vmatpush1.msra.mxu0 0.0
    %234 = vmatprep.subr.mxu0 0.0
    %235 = vmatpush1.msra.mxu0 0.0
    %236 = vmatprep.subr.mxu0 0.0
    %237 = vmatpush1.msra.mxu0 0.0
    %238 = vmatprep.subr.mxu0 0.0
    %239 = vmatpush1.msra.mxu0 0.0
    %240 = vmatprep.subr.mxu0 0.0
    %241 = vmatpush1.msra.mxu0 0.0
    %242 = vmatprep.subr.mxu0 0.0
    %243 = vmatpush1.msra.mxu0 0.0
    %244 = vmatprep.subr.mxu0 0.0
    %245 = vmatpush1.msra.mxu0 0.0
    %246 = vmatprep.subr.mxu0 0.0
    %247 = vmatpush1.msra.mxu0 0.0
    %248 = vmatprep.subr.mxu0 0.0
    %249 = vmatpush1.msra.mxu0 0.0
    %250 = vmatprep.subr.mxu0 0.0
    %251 = vmatpush1.msra.mxu0 0.0
    %252 = vmatprep.subr.mxu0 0.0
    %253 = vmatpush1.msra.mxu0 0.0
    %254 = vmatprep.subr.mxu0 0.0
    %255 = vmatpush1.msra.mxu0 0.0
    %256 = vmatprep.subr.mxu0 0.0
    %257 = vmatpush1.msra.mxu0 0.0
    %258 = vmatprep.subr.mxu0 0.0
    %259 = vmatpush1.msra.mxu0 0.0
    %260 = vmatprep.subr.mxu0 0.0
    %261 = vmatpush1.msra.mxu0 0.0
    %262 = vmatprep.subr.mxu0 0.0
    %263 = vmatpush1.msra.mxu0 0.0
    %264 = vmatprep.subr.mxu0 0.0
    %265 = vmatpush1.msra.mxu0 0.0
    %266 = vmatprep.subr.mxu0 0.0
    %267 = vmatpush1.msra.mxu0 0.0
    %268 = vmatprep.subr.mxu0 0.0
    %269 = vmatpush1.msra.mxu0 0.0
    %270 = vmatprep.subr.mxu0 0.0
    %271 = vmatpush1.msra.mxu0 0.0
    %272 = vmatprep.subr.mxu0 0.0
    %273 = vmatpush1.msra.mxu0 0.0
    %274 = vmatprep.subr.mxu0 0.0
    %275 = vmatpush1.msra.mxu0 0.0
    %276 = vmatprep.subr.mxu0 0.0
    %277 = vmatpush1.msra.mxu0 0.0
    %278 = vmatprep.subr.mxu0 0.0
    %279 = vmatpush1.msra.mxu0 0.0
    %280 = vmatprep.subr.mxu0 0.0
    %281 = vmatpush1.msra.mxu0 0.0
    %282 = vmatprep.subr.mxu0 0.0
    %283 = vmatpush1.msra.mxu0 0.0
    %284 = vmatprep.subr.mxu0 0.0
    %285 = vmatpush1.msra.mxu0 0.0
    %286 = vmatprep.subr.mxu0 0.0
    %287 = vmatpush1.msra.mxu0 0.0
    %288 = vmatprep.subr.mxu0 0.0
    %289 = vmatpush1.msra.mxu0 0.0
    %290 = vmatprep.mubr.f32.mxu0 0.0
    %v291 = vand.u32 %v62, 4294901760
    %v292 = vsub.f32 %v62, %v291
    %293 = vmatmul.mubr.f32.gmra.mrb[0].mxu0 %v292
    %v294 = vpop.f32.mrb[0].mxu0
    %v295 = vadd.f32 %v219, %v294
    %v296 = vpop.f32.mrb[0].mxu0
    %297 = vdwg.mxu0
    %298 = vmatprep.subr.mxu0 0.0
    %v299 = vand.u32 %v51, 4294901760
    %300 = vmatpush1.msra.mxu0 %v299
    %301 = vmatprep.subr.mxu0 0.0
    %v302 = vand.u32 %v52, 4294901760
    %303 = vmatpush1.msra.mxu0 %v302
    %304 = vmatprep.subr.mxu0 0.0
    %305 = vmatpush1.msra.mxu0 0.0
    %306 = vmatprep.subr.mxu0 0.0
    %307 = vmatpush1.msra.mxu0 0.0
    %308 = vmatprep.subr.mxu0 0.0
    %309 = vmatpush1.msra.mxu0 0.0
    %310 = vmatprep.subr.mxu0 0.0
    %311 = vmatpush1.msra.mxu0 0.0
    %312 = vmatprep.subr.mxu0 0.0
    %313 = vmatpush1.msra.mxu0 0.0
    %314 = vmatprep.subr.mxu0 0.0
    %315 = vmatpush1.msra.mxu0 0.0
    %316 = vmatprep.subr.mxu0 0.0
    %317 = vmatpush1.msra.mxu0 0.0
    %318 = vmatprep.subr.mxu0 0.0
    %319 = vmatpush1.msra.mxu0 0.0
    %320 = vmatprep.subr.mxu0 0.0
    %321 = vmatpush1.msra.mxu0 0.0
    %322 = vmatprep.subr.mxu0 0.0
    %323 = vmatpush1.msra.mxu0 0.0
    %324 = vmatprep.subr.mxu0 0.0
    %325 = vmatpush1.msra.mxu0 0.0
    %326 = vmatprep.subr.mxu0 0.0
    %327 = vmatpush1.msra.mxu0 0.0
    %328 = vmatprep.subr.mxu0 0.0
    %329 = vmatpush1.msra.mxu0 0.0
    %330 = vmatprep.subr.mxu0 0.0
    %331 = vmatpush1.msra.mxu0 0.0
    %332 = vmatprep.subr.mxu0 0.0
    %333 = vmatpush1.msra.mxu0 0.0
    %334 = vmatprep.subr.mxu0 0.0
    %335 = vmatpush1.msra.mxu0 0.0
    %336 = vmatprep.subr.mxu0 0.0
    %337 = vmatpush1.msra.mxu0 0.0
    %338 = vmatprep.subr.mxu0 0.0
    %339 = vmatpush1.msra.mxu0 0.0
    %340 = vmatprep.subr.mxu0 0.0
    %341 = vmatpush1.msra.mxu0 0.0
    %342 = vmatprep.subr.mxu0 0.0
    %343 = vmatpush1.msra.mxu0 0.0
    %344 = vmatprep.subr.mxu0 0.0
    %345 = vmatpush1.msra.mxu0 0.0
    %346 = vmatprep.subr.mxu0 0.0
    %347 = vmatpush1.msra.mxu0 0.0
    %348 = vmatprep.subr.mxu0 0.0
    %349 = vmatpush1.msra.mxu0 0.0
    %350 = vmatprep.subr.mxu0 0.0
    %351 = vmatpush1.msra.mxu0 0.0
    %352 = vmatprep.subr.mxu0 0.0
    %353 = vmatpush1.msra.mxu0 0.0
    %354 = vmatprep.subr.mxu0 0.0
    %355 = vmatpush1.msra.mxu0 0.0
    %356 = vmatprep.subr.mxu0 0.0
    %357 = vmatpush1.msra.mxu0 0.0
    %358 = vmatprep.subr.mxu0 0.0
    %359 = vmatpush1.msra.mxu0 0.0
    %360 = vmatprep.subr.mxu0 0.0
    %361 = vmatpush1.msra.mxu0 0.0
    %362 = vmatprep.subr.mxu0 0.0
    %363 = vmatpush1.msra.mxu0 0.0
    %364 = vmatprep.mubr.f32.mxu0 0.0
    %v365 = vand.u32 %v62, 4294901760
    %v366 = vsub.f32 %v62, %v365
    %v367 = vand.u32 %v366, 4294901760
    %368 = vmatmul.mubr.f32.gmra.mrb[0].mxu0 %v367
    %v369 = vpop.f32.mrb[0].mxu0
    %v370 = vadd.f32 %v295, %v369
    %v371 = vpop.f32.mrb[0].mxu0
    %372 = vdwg.mxu0
    %373 = vmatprep.subr.mxu0 0.0
    %v374 = vand.u32 %v51, 4294901760
    %v375 = vsub.f32 %v51, %v374
    %v376 = vand.u32 %v375, 4294901760
    %377 = vmatpush1.msra.mxu0 %v376
    %378 = vmatprep.subr.mxu0 0.0
    %v379 = vand.u32 %v52, 4294901760
    %v380 = vsub.f32 %v52, %v379
    %v381 = vand.u32 %v380, 4294901760
    %382 = vmatpush1.msra.mxu0 %v381
    %383 = vmatprep.subr.mxu0 0.0
    %384 = vmatpush1.msra.mxu0 0.0
    %385 = vmatprep.subr.mxu0 0.0
    %386 = vmatpush1.msra.mxu0 0.0
    %387 = vmatprep.subr.mxu0 0.0
    %388 = vmatpush1.msra.mxu0 0.0
    %389 = vmatprep.subr.mxu0 0.0
    %390 = vmatpush1.msra.mxu0 0.0
    %391 = vmatprep.subr.mxu0 0.0
    %392 = vmatpush1.msra.mxu0 0.0
    %393 = vmatprep.subr.mxu0 0.0
    %394 = vmatpush1.msra.mxu0 0.0
    %395 = vmatprep.subr.mxu0 0.0
    %396 = vmatpush1.msra.mxu0 0.0
    %397 = vmatprep.subr.mxu0 0.0
    %398 = vmatpush1.msra.mxu0 0.0
    %399 = vmatprep.subr.mxu0 0.0
    %400 = vmatpush1.msra.mxu0 0.0
    %401 = vmatprep.subr.mxu0 0.0
    %402 = vmatpush1.msra.mxu0 0.0
    %403 = vmatprep.subr.mxu0 0.0
    %404 = vmatpush1.msra.mxu0 0.0
    %405 = vmatprep.subr.mxu0 0.0
    %406 = vmatpush1.msra.mxu0 0.0
    %407 = vmatprep.subr.mxu0 0.0
    %408 = vmatpush1.msra.mxu0 0.0
    %409 = vmatprep.subr.mxu0 0.0
    %410 = vmatpush1.msra.mxu0 0.0
    %411 = vmatprep.subr.mxu0 0.0
    %412 = vmatpush1.msra.mxu0 0.0
    %413 = vmatprep.subr.mxu0 0.0
    %414 = vmatpush1.msra.mxu0 0.0
    %415 = vmatprep.subr.mxu0 0.0
    %416 = vmatpush1.msra.mxu0 0.0
    %417 = vmatprep.subr.mxu0 0.0
    %418 = vmatpush1.msra.mxu0 0.0
    %419 = vmatprep.subr.mxu0 0.0
    %420 = vmatpush1.msra.mxu0 0.0
    %421 = vmatprep.subr.mxu0 0.0
    %422 = vmatpush1.msra.mxu0 0.0
    %423 = vmatprep.subr.mxu0 0.0
    %424 = vmatpush1.msra.mxu0 0.0
    %425 = vmatprep.subr.mxu0 0.0
    %426 = vmatpush1.msra.mxu0 0.0
    %427 = vmatprep.subr.mxu0 0.0
    %428 = vmatpush1.msra.mxu0 0.0
    %429 = vmatprep.subr.mxu0 0.0
    %430 = vmatpush1.msra.mxu0 0.0
    %431 = vmatprep.subr.mxu0 0.0
    %432 = vmatpush1.msra.mxu0 0.0
    %433 = vmatprep.subr.mxu0 0.0
    %434 = vmatpush1.msra.mxu0 0.0
    %435 = vmatprep.subr.mxu0 0.0
    %436 = vmatpush1.msra.mxu0 0.0
    %437 = vmatprep.subr.mxu0 0.0
    %438 = vmatpush1.msra.mxu0 0.0
    %439 = vmatprep.subr.mxu0 0.0
    %440 = vmatpush1.msra.mxu0 0.0
    %441 = vmatprep.subr.mxu0 0.0
    %442 = vmatpush1.msra.mxu0 0.0
    %443 = vmatprep.mubr.f32.mxu0 0.0
    %v444 = vand.u32 %v62, 4294901760
    %445 = vmatmul.mubr.f32.gmra.mrb[0].mxu0 %v444
    %v446 = vpop.f32.mrb[0].mxu0
    %v447 = vadd.f32 %v370, %v446
    %v448 = vpop.f32.mrb[0].mxu0
    %449 = vdwg.mxu0
    %450 = vmatprep.subr.mxu0 0.0
    %v451 = vand.u32 %v51, 4294901760
    %452 = vmatpush1.msra.mxu0 %v451
    %453 = vmatprep.subr.mxu0 0.0
    %v454 = vand.u32 %v52, 4294901760
    %455 = vmatpush1.msra.mxu0 %v454
    %456 = vmatprep.subr.mxu0 0.0
    %457 = vmatpush1.msra.mxu0 0.0
    %458 = vmatprep.subr.mxu0 0.0
    %459 = vmatpush1.msra.mxu0 0.0
    %460 = vmatprep.subr.mxu0 0.0
    %461 = vmatpush1.msra.mxu0 0.0
    %462 = vmatprep.subr.mxu0 0.0
    %463 = vmatpush1.msra.mxu0 0.0
    %464 = vmatprep.subr.mxu0 0.0
    %465 = vmatpush1.msra.mxu0 0.0
    %466 = vmatprep.subr.mxu0 0.0
    %467 = vmatpush1.msra.mxu0 0.0
    %468 = vmatprep.subr.mxu0 0.0
    %469 = vmatpush1.msra.mxu0 0.0
    %470 = vmatprep.subr.mxu0 0.0
    %471 = vmatpush1.msra.mxu0 0.0
    %472 = vmatprep.subr.mxu0 0.0
    %473 = vmatpush1.msra.mxu0 0.0
    %474 = vmatprep.subr.mxu0 0.0
    %475 = vmatpush1.msra.mxu0 0.0
    %476 = vmatprep.subr.mxu0 0.0
    %477 = vmatpush1.msra.mxu0 0.0
    %478 = vmatprep.subr.mxu0 0.0
    %479 = vmatpush1.msra.mxu0 0.0
    %480 = vmatprep.subr.mxu0 0.0
    %481 = vmatpush1.msra.mxu0 0.0
    %482 = vmatprep.subr.mxu0 0.0
    %483 = vmatpush1.msra.mxu0 0.0
    %484 = vmatprep.subr.mxu0 0.0
    %485 = vmatpush1.msra.mxu0 0.0
    %486 = vmatprep.subr.mxu0 0.0
    %487 = vmatpush1.msra.mxu0 0.0
    %488 = vmatprep.subr.mxu0 0.0
    %489 = vmatpush1.msra.mxu0 0.0
    %490 = vmatprep.subr.mxu0 0.0
    %491 = vmatpush1.msra.mxu0 0.0
    %492 = vmatprep.subr.mxu0 0.0
    %493 = vmatpush1.msra.mxu0 0.0
    %494 = vmatprep.subr.mxu0 0.0
    %495 = vmatpush1.msra.mxu0 0.0
    %496 = vmatprep.subr.mxu0 0.0
    %497 = vmatpush1.msra.mxu0 0.0
    %498 = vmatprep.subr.mxu0 0.0
    %499 = vmatpush1.msra.mxu0 0.0
    %500 = vmatprep.subr.mxu0 0.0
    %501 = vmatpush1.msra.mxu0 0.0
    %502 = vmatprep.subr.mxu0 0.0
    %503 = vmatpush1.msra.mxu0 0.0
    %504 = vmatprep.subr.mxu0 0.0
    %505 = vmatpush1.msra.mxu0 0.0
    %506 = vmatprep.subr.mxu0 0.0
    %507 = vmatpush1.msra.mxu0 0.0
    %508 = vmatprep.subr.mxu0 0.0
    %509 = vmatpush1.msra.mxu0 0.0
    %510 = vmatprep.subr.mxu0 0.0
    %511 = vmatpush1.msra.mxu0 0.0
    %512 = vmatprep.subr.mxu0 0.0
    %513 = vmatpush1.msra.mxu0 0.0
    %514 = vmatprep.subr.mxu0 0.0
    %515 = vmatpush1.msra.mxu0 0.0
    %516 = vmatprep.mubr.f32.mxu0 0.0
    %v517 = vand.u32 %v62, 4294901760
    %518 = vmatmul.mubr.f32.gmra.mrb[0].mxu0 %v517
    %v519 = vpop.f32.mrb[0].mxu0
    %v520 = vadd.f32 %v447, %v519
    %v521 = vpop.f32.mrb[0].mxu0
    %522 = vdwg.mxu0
    %v523 = vtanh.pop %v520
    %v524 = vld [vmem:[%s3] sm:$0xff]
    %v525 = vld [vmem:[%s3 + $0x8] sm:$0xff]
    %v526 = vld [vmem:[%s3 + $0x10] sm:$0xff]
    %v527 = vld [vmem:[%s3 + $0x18] sm:$0xff]
    %v528 = vld [vmem:[%s4] sm:$0x1]
    %v530 = vlaneseq
    %v531 = vshrl.u32 %v530, 7
    %v532 = vsub.s32 0, %v531
    %v533 = vrot.slane %v528, %v532
    %vm535 = vcmask 261120
    %v537 = vsel %vm535, %v523, 0
    %539 = vmatprep.subr.mxu0 0.0
    %v540 = vand.u32 %v524, 4294901760
    %541 = vmatpush1.msra.mxu0 %v540
    %542 = vmatprep.subr.mxu0 0.0
    %v543 = vand.u32 %v525, 4294901760
    %544 = vmatpush1.msra.mxu0 %v543
    %545 = vmatprep.subr.mxu0 0.0
    %v546 = vand.u32 %v526, 4294901760
    %547 = vmatpush1.msra.mxu0 %v546
    %548 = vmatprep.subr.mxu0 0.0
    %v549 = vand.u32 %v527, 4294901760
    %550 = vmatpush1.msra.mxu0 %v549
    %551 = vmatprep.subr.mxu0 0.0
    %552 = vmatpush1.msra.mxu0 0.0
    %553 = vmatprep.subr.mxu0 0.0
    %554 = vmatpush1.msra.mxu0 0.0
    %555 = vmatprep.subr.mxu0 0.0
    %556 = vmatpush1.msra.mxu0 0.0
    %557 = vmatprep.subr.mxu0 0.0
    %558 = vmatpush1.msra.mxu0 0.0
    %559 = vmatprep.subr.mxu0 0.0
    %560 = vmatpush1.msra.mxu0 0.0
    %561 = vmatprep.subr.mxu0 0.0
    %562 = vmatpush1.msra.mxu0 0.0
    %563 = vmatprep.subr.mxu0 0.0
    %564 = vmatpush1.msra.mxu0 0.0
    %565 = vmatprep.subr.mxu0 0.0
    %566 = vmatpush1.msra.mxu0 0.0
    %567 = vmatprep.subr.mxu0 0.0
    %568 = vmatpush1.msra.mxu0 0.0
    %569 = vmatprep.subr.mxu0 0.0
    %570 = vmatpush1.msra.mxu0 0.0
    %571 = vmatprep.subr.mxu0 0.0
    %572 = vmatpush1.msra.mxu0 0.0
    %573 = vmatprep.subr.mxu0 0.0
    %574 = vmatpush1.msra.mxu0 0.0
    %575 = vmatprep.subr.mxu0 0.0
    %576 = vmatpush1.msra.mxu0 0.0
    %577 = vmatprep.subr.mxu0 0.0
    %578 = vmatpush1.msra.mxu0 0.0
    %579 = vmatprep.subr.mxu0 0.0
    %580 = vmatpush1.msra.mxu0 0.0
    %581 = vmatprep.subr.mxu0 0.0
    %582 = vmatpush1.msra.mxu0 0.0
    %583 = vmatprep.subr.mxu0 0.0
    %584 = vmatpush1.msra.mxu0 0.0
    %585 = vmatprep.subr.mxu0 0.0
    %586 = vmatpush1.msra.mxu0 0.0
    %587 = vmatprep.subr.mxu0 0.0
    %588 = vmatpush1.msra.mxu0 0.0
    %589 = vmatprep.subr.mxu0 0.0
    %590 = vmatpush1.msra.mxu0 0.0
    %591 = vmatprep.subr.mxu0 0.0
    %592 = vmatpush1.msra.mxu0 0.0
    %593 = vmatprep.subr.mxu0 0.0
    %594 = vmatpush1.msra.mxu0 0.0
    %595 = vmatprep.subr.mxu0 0.0
    %596 = vmatpush1.msra.mxu0 0.0
    %597 = vmatprep.subr.mxu0 0.0
    %598 = vmatpush1.msra.mxu0 0.0
    %599 = vmatprep.subr.mxu0 0.0
    %600 = vmatpush1.msra.mxu0 0.0
    %601 = vmatprep.subr.mxu0 0.0
    %602 = vmatpush1.msra.mxu0 0.0
    %603 = vmatprep.subr.mxu0 0.0
    %604 = vmatpush1.msra.mxu0 0.0
    %605 = vmatprep.subr.mxu0 0.0
    %606 = vmatpush1.msra.mxu0 0.0
    %607 = vmatprep.mubr.f32.mxu0 0.0
    %v608 = vand.u32 %v537, 4294901760
    %v609 = vsub.f32 %v537, %v608
    %v610 = vand.u32 %v609, 4294901760
    %v611 = vsub.f32 %v609, %v610
    %v612 = vand.u32 %v611, 4294901760
    %613 = vmatmul.mubr.f32.gmra.mrb[0].mxu0 %v612
    %v614 = vpop.f32.mrb[0].mxu0
    %v615 = vadd.f32 %v533, %v614
    %v616 = vpop.f32.mrb[0].mxu0
    %617 = vdwg.mxu0
    %618 = vmatprep.subr.mxu0 0.0
    %v619 = vand.u32 %v524, 4294901760
    %v620 = vsub.f32 %v524, %v619
    %v621 = vand.u32 %v620, 4294901760
    %v622 = vsub.f32 %v620, %v621
    %v623 = vand.u32 %v622, 4294901760
    %624 = vmatpush1.msra.mxu0 %v623
    %625 = vmatprep.subr.mxu0 0.0
    %v626 = vand.u32 %v525, 4294901760
    %v627 = vsub.f32 %v525, %v626
    %v628 = vand.u32 %v627, 4294901760
    %v629 = vsub.f32 %v627, %v628
    %v630 = vand.u32 %v629, 4294901760
    %631 = vmatpush1.msra.mxu0 %v630
    %632 = vmatprep.subr.mxu0 0.0
    %v633 = vand.u32 %v526, 4294901760
    %v634 = vsub.f32 %v526, %v633
    %v635 = vand.u32 %v634, 4294901760
    %v636 = vsub.f32 %v634, %v635
    %v637 = vand.u32 %v636, 4294901760
    %638 = vmatpush1.msra.mxu0 %v637
    %639 = vmatprep.subr.mxu0 0.0
    %v640 = vand.u32 %v527, 4294901760
    %v641 = vsub.f32 %v527, %v640
    %v642 = vand.u32 %v641, 4294901760
    %v643 = vsub.f32 %v641, %v642
    %v644 = vand.u32 %v643, 4294901760
    %645 = vmatpush1.msra.mxu0 %v644
    %646 = vmatprep.subr.mxu0 0.0
    %647 = vmatpush1.msra.mxu0 0.0
    %648 = vmatprep.subr.mxu0 0.0
    %649 = vmatpush1.msra.mxu0 0.0
    %650 = vmatprep.subr.mxu0 0.0
    %651 = vmatpush1.msra.mxu0 0.0
    %652 = vmatprep.subr.mxu0 0.0
    %653 = vmatpush1.msra.mxu0 0.0
    %654 = vmatprep.subr.mxu0 0.0
    %655 = vmatpush1.msra.mxu0 0.0
    %656 = vmatprep.subr.mxu0 0.0
    %657 = vmatpush1.msra.mxu0 0.0
    %658 = vmatprep.subr.mxu0 0.0
    %659 = vmatpush1.msra.mxu0 0.0
    %660 = vmatprep.subr.mxu0 0.0
    %661 = vmatpush1.msra.mxu0 0.0
    %662 = vmatprep.subr.mxu0 0.0
    %663 = vmatpush1.msra.mxu0 0.0
    %664 = vmatprep.subr.mxu0 0.0
    %665 = vmatpush1.msra.mxu0 0.0
    %666 = vmatprep.subr.mxu0 0.0
    %667 = vmatpush1.msra.mxu0 0.0
    %668 = vmatprep.subr.mxu0 0.0
    %669 = vmatpush1.msra.mxu0 0.0
    %670 = vmatprep.subr.mxu0 0.0
    %671 = vmatpush1.msra.mxu0 0.0
    %672 = vmatprep.subr.mxu0 0.0
    %673 = vmatpush1.msra.mxu0 0.0
    %674 = vmatprep.subr.mxu0 0.0
    %675 = vmatpush1.msra.mxu0 0.0
    %676 = vmatprep.subr.mxu0 0.0
    %677 = vmatpush1.msra.mxu0 0.0
    %678 = vmatprep.subr.mxu0 0.0
    %679 = vmatpush1.msra.mxu0 0.0
    %680 = vmatprep.subr.mxu0 0.0
    %681 = vmatpush1.msra.mxu0 0.0
    %682 = vmatprep.subr.mxu0 0.0
    %683 = vmatpush1.msra.mxu0 0.0
    %684 = vmatprep.subr.mxu0 0.0
    %685 = vmatpush1.msra.mxu0 0.0
    %686 = vmatprep.subr.mxu0 0.0
    %687 = vmatpush1.msra.mxu0 0.0
    %688 = vmatprep.subr.mxu0 0.0
    %689 = vmatpush1.msra.mxu0 0.0
    %690 = vmatprep.subr.mxu0 0.0
    %691 = vmatpush1.msra.mxu0 0.0
    %692 = vmatprep.subr.mxu0 0.0
    %693 = vmatpush1.msra.mxu0 0.0
    %694 = vmatprep.subr.mxu0 0.0
    %695 = vmatpush1.msra.mxu0 0.0
    %696 = vmatprep.subr.mxu0 0.0
    %697 = vmatpush1.msra.mxu0 0.0
    %698 = vmatprep.subr.mxu0 0.0
    %699 = vmatpush1.msra.mxu0 0.0
    %700 = vmatprep.subr.mxu0 0.0
    %701 = vmatpush1.msra.mxu0 0.0
    %702 = vmatprep.mubr.f32.mxu0 0.0
    %v703 = vand.u32 %v537, 4294901760
    %704 = vmatmul.mubr.f32.gmra.mrb[0].mxu0 %v703
    %v705 = vpop.f32.mrb[0].mxu0
    %v706 = vadd.f32 %v615, %v705
    %v707 = vpop.f32.mrb[0].mxu0
    %708 = vdwg.mxu0
    %709 = vmatprep.subr.mxu0 0.0
    %v710 = vand.u32 %v524, 4294901760
    %v711 = vsub.f32 %v524, %v710
    %712 = vmatpush1.msra.mxu0 %v711
    %713 = vmatprep.subr.mxu0 0.0
    %v714 = vand.u32 %v525, 4294901760
    %v715 = vsub.f32 %v525, %v714
    %716 = vmatpush1.msra.mxu0 %v715
    %717 = vmatprep.subr.mxu0 0.0
    %v718 = vand.u32 %v526, 4294901760
    %v719 = vsub.f32 %v526, %v718
    %720 = vmatpush1.msra.mxu0 %v719
    %721 = vmatprep.subr.mxu0 0.0
    %v722 = vand.u32 %v527, 4294901760
    %v723 = vsub.f32 %v527, %v722
    %724 = vmatpush1.msra.mxu0 %v723
    %725 = vmatprep.subr.mxu0 0.0
    %726 = vmatpush1.msra.mxu0 0.0
    %727 = vmatprep.subr.mxu0 0.0
    %728 = vmatpush1.msra.mxu0 0.0
    %729 = vmatprep.subr.mxu0 0.0
    %730 = vmatpush1.msra.mxu0 0.0
    %731 = vmatprep.subr.mxu0 0.0
    %732 = vmatpush1.msra.mxu0 0.0
    %733 = vmatprep.subr.mxu0 0.0
    %734 = vmatpush1.msra.mxu0 0.0
    %735 = vmatprep.subr.mxu0 0.0
    %736 = vmatpush1.msra.mxu0 0.0
    %737 = vmatprep.subr.mxu0 0.0
    %738 = vmatpush1.msra.mxu0 0.0
    %739 = vmatprep.subr.mxu0 0.0
    %740 = vmatpush1.msra.mxu0 0.0
    %741 = vmatprep.subr.mxu0 0.0
    %742 = vmatpush1.msra.mxu0 0.0
    %743 = vmatprep.subr.mxu0 0.0
    %744 = vmatpush1.msra.mxu0 0.0
    %745 = vmatprep.subr.mxu0 0.0
    %746 = vmatpush1.msra.mxu0 0.0
    %747 = vmatprep.subr.mxu0 0.0
    %748 = vmatpush1.msra.mxu0 0.0
    %749 = vmatprep.subr.mxu0 0.0
    %750 = vmatpush1.msra.mxu0 0.0
    %751 = vmatprep.subr.mxu0 0.0
    %752 = vmatpush1.msra.mxu0 0.0
    %753 = vmatprep.subr.mxu0 0.0
    %754 = vmatpush1.msra.mxu0 0.0
    %755 = vmatprep.subr.mxu0 0.0
    %756 = vmatpush1.msra.mxu0 0.0
    %757 = vmatprep.subr.mxu0 0.0
    %758 = vmatpush1.msra.mxu0 0.0
    %759 = vmatprep.subr.mxu0 0.0
    %760 = vmatpush1.msra.mxu0 0.0
    %761 = vmatprep.subr.mxu0 0.0
    %762 = vmatpush1.msra.mxu0 0.0
    %763 = vmatprep.subr.mxu0 0.0
    %764 = vmatpush1.msra.mxu0 0.0
    %765 = vmatprep.subr.mxu0 0.0
    %766 = vmatpush1.msra.mxu0 0.0
    %767 = vmatprep.subr.mxu0 0.0
    %768 = vmatpush1.msra.mxu0 0.0
    %769 = vmatprep.subr.mxu0 0.0
    %770 = vmatpush1.msra.mxu0 0.0
    %771 = vmatprep.subr.mxu0 0.0
    %772 = vmatpush1.msra.mxu0 0.0
    %773 = vmatprep.subr.mxu0 0.0
    %774 = vmatpush1.msra.mxu0 0.0
    %775 = vmatprep.subr.mxu0 0.0
    %776 = vmatpush1.msra.mxu0 0.0
    %777 = vmatprep.subr.mxu0 0.0
    %778 = vmatpush1.msra.mxu0 0.0
    %779 = vmatprep.subr.mxu0 0.0
    %780 = vmatpush1.msra.mxu0 0.0
    %781 = vmatprep.mubr.f32.mxu0 0.0
    %v782 = vand.u32 %v537, 4294901760
    %v783 = vsub.f32 %v537, %v782
    %784 = vmatmul.mubr.f32.gmra.mrb[0].mxu0 %v783
    %v785 = vpop.f32.mrb[0].mxu0
    %v786 = vadd.f32 %v706, %v785
    %v787 = vpop.f32.mrb[0].mxu0
    %788 = vdwg.mxu0
    %789 = vmatprep.subr.mxu0 0.0
    %v790 = vand.u32 %v524, 4294901760
    %791 = vmatpush1.msra.mxu0 %v790
    %792 = vmatprep.subr.mxu0 0.0
    %v793 = vand.u32 %v525, 4294901760
    %794 = vmatpush1.msra.mxu0 %v793
    %795 = vmatprep.subr.mxu0 0.0
    %v796 = vand.u32 %v526, 4294901760
    %797 = vmatpush1.msra.mxu0 %v796
    %798 = vmatprep.subr.mxu0 0.0
    %v799 = vand.u32 %v527, 4294901760
    %800 = vmatpush1.msra.mxu0 %v799
    %801 = vmatprep.subr.mxu0 0.0
    %802 = vmatpush1.msra.mxu0 0.0
    %803 = vmatprep.subr.mxu0 0.0
    %804 = vmatpush1.msra.mxu0 0.0
    %805 = vmatprep.subr.mxu0 0.0
    %806 = vmatpush1.msra.mxu0 0.0
    %807 = vmatprep.subr.mxu0 0.0
    %808 = vmatpush1.msra.mxu0 0.0
    %809 = vmatprep.subr.mxu0 0.0
    %810 = vmatpush1.msra.mxu0 0.0
    %811 = vmatprep.subr.mxu0 0.0
    %812 = vmatpush1.msra.mxu0 0.0
    %813 = vmatprep.subr.mxu0 0.0
    %814 = vmatpush1.msra.mxu0 0.0
    %815 = vmatprep.subr.mxu0 0.0
    %816 = vmatpush1.msra.mxu0 0.0
    %817 = vmatprep.subr.mxu0 0.0
    %818 = vmatpush1.msra.mxu0 0.0
    %819 = vmatprep.subr.mxu0 0.0
    %820 = vmatpush1.msra.mxu0 0.0
    %821 = vmatprep.subr.mxu0 0.0
    %822 = vmatpush1.msra.mxu0 0.0
    %823 = vmatprep.subr.mxu0 0.0
    %824 = vmatpush1.msra.mxu0 0.0
    %825 = vmatprep.subr.mxu0 0.0
    %826 = vmatpush1.msra.mxu0 0.0
    %827 = vmatprep.subr.mxu0 0.0
    %828 = vmatpush1.msra.mxu0 0.0
    %829 = vmatprep.subr.mxu0 0.0
    %830 = vmatpush1.msra.mxu0 0.0
    %831 = vmatprep.subr.mxu0 0.0
    %832 = vmatpush1.msra.mxu0 0.0
    %833 = vmatprep.subr.mxu0 0.0
    %834 = vmatpush1.msra.mxu0 0.0
    %835 = vmatprep.subr.mxu0 0.0
    %836 = vmatpush1.msra.mxu0 0.0
    %837 = vmatprep.subr.mxu0 0.0
    %838 = vmatpush1.msra.mxu0 0.0
    %839 = vmatprep.subr.mxu0 0.0
    %840 = vmatpush1.msra.mxu0 0.0
    %841 = vmatprep.subr.mxu0 0.0
    %842 = vmatpush1.msra.mxu0 0.0
    %843 = vmatprep.subr.mxu0 0.0
    %844 = vmatpush1.msra.mxu0 0.0
    %845 = vmatprep.subr.mxu0 0.0
    %846 = vmatpush1.msra.mxu0 0.0
    %847 = vmatprep.subr.mxu0 0.0
    %848 = vmatpush1.msra.mxu0 0.0
    %849 = vmatprep.subr.mxu0 0.0
    %850 = vmatpush1.msra.mxu0 0.0
    %851 = vmatprep.subr.mxu0 0.0
    %852 = vmatpush1.msra.mxu0 0.0
    %853 = vmatprep.subr.mxu0 0.0
    %854 = vmatpush1.msra.mxu0 0.0
    %855 = vmatprep.subr.mxu0 0.0
    %856 = vmatpush1.msra.mxu0 0.0
    %857 = vmatprep.mubr.f32.mxu0 0.0
    %v858 = vand.u32 %v537, 4294901760
    %v859 = vsub.f32 %v537, %v858
    %v860 = vand.u32 %v859, 4294901760
    %861 = vmatmul.mubr.f32.gmra.mrb[0].mxu0 %v860
    %v862 = vpop.f32.mrb[0].mxu0
    %v863 = vadd.f32 %v786, %v862
    %v864 = vpop.f32.mrb[0].mxu0
    %865 = vdwg.mxu0
    %866 = vmatprep.subr.mxu0 0.0
    %v867 = vand.u32 %v524, 4294901760
    %v868 = vsub.f32 %v524, %v867
    %v869 = vand.u32 %v868, 4294901760
    %870 = vmatpush1.msra.mxu0 %v869
    %871 = vmatprep.subr.mxu0 0.0
    %v872 = vand.u32 %v525, 4294901760
    %v873 = vsub.f32 %v525, %v872
    %v874 = vand.u32 %v873, 4294901760
    %875 = vmatpush1.msra.mxu0 %v874
    %876 = vmatprep.subr.mxu0 0.0
    %v877 = vand.u32 %v526, 4294901760
    %v878 = vsub.f32 %v526, %v877
    %v879 = vand.u32 %v878, 4294901760
    %880 = vmatpush1.msra.mxu0 %v879
    %881 = vmatprep.subr.mxu0 0.0
    %v882 = vand.u32 %v527, 4294901760
    %v883 = vsub.f32 %v527, %v882
    %v884 = vand.u32 %v883, 4294901760
    %885 = vmatpush1.msra.mxu0 %v884
    %886 = vmatprep.subr.mxu0 0.0
    %887 = vmatpush1.msra.mxu0 0.0
    %888 = vmatprep.subr.mxu0 0.0
    %889 = vmatpush1.msra.mxu0 0.0
    %890 = vmatprep.subr.mxu0 0.0
    %891 = vmatpush1.msra.mxu0 0.0
    %892 = vmatprep.subr.mxu0 0.0
    %893 = vmatpush1.msra.mxu0 0.0
    %894 = vmatprep.subr.mxu0 0.0
    %895 = vmatpush1.msra.mxu0 0.0
    %896 = vmatprep.subr.mxu0 0.0
    %897 = vmatpush1.msra.mxu0 0.0
    %898 = vmatprep.subr.mxu0 0.0
    %899 = vmatpush1.msra.mxu0 0.0
    %900 = vmatprep.subr.mxu0 0.0
    %901 = vmatpush1.msra.mxu0 0.0
    %902 = vmatprep.subr.mxu0 0.0
    %903 = vmatpush1.msra.mxu0 0.0
    %904 = vmatprep.subr.mxu0 0.0
    %905 = vmatpush1.msra.mxu0 0.0
    %906 = vmatprep.subr.mxu0 0.0
    %907 = vmatpush1.msra.mxu0 0.0
    %908 = vmatprep.subr.mxu0 0.0
    %909 = vmatpush1.msra.mxu0 0.0
    %910 = vmatprep.subr.mxu0 0.0
    %911 = vmatpush1.msra.mxu0 0.0
    %912 = vmatprep.subr.mxu0 0.0
    %913 = vmatpush1.msra.mxu0 0.0
    %914 = vmatprep.subr.mxu0 0.0
    %915 = vmatpush1.msra.mxu0 0.0
    %916 = vmatprep.subr.mxu0 0.0
    %917 = vmatpush1.msra.mxu0 0.0
    %918 = vmatprep.subr.mxu0 0.0
    %919 = vmatpush1.msra.mxu0 0.0
    %920 = vmatprep.subr.mxu0 0.0
    %921 = vmatpush1.msra.mxu0 0.0
    %922 = vmatprep.subr.mxu0 0.0
    %923 = vmatpush1.msra.mxu0 0.0
    %924 = vmatprep.subr.mxu0 0.0
    %925 = vmatpush1.msra.mxu0 0.0
    %926 = vmatprep.subr.mxu0 0.0
    %927 = vmatpush1.msra.mxu0 0.0
    %928 = vmatprep.subr.mxu0 0.0
    %929 = vmatpush1.msra.mxu0 0.0
    %930 = vmatprep.subr.mxu0 0.0
    %931 = vmatpush1.msra.mxu0 0.0
    %932 = vmatprep.subr.mxu0 0.0
    %933 = vmatpush1.msra.mxu0 0.0
    %934 = vmatprep.subr.mxu0 0.0
    %935 = vmatpush1.msra.mxu0 0.0
    %936 = vmatprep.subr.mxu0 0.0
    %937 = vmatpush1.msra.mxu0 0.0
    %938 = vmatprep.subr.mxu0 0.0
    %939 = vmatpush1.msra.mxu0 0.0
    %940 = vmatprep.subr.mxu0 0.0
    %941 = vmatpush1.msra.mxu0 0.0
    %942 = vmatprep.mubr.f32.mxu0 0.0
    %v943 = vand.u32 %v537, 4294901760
    %944 = vmatmul.mubr.f32.gmra.mrb[0].mxu0 %v943
    %v945 = vpop.f32.mrb[0].mxu0
    %v946 = vadd.f32 %v863, %v945
    %v947 = vpop.f32.mrb[0].mxu0
    %948 = vdwg.mxu0
    %949 = vmatprep.subr.mxu0 0.0
    %v950 = vand.u32 %v524, 4294901760
    %951 = vmatpush1.msra.mxu0 %v950
    %952 = vmatprep.subr.mxu0 0.0
    %v953 = vand.u32 %v525, 4294901760
    %954 = vmatpush1.msra.mxu0 %v953
    %955 = vmatprep.subr.mxu0 0.0
    %v956 = vand.u32 %v526, 4294901760
    %957 = vmatpush1.msra.mxu0 %v956
    %958 = vmatprep.subr.mxu0 0.0
    %v959 = vand.u32 %v527, 4294901760
    %960 = vmatpush1.msra.mxu0 %v959
    %961 = vmatprep.subr.mxu0 0.0
    %962 = vmatpush1.msra.mxu0 0.0
    %963 = vmatprep.subr.mxu0 0.0
    %964 = vmatpush1.msra.mxu0 0.0
    %965 = vmatprep.subr.mxu0 0.0
    %966 = vmatpush1.msra.mxu0 0.0
    %967 = vmatprep.subr.mxu0 0.0
    %968 = vmatpush1.msra.mxu0 0.0
    %969 = vmatprep.subr.mxu0 0.0
    %970 = vmatpush1.msra.mxu0 0.0
    %971 = vmatprep.subr.mxu0 0.0
    %972 = vmatpush1.msra.mxu0 0.0
    %973 = vmatprep.subr.mxu0 0.0
    %974 = vmatpush1.msra.mxu0 0.0
    %975 = vmatprep.subr.mxu0 0.0
    %976 = vmatpush1.msra.mxu0 0.0
    %977 = vmatprep.subr.mxu0 0.0
    %978 = vmatpush1.msra.mxu0 0.0
    %979 = vmatprep.subr.mxu0 0.0
    %980 = vmatpush1.msra.mxu0 0.0
    %981 = vmatprep.subr.mxu0 0.0
    %982 = vmatpush1.msra.mxu0 0.0
    %983 = vmatprep.subr.mxu0 0.0
    %984 = vmatpush1.msra.mxu0 0.0
    %985 = vmatprep.subr.mxu0 0.0
    %986 = vmatpush1.msra.mxu0 0.0
    %987 = vmatprep.subr.mxu0 0.0
    %988 = vmatpush1.msra.mxu0 0.0
    %989 = vmatprep.subr.mxu0 0.0
    %990 = vmatpush1.msra.mxu0 0.0
    %991 = vmatprep.subr.mxu0 0.0
    %992 = vmatpush1.msra.mxu0 0.0
    %993 = vmatprep.subr.mxu0 0.0
    %994 = vmatpush1.msra.mxu0 0.0
    %995 = vmatprep.subr.mxu0 0.0
    %996 = vmatpush1.msra.mxu0 0.0
    %997 = vmatprep.subr.mxu0 0.0
    %998 = vmatpush1.msra.mxu0 0.0
    %999 = vmatprep.subr.mxu0 0.0
    %1000 = vmatpush1.msra.mxu0 0.0
    %1001 = vmatprep.subr.mxu0 0.0
    %1002 = vmatpush1.msra.mxu0 0.0
    %1003 = vmatprep.subr.mxu0 0.0
    %1004 = vmatpush1.msra.mxu0 0.0
    %1005 = vmatprep.subr.mxu0 0.0
    %1006 = vmatpush1.msra.mxu0 0.0
    %1007 = vmatprep.subr.mxu0 0.0
    %1008 = vmatpush1.msra.mxu0 0.0
    %1009 = vmatprep.subr.mxu0 0.0
    %1010 = vmatpush1.msra.mxu0 0.0
    %1011 = vmatprep.subr.mxu0 0.0
    %1012 = vmatpush1.msra.mxu0 0.0
    %1013 = vmatprep.subr.mxu0 0.0
    %1014 = vmatpush1.msra.mxu0 0.0
    %1015 = vmatprep.subr.mxu0 0.0
    %1016 = vmatpush1.msra.mxu0 0.0
    %1017 = vmatprep.mubr.f32.mxu0 0.0
    %v1018 = vand.u32 %v537, 4294901760
    %1019 = vmatmul.mubr.f32.gmra.mrb[0].mxu0 %v1018
    %v1020 = vpop.f32.mrb[0].mxu0
    %v1021 = vadd.f32 %v946, %v1020
    %v1022 = vpop.f32.mrb[0].mxu0
    %1023 = vdwg.mxu0
    %v1024 = vtanh.pop %v1021
    %v1025 = vld [vmem:[%s5] sm:$0xff]
    %v1026 = vld [vmem:[%s5 + $0x8] sm:$0xff]
    %v1027 = vld [vmem:[%s5 + $0x10] sm:$0xff]
    %v1028 = vld [vmem:[%s5 + $0x18] sm:$0xff]
    %v1029 = vld [vmem:[%s6] sm:$0x1]
    %v1031 = vlaneseq
    %v1032 = vshrl.u32 %v1031, 7
    %v1033 = vsub.s32 0, %v1032
    %v1034 = vrot.slane %v1029, %v1033
    %v1037 = vsel %vm535, %v1024, 0
    %1039 = vmatprep.subr.mxu0 0.0
    %v1040 = vand.u32 %v1025, 4294901760
    %1041 = vmatpush1.msra.mxu0 %v1040
    %1042 = vmatprep.subr.mxu0 0.0
    %v1043 = vand.u32 %v1026, 4294901760
    %1044 = vmatpush1.msra.mxu0 %v1043
    %1045 = vmatprep.subr.mxu0 0.0
    %v1046 = vand.u32 %v1027, 4294901760
    %1047 = vmatpush1.msra.mxu0 %v1046
    %1048 = vmatprep.subr.mxu0 0.0
    %v1049 = vand.u32 %v1028, 4294901760
    %1050 = vmatpush1.msra.mxu0 %v1049
    %1051 = vmatprep.subr.mxu0 0.0
    %1052 = vmatpush1.msra.mxu0 0.0
    %1053 = vmatprep.subr.mxu0 0.0
    %1054 = vmatpush1.msra.mxu0 0.0
    %1055 = vmatprep.subr.mxu0 0.0
    %1056 = vmatpush1.msra.mxu0 0.0
    %1057 = vmatprep.subr.mxu0 0.0
    %1058 = vmatpush1.msra.mxu0 0.0
    %1059 = vmatprep.subr.mxu0 0.0
    %1060 = vmatpush1.msra.mxu0 0.0
    %1061 = vmatprep.subr.mxu0 0.0
    %1062 = vmatpush1.msra.mxu0 0.0
    %1063 = vmatprep.subr.mxu0 0.0
    %1064 = vmatpush1.msra.mxu0 0.0
    %1065 = vmatprep.subr.mxu0 0.0
    %1066 = vmatpush1.msra.mxu0 0.0
    %1067 = vmatprep.subr.mxu0 0.0
    %1068 = vmatpush1.msra.mxu0 0.0
    %1069 = vmatprep.subr.mxu0 0.0
    %1070 = vmatpush1.msra.mxu0 0.0
    %1071 = vmatprep.subr.mxu0 0.0
    %1072 = vmatpush1.msra.mxu0 0.0
    %1073 = vmatprep.subr.mxu0 0.0
    %1074 = vmatpush1.msra.mxu0 0.0
    %1075 = vmatprep.subr.mxu0 0.0
    %1076 = vmatpush1.msra.mxu0 0.0
    %1077 = vmatprep.subr.mxu0 0.0
    %1078 = vmatpush1.msra.mxu0 0.0
    %1079 = vmatprep.subr.mxu0 0.0
    %1080 = vmatpush1.msra.mxu0 0.0
    %1081 = vmatprep.subr.mxu0 0.0
    %1082 = vmatpush1.msra.mxu0 0.0
    %1083 = vmatprep.subr.mxu0 0.0
    %1084 = vmatpush1.msra.mxu0 0.0
    %1085 = vmatprep.subr.mxu0 0.0
    %1086 = vmatpush1.msra.mxu0 0.0
    %1087 = vmatprep.subr.mxu0 0.0
    %1088 = vmatpush1.msra.mxu0 0.0
    %1089 = vmatprep.subr.mxu0 0.0
    %1090 = vmatpush1.msra.mxu0 0.0
    %1091 = vmatprep.subr.mxu0 0.0
    %1092 = vmatpush1.msra.mxu0 0.0
    %1093 = vmatprep.subr.mxu0 0.0
    %1094 = vmatpush1.msra.mxu0 0.0
    %1095 = vmatprep.subr.mxu0 0.0
    %1096 = vmatpush1.msra.mxu0 0.0
    %1097 = vmatprep.subr.mxu0 0.0
    %1098 = vmatpush1.msra.mxu0 0.0
    %1099 = vmatprep.subr.mxu0 0.0
    %1100 = vmatpush1.msra.mxu0 0.0
    %1101 = vmatprep.subr.mxu0 0.0
    %1102 = vmatpush1.msra.mxu0 0.0
    %1103 = vmatprep.subr.mxu0 0.0
    %1104 = vmatpush1.msra.mxu0 0.0
    %1105 = vmatprep.subr.mxu0 0.0
    %1106 = vmatpush1.msra.mxu0 0.0
    %1107 = vmatprep.mubr.f32.mxu0 0.0
    %v1108 = vand.u32 %v1037, 4294901760
    %v1109 = vsub.f32 %v1037, %v1108
    %v1110 = vand.u32 %v1109, 4294901760
    %v1111 = vsub.f32 %v1109, %v1110
    %v1112 = vand.u32 %v1111, 4294901760
    %1113 = vmatmul.mubr.f32.gmra.mrb[0].mxu0 %v1112
    %v1114 = vpop.f32.mrb[0].mxu0
    %v1115 = vadd.f32 %v1034, %v1114
    %v1116 = vpop.f32.mrb[0].mxu0
    %1117 = vdwg.mxu0
    %1118 = vmatprep.subr.mxu0 0.0
    %v1119 = vand.u32 %v1025, 4294901760
    %v1120 = vsub.f32 %v1025, %v1119
    %v1121 = vand.u32 %v1120, 4294901760
    %v1122 = vsub.f32 %v1120, %v1121
    %v1123 = vand.u32 %v1122, 4294901760
    %1124 = vmatpush1.msra.mxu0 %v1123
    %1125 = vmatprep.subr.mxu0 0.0
    %v1126 = vand.u32 %v1026, 4294901760
    %v1127 = vsub.f32 %v1026, %v1126
    %v1128 = vand.u32 %v1127, 4294901760
    %v1129 = vsub.f32 %v1127, %v1128
    %v1130 = vand.u32 %v1129, 4294901760
    %1131 = vmatpush1.msra.mxu0 %v1130
    %1132 = vmatprep.subr.mxu0 0.0
    %v1133 = vand.u32 %v1027, 4294901760
    %v1134 = vsub.f32 %v1027, %v1133
    %v1135 = vand.u32 %v1134, 4294901760
    %v1136 = vsub.f32 %v1134, %v1135
    %v1137 = vand.u32 %v1136, 4294901760
    %1138 = vmatpush1.msra.mxu0 %v1137
    %1139 = vmatprep.subr.mxu0 0.0
    %v1140 = vand.u32 %v1028, 4294901760
    %v1141 = vsub.f32 %v1028, %v1140
    %v1142 = vand.u32 %v1141, 4294901760
    %v1143 = vsub.f32 %v1141, %v1142
    %v1144 = vand.u32 %v1143, 4294901760
    %1145 = vmatpush1.msra.mxu0 %v1144
    %1146 = vmatprep.subr.mxu0 0.0
    %1147 = vmatpush1.msra.mxu0 0.0
    %1148 = vmatprep.subr.mxu0 0.0
    %1149 = vmatpush1.msra.mxu0 0.0
    %1150 = vmatprep.subr.mxu0 0.0
    %1151 = vmatpush1.msra.mxu0 0.0
    %1152 = vmatprep.subr.mxu0 0.0
    %1153 = vmatpush1.msra.mxu0 0.0
    %1154 = vmatprep.subr.mxu0 0.0
    %1155 = vmatpush1.msra.mxu0 0.0
    %1156 = vmatprep.subr.mxu0 0.0
    %1157 = vmatpush1.msra.mxu0 0.0
    %1158 = vmatprep.subr.mxu0 0.0
    %1159 = vmatpush1.msra.mxu0 0.0
    %1160 = vmatprep.subr.mxu0 0.0
    %1161 = vmatpush1.msra.mxu0 0.0
    %1162 = vmatprep.subr.mxu0 0.0
    %1163 = vmatpush1.msra.mxu0 0.0
    %1164 = vmatprep.subr.mxu0 0.0
    %1165 = vmatpush1.msra.mxu0 0.0
    %1166 = vmatprep.subr.mxu0 0.0
    %1167 = vmatpush1.msra.mxu0 0.0
    %1168 = vmatprep.subr.mxu0 0.0
    %1169 = vmatpush1.msra.mxu0 0.0
    %1170 = vmatprep.subr.mxu0 0.0
    %1171 = vmatpush1.msra.mxu0 0.0
    %1172 = vmatprep.subr.mxu0 0.0
    %1173 = vmatpush1.msra.mxu0 0.0
    %1174 = vmatprep.subr.mxu0 0.0
    %1175 = vmatpush1.msra.mxu0 0.0
    %1176 = vmatprep.subr.mxu0 0.0
    %1177 = vmatpush1.msra.mxu0 0.0
    %1178 = vmatprep.subr.mxu0 0.0
    %1179 = vmatpush1.msra.mxu0 0.0
    %1180 = vmatprep.subr.mxu0 0.0
    %1181 = vmatpush1.msra.mxu0 0.0
    %1182 = vmatprep.subr.mxu0 0.0
    %1183 = vmatpush1.msra.mxu0 0.0
    %1184 = vmatprep.subr.mxu0 0.0
    %1185 = vmatpush1.msra.mxu0 0.0
    %1186 = vmatprep.subr.mxu0 0.0
    %1187 = vmatpush1.msra.mxu0 0.0
    %1188 = vmatprep.subr.mxu0 0.0
    %1189 = vmatpush1.msra.mxu0 0.0
    %1190 = vmatprep.subr.mxu0 0.0
    %1191 = vmatpush1.msra.mxu0 0.0
    %1192 = vmatprep.subr.mxu0 0.0
    %1193 = vmatpush1.msra.mxu0 0.0
    %1194 = vmatprep.subr.mxu0 0.0
    %1195 = vmatpush1.msra.mxu0 0.0
    %1196 = vmatprep.subr.mxu0 0.0
    %1197 = vmatpush1.msra.mxu0 0.0
    %1198 = vmatprep.subr.mxu0 0.0
    %1199 = vmatpush1.msra.mxu0 0.0
    %1200 = vmatprep.subr.mxu0 0.0
    %1201 = vmatpush1.msra.mxu0 0.0
    %1202 = vmatprep.mubr.f32.mxu0 0.0
    %v1203 = vand.u32 %v1037, 4294901760
    %1204 = vmatmul.mubr.f32.gmra.mrb[0].mxu0 %v1203
    %v1205 = vpop.f32.mrb[0].mxu0
    %v1206 = vadd.f32 %v1115, %v1205
    %v1207 = vpop.f32.mrb[0].mxu0
    %1208 = vdwg.mxu0
    %1209 = vmatprep.subr.mxu0 0.0
    %v1210 = vand.u32 %v1025, 4294901760
    %v1211 = vsub.f32 %v1025, %v1210
    %1212 = vmatpush1.msra.mxu0 %v1211
    %1213 = vmatprep.subr.mxu0 0.0
    %v1214 = vand.u32 %v1026, 4294901760
    %v1215 = vsub.f32 %v1026, %v1214
    %1216 = vmatpush1.msra.mxu0 %v1215
    %1217 = vmatprep.subr.mxu0 0.0
    %v1218 = vand.u32 %v1027, 4294901760
    %v1219 = vsub.f32 %v1027, %v1218
    %1220 = vmatpush1.msra.mxu0 %v1219
    %1221 = vmatprep.subr.mxu0 0.0
    %v1222 = vand.u32 %v1028, 4294901760
    %v1223 = vsub.f32 %v1028, %v1222
    %1224 = vmatpush1.msra.mxu0 %v1223
    %1225 = vmatprep.subr.mxu0 0.0
    %1226 = vmatpush1.msra.mxu0 0.0
    %1227 = vmatprep.subr.mxu0 0.0
    %1228 = vmatpush1.msra.mxu0 0.0
    %1229 = vmatprep.subr.mxu0 0.0
    %1230 = vmatpush1.msra.mxu0 0.0
    %1231 = vmatprep.subr.mxu0 0.0
    %1232 = vmatpush1.msra.mxu0 0.0
    %1233 = vmatprep.subr.mxu0 0.0
    %1234 = vmatpush1.msra.mxu0 0.0
    %1235 = vmatprep.subr.mxu0 0.0
    %1236 = vmatpush1.msra.mxu0 0.0
    %1237 = vmatprep.subr.mxu0 0.0
    %1238 = vmatpush1.msra.mxu0 0.0
    %1239 = vmatprep.subr.mxu0 0.0
    %1240 = vmatpush1.msra.mxu0 0.0
    %1241 = vmatprep.subr.mxu0 0.0
    %1242 = vmatpush1.msra.mxu0 0.0
    %1243 = vmatprep.subr.mxu0 0.0
    %1244 = vmatpush1.msra.mxu0 0.0
    %1245 = vmatprep.subr.mxu0 0.0
    %1246 = vmatpush1.msra.mxu0 0.0
    %1247 = vmatprep.subr.mxu0 0.0
    %1248 = vmatpush1.msra.mxu0 0.0
    %1249 = vmatprep.subr.mxu0 0.0
    %1250 = vmatpush1.msra.mxu0 0.0
    %1251 = vmatprep.subr.mxu0 0.0
    %1252 = vmatpush1.msra.mxu0 0.0
    %1253 = vmatprep.subr.mxu0 0.0
    %1254 = vmatpush1.msra.mxu0 0.0
    %1255 = vmatprep.subr.mxu0 0.0
    %1256 = vmatpush1.msra.mxu0 0.0
    %1257 = vmatprep.subr.mxu0 0.0
    %1258 = vmatpush1.msra.mxu0 0.0
    %1259 = vmatprep.subr.mxu0 0.0
    %1260 = vmatpush1.msra.mxu0 0.0
    %1261 = vmatprep.subr.mxu0 0.0
    %1262 = vmatpush1.msra.mxu0 0.0
    %1263 = vmatprep.subr.mxu0 0.0
    %1264 = vmatpush1.msra.mxu0 0.0
    %1265 = vmatprep.subr.mxu0 0.0
    %1266 = vmatpush1.msra.mxu0 0.0
    %1267 = vmatprep.subr.mxu0 0.0
    %1268 = vmatpush1.msra.mxu0 0.0
    %1269 = vmatprep.subr.mxu0 0.0
    %1270 = vmatpush1.msra.mxu0 0.0
    %1271 = vmatprep.subr.mxu0 0.0
    %1272 = vmatpush1.msra.mxu0 0.0
    %1273 = vmatprep.subr.mxu0 0.0
    %1274 = vmatpush1.msra.mxu0 0.0
    %1275 = vmatprep.subr.mxu0 0.0
    %1276 = vmatpush1.msra.mxu0 0.0
    %1277 = vmatprep.subr.mxu0 0.0
    %1278 = vmatpush1.msra.mxu0 0.0
    %1279 = vmatprep.subr.mxu0 0.0
    %1280 = vmatpush1.msra.mxu0 0.0
    %1281 = vmatprep.mubr.f32.mxu0 0.0
    %v1282 = vand.u32 %v1037, 4294901760
    %v1283 = vsub.f32 %v1037, %v1282
    %1284 = vmatmul.mubr.f32.gmra.mrb[0].mxu0 %v1283
    %v1285 = vpop.f32.mrb[0].mxu0
    %v1286 = vadd.f32 %v1206, %v1285
    %v1287 = vpop.f32.mrb[0].mxu0
    %1288 = vdwg.mxu0
    %1289 = vmatprep.subr.mxu0 0.0
    %v1290 = vand.u32 %v1025, 4294901760
    %1291 = vmatpush1.msra.mxu0 %v1290
    %1292 = vmatprep.subr.mxu0 0.0
    %v1293 = vand.u32 %v1026, 4294901760
    %1294 = vmatpush1.msra.mxu0 %v1293
    %1295 = vmatprep.subr.mxu0 0.0
    %v1296 = vand.u32 %v1027, 4294901760
    %1297 = vmatpush1.msra.mxu0 %v1296
    %1298 = vmatprep.subr.mxu0 0.0
    %v1299 = vand.u32 %v1028, 4294901760
    %1300 = vmatpush1.msra.mxu0 %v1299
    %1301 = vmatprep.subr.mxu0 0.0
    %1302 = vmatpush1.msra.mxu0 0.0
    %1303 = vmatprep.subr.mxu0 0.0
    %1304 = vmatpush1.msra.mxu0 0.0
    %1305 = vmatprep.subr.mxu0 0.0
    %1306 = vmatpush1.msra.mxu0 0.0
    %1307 = vmatprep.subr.mxu0 0.0
    %1308 = vmatpush1.msra.mxu0 0.0
    %1309 = vmatprep.subr.mxu0 0.0
    %1310 = vmatpush1.msra.mxu0 0.0
    %1311 = vmatprep.subr.mxu0 0.0
    %1312 = vmatpush1.msra.mxu0 0.0
    %1313 = vmatprep.subr.mxu0 0.0
    %1314 = vmatpush1.msra.mxu0 0.0
    %1315 = vmatprep.subr.mxu0 0.0
    %1316 = vmatpush1.msra.mxu0 0.0
    %1317 = vmatprep.subr.mxu0 0.0
    %1318 = vmatpush1.msra.mxu0 0.0
    %1319 = vmatprep.subr.mxu0 0.0
    %1320 = vmatpush1.msra.mxu0 0.0
    %1321 = vmatprep.subr.mxu0 0.0
    %1322 = vmatpush1.msra.mxu0 0.0
    %1323 = vmatprep.subr.mxu0 0.0
    %1324 = vmatpush1.msra.mxu0 0.0
    %1325 = vmatprep.subr.mxu0 0.0
    %1326 = vmatpush1.msra.mxu0 0.0
    %1327 = vmatprep.subr.mxu0 0.0
    %1328 = vmatpush1.msra.mxu0 0.0
    %1329 = vmatprep.subr.mxu0 0.0
    %1330 = vmatpush1.msra.mxu0 0.0
    %1331 = vmatprep.subr.mxu0 0.0
    %1332 = vmatpush1.msra.mxu0 0.0
    %1333 = vmatprep.subr.mxu0 0.0
    %1334 = vmatpush1.msra.mxu0 0.0
    %1335 = vmatprep.subr.mxu0 0.0
    %1336 = vmatpush1.msra.mxu0 0.0
    %1337 = vmatprep.subr.mxu0 0.0
    %1338 = vmatpush1.msra.mxu0 0.0
    %1339 = vmatprep.subr.mxu0 0.0
    %1340 = vmatpush1.msra.mxu0 0.0
    %1341 = vmatprep.subr.mxu0 0.0
    %1342 = vmatpush1.msra.mxu0 0.0
    %1343 = vmatprep.subr.mxu0 0.0
    %1344 = vmatpush1.msra.mxu0 0.0
    %1345 = vmatprep.subr.mxu0 0.0
    %1346 = vmatpush1.msra.mxu0 0.0
    %1347 = vmatprep.subr.mxu0 0.0
    %1348 = vmatpush1.msra.mxu0 0.0
    %1349 = vmatprep.subr.mxu0 0.0
    %1350 = vmatpush1.msra.mxu0 0.0
    %1351 = vmatprep.subr.mxu0 0.0
    %1352 = vmatpush1.msra.mxu0 0.0
    %1353 = vmatprep.subr.mxu0 0.0
    %1354 = vmatpush1.msra.mxu0 0.0
    %1355 = vmatprep.subr.mxu0 0.0
    %1356 = vmatpush1.msra.mxu0 0.0
    %1357 = vmatprep.mubr.f32.mxu0 0.0
    %v1358 = vand.u32 %v1037, 4294901760
    %v1359 = vsub.f32 %v1037, %v1358
    %v1360 = vand.u32 %v1359, 4294901760
    %1361 = vmatmul.mubr.f32.gmra.mrb[0].mxu0 %v1360
    %v1362 = vpop.f32.mrb[0].mxu0
    %v1363 = vadd.f32 %v1286, %v1362
    %v1364 = vpop.f32.mrb[0].mxu0
    %1365 = vdwg.mxu0
    %1366 = vmatprep.subr.mxu0 0.0
    %v1367 = vand.u32 %v1025, 4294901760
    %v1368 = vsub.f32 %v1025, %v1367
    %v1369 = vand.u32 %v1368, 4294901760
    %1370 = vmatpush1.msra.mxu0 %v1369
    %1371 = vmatprep.subr.mxu0 0.0
    %v1372 = vand.u32 %v1026, 4294901760
    %v1373 = vsub.f32 %v1026, %v1372
    %v1374 = vand.u32 %v1373, 4294901760
    %1375 = vmatpush1.msra.mxu0 %v1374
    %1376 = vmatprep.subr.mxu0 0.0
    %v1377 = vand.u32 %v1027, 4294901760
    %v1378 = vsub.f32 %v1027, %v1377
    %v1379 = vand.u32 %v1378, 4294901760
    %1380 = vmatpush1.msra.mxu0 %v1379
    %1381 = vmatprep.subr.mxu0 0.0
    %v1382 = vand.u32 %v1028, 4294901760
    %v1383 = vsub.f32 %v1028, %v1382
    %v1384 = vand.u32 %v1383, 4294901760
    %1385 = vmatpush1.msra.mxu0 %v1384
    %1386 = vmatprep.subr.mxu0 0.0
    %1387 = vmatpush1.msra.mxu0 0.0
    %1388 = vmatprep.subr.mxu0 0.0
    %1389 = vmatpush1.msra.mxu0 0.0
    %1390 = vmatprep.subr.mxu0 0.0
    %1391 = vmatpush1.msra.mxu0 0.0
    %1392 = vmatprep.subr.mxu0 0.0
    %1393 = vmatpush1.msra.mxu0 0.0
    %1394 = vmatprep.subr.mxu0 0.0
    %1395 = vmatpush1.msra.mxu0 0.0
    %1396 = vmatprep.subr.mxu0 0.0
    %1397 = vmatpush1.msra.mxu0 0.0
    %1398 = vmatprep.subr.mxu0 0.0
    %1399 = vmatpush1.msra.mxu0 0.0
    %1400 = vmatprep.subr.mxu0 0.0
    %1401 = vmatpush1.msra.mxu0 0.0
    %1402 = vmatprep.subr.mxu0 0.0
    %1403 = vmatpush1.msra.mxu0 0.0
    %1404 = vmatprep.subr.mxu0 0.0
    %1405 = vmatpush1.msra.mxu0 0.0
    %1406 = vmatprep.subr.mxu0 0.0
    %1407 = vmatpush1.msra.mxu0 0.0
    %1408 = vmatprep.subr.mxu0 0.0
    %1409 = vmatpush1.msra.mxu0 0.0
    %1410 = vmatprep.subr.mxu0 0.0
    %1411 = vmatpush1.msra.mxu0 0.0
    %1412 = vmatprep.subr.mxu0 0.0
    %1413 = vmatpush1.msra.mxu0 0.0
    %1414 = vmatprep.subr.mxu0 0.0
    %1415 = vmatpush1.msra.mxu0 0.0
    %1416 = vmatprep.subr.mxu0 0.0
    %1417 = vmatpush1.msra.mxu0 0.0
    %1418 = vmatprep.subr.mxu0 0.0
    %1419 = vmatpush1.msra.mxu0 0.0
    %1420 = vmatprep.subr.mxu0 0.0
    %1421 = vmatpush1.msra.mxu0 0.0
    %1422 = vmatprep.subr.mxu0 0.0
    %1423 = vmatpush1.msra.mxu0 0.0
    %1424 = vmatprep.subr.mxu0 0.0
    %1425 = vmatpush1.msra.mxu0 0.0
    %1426 = vmatprep.subr.mxu0 0.0
    %1427 = vmatpush1.msra.mxu0 0.0
    %1428 = vmatprep.subr.mxu0 0.0
    %1429 = vmatpush1.msra.mxu0 0.0
    %1430 = vmatprep.subr.mxu0 0.0
    %1431 = vmatpush1.msra.mxu0 0.0
    %1432 = vmatprep.subr.mxu0 0.0
    %1433 = vmatpush1.msra.mxu0 0.0
    %1434 = vmatprep.subr.mxu0 0.0
    %1435 = vmatpush1.msra.mxu0 0.0
    %1436 = vmatprep.subr.mxu0 0.0
    %1437 = vmatpush1.msra.mxu0 0.0
    %1438 = vmatprep.subr.mxu0 0.0
    %1439 = vmatpush1.msra.mxu0 0.0
    %1440 = vmatprep.subr.mxu0 0.0
    %1441 = vmatpush1.msra.mxu0 0.0
    %1442 = vmatprep.mubr.f32.mxu0 0.0
    %v1443 = vand.u32 %v1037, 4294901760
    %1444 = vmatmul.mubr.f32.gmra.mrb[0].mxu0 %v1443
    %v1445 = vpop.f32.mrb[0].mxu0
    %v1446 = vadd.f32 %v1363, %v1445
    %v1447 = vpop.f32.mrb[0].mxu0
    %1448 = vdwg.mxu0
    %1449 = vmatprep.subr.mxu0 0.0
    %v1450 = vand.u32 %v1025, 4294901760
    %1451 = vmatpush1.msra.mxu0 %v1450
    %1452 = vmatprep.subr.mxu0 0.0
    %v1453 = vand.u32 %v1026, 4294901760
    %1454 = vmatpush1.msra.mxu0 %v1453
    %1455 = vmatprep.subr.mxu0 0.0
    %v1456 = vand.u32 %v1027, 4294901760
    %1457 = vmatpush1.msra.mxu0 %v1456
    %1458 = vmatprep.subr.mxu0 0.0
    %v1459 = vand.u32 %v1028, 4294901760
    %1460 = vmatpush1.msra.mxu0 %v1459
    %1461 = vmatprep.subr.mxu0 0.0
    %1462 = vmatpush1.msra.mxu0 0.0
    %1463 = vmatprep.subr.mxu0 0.0
    %1464 = vmatpush1.msra.mxu0 0.0
    %1465 = vmatprep.subr.mxu0 0.0
    %1466 = vmatpush1.msra.mxu0 0.0
    %1467 = vmatprep.subr.mxu0 0.0
    %1468 = vmatpush1.msra.mxu0 0.0
    %1469 = vmatprep.subr.mxu0 0.0
    %1470 = vmatpush1.msra.mxu0 0.0
    %1471 = vmatprep.subr.mxu0 0.0
    %1472 = vmatpush1.msra.mxu0 0.0
    %1473 = vmatprep.subr.mxu0 0.0
    %1474 = vmatpush1.msra.mxu0 0.0
    %1475 = vmatprep.subr.mxu0 0.0
    %1476 = vmatpush1.msra.mxu0 0.0
    %1477 = vmatprep.subr.mxu0 0.0
    %1478 = vmatpush1.msra.mxu0 0.0
    %1479 = vmatprep.subr.mxu0 0.0
    %1480 = vmatpush1.msra.mxu0 0.0
    %1481 = vmatprep.subr.mxu0 0.0
    %1482 = vmatpush1.msra.mxu0 0.0
    %1483 = vmatprep.subr.mxu0 0.0
    %1484 = vmatpush1.msra.mxu0 0.0
    %1485 = vmatprep.subr.mxu0 0.0
    %1486 = vmatpush1.msra.mxu0 0.0
    %1487 = vmatprep.subr.mxu0 0.0
    %1488 = vmatpush1.msra.mxu0 0.0
    %1489 = vmatprep.subr.mxu0 0.0
    %1490 = vmatpush1.msra.mxu0 0.0
    %1491 = vmatprep.subr.mxu0 0.0
    %1492 = vmatpush1.msra.mxu0 0.0
    %1493 = vmatprep.subr.mxu0 0.0
    %1494 = vmatpush1.msra.mxu0 0.0
    %1495 = vmatprep.subr.mxu0 0.0
    %1496 = vmatpush1.msra.mxu0 0.0
    %1497 = vmatprep.subr.mxu0 0.0
    %1498 = vmatpush1.msra.mxu0 0.0
    %1499 = vmatprep.subr.mxu0 0.0
    %1500 = vmatpush1.msra.mxu0 0.0
    %1501 = vmatprep.subr.mxu0 0.0
    %1502 = vmatpush1.msra.mxu0 0.0
    %1503 = vmatprep.subr.mxu0 0.0
    %1504 = vmatpush1.msra.mxu0 0.0
    %1505 = vmatprep.subr.mxu0 0.0
    %1506 = vmatpush1.msra.mxu0 0.0
    %1507 = vmatprep.subr.mxu0 0.0
    %1508 = vmatpush1.msra.mxu0 0.0
    %1509 = vmatprep.subr.mxu0 0.0
    %1510 = vmatpush1.msra.mxu0 0.0
    %1511 = vmatprep.subr.mxu0 0.0
    %1512 = vmatpush1.msra.mxu0 0.0
    %1513 = vmatprep.subr.mxu0 0.0
    %1514 = vmatpush1.msra.mxu0 0.0
    %1515 = vmatprep.subr.mxu0 0.0
    %1516 = vmatpush1.msra.mxu0 0.0
    %1517 = vmatprep.mubr.f32.mxu0 0.0
    %v1518 = vand.u32 %v1037, 4294901760
    %1519 = vmatmul.mubr.f32.gmra.mrb[0].mxu0 %v1518
    %v1520 = vpop.f32.mrb[0].mxu0
    %v1521 = vadd.f32 %v1446, %v1520
    %v1522 = vpop.f32.mrb[0].mxu0
    %1523 = vdwg.mxu0
    %v1524 = vld [vmem:[%s7] sm:$0x1]
    %v1525 = vmul.f32 %v1524, 1.442695
    %v1526 = vpow.pop %v1525
    %v1527 = vld [vmem:[%s8] sm:$0x3]
    %v1529 = vlaneseq
    %v1530 = vshrl.u32 %v1529, 7
    %v1531 = vsub.s32 0, %v1530
    %v1532 = vrot.slane %v1526, %v1531
    %v1534 = vmul.f32 %v1532, %v1527
    %v1535 = vadd.f32 %v1521, %v1534
    %vm1536 = vcmask 24576
    %v1537 = vsel %vm1536, %v1524, 0.0
    %1538 = vadd.xlane.f32.xlu0 %v1537
    %v1539 = vpop.xlane.xlu0 %1538
    %v1540 = vsub.f32 0.0, %v1539
    %v1541 = vsub.f32 %v1540, 3.675754
    %v1542 = vmul.f32 %v1527, %v1527
    %vm1543 = vcmask 25600
    %v1544 = vsel %vm1543, %v1542, 0.0
    %1545 = vadd.xlane.f32.xlu0 %v1544
    %v1546 = vpop.xlane.xlu0 %1545
    %v1547 = vmul.f32 %v1546, -0.5
    %v1548 = vlaneseq
    %v1549 = vshrl.u32 %v1548, 7
    %v1550 = vsub.s32 0, %v1549
    %v1551 = vrot.slane %v1541, %v1550
    %v1552 = vadd.f32 %v1547, %v1551
    %v1553 = vsub.f32 0.0, %v1524
    %v1554 = vmul.f32 %v1553, 1.442695
    %v1555 = vpow.pop %v1554
    %v1556 = vld [vmem:[%s9] sm:$0x3]
    %v1557 = vsub.f32 %v1556, %v1521
    %v1559 = vlaneseq
    %v1560 = vshrl.u32 %v1559, 7
    %v1561 = vsub.s32 0, %v1560
    %v1562 = vrot.slane %v1555, %v1561
    %v1564 = vmul.f32 %v1557, %v1562
    %v1565 = vmul.f32 %v1564, %v1564
    %v1566 = vsel %vm1543, %v1565, 0.0
    %1567 = vadd.xlane.f32.xlu0 %v1566
    %v1568 = vpop.xlane.xlu0 %1567
    %v1569 = vmul.f32 %v1568, -0.5
    %v1570 = vadd.f32 %v1569, %v1551
    %vm1571 = vcmask 31744
    %v1572 = vsel %vm1571, %v1535, %v1570
    %vm1573 = vcmask 39936
    %v1574 = vsel %vm1573, %v1572, %v1552
    %vm1575 = vcmask 41984
    %1576 = vst.msk [vmem:[#allocation5] sm:$0x3] %vm1575, %v1574
    // Predicated region
    $region46: #{tpu_custom_call.1} parent=1 // pred_check
      _
    $region47: #{tpu_custom_call.1} parent=1 // pred_check_branch
      %1578 = sbr.rel (0) target = $region49
    $region48: #{tpu_custom_call.1} parent=1 // pred_region
      %s1580 = ssub.s32 32, 32
      %1581 = vsyncadd [#allocation4], %s1580
      %s1583 = sshll.u32 [#allocation5], 4
      %s1584 = int_to_ptr.vmem [resolvable:$true] %s1583
      %1586 = dma.vmem_to_hbm [thread:$0]  %s1584, 32, %s10, [#allocation4]
    $region49: #{tpu_custom_call.1} parent=1 // pred_fallthru
      _
    // Predicated region
    $region50: #{tpu_custom_call.1} parent=1 // pred_check
      _
    $region51: #{tpu_custom_call.1} parent=1 // pred_check_branch
      %1588 = sbr.rel (0) target = $region53
    $region52: #{tpu_custom_call.1} parent=1 // pred_region
      %1589 = dma.done [#allocation4], 32
    $region53: #{tpu_custom_call.1} parent=1 // pred_fallthru
      _
    %1590 = vsyncpa [#allocation3], 1
    %1591 = vsyncpa [#allocation4], 1

// kernel: tpu_custom_call.1
$region0: #{tpu_custom_call.1}
  #allocation0 [shape = 'u32[]', space=smem, size = 0x4, offset = 0x4, fixed_abs, tag = 'smem constant byte address 0x4 - core index']
  #allocation1 [shape = 'u32[144,128]{1,0:T(1,128)}', space=vmem, size = 0x12000, scoped, tag = 'internal scratch']
  %s0 = inlined_call_operand.vmem [shape: f32[2,16], index: 0, kind: input, shape index: {}]
  %s1 = inlined_call_operand.hbm [shape: f32[16,32], index: 1, kind: input, shape index: {}]
  %s2 = inlined_call_operand.vmem [shape: f32[1,32], index: 2, kind: input, shape index: {}]
  %s3 = inlined_call_operand.vmem [shape: f32[32,32], index: 3, kind: input, shape index: {}]
  %s4 = inlined_call_operand.vmem [shape: f32[1,32], index: 4, kind: input, shape index: {}]
  %s5 = inlined_call_operand.vmem [shape: f32[32,4], index: 5, kind: input, shape index: {}]
  %s6 = inlined_call_operand.vmem [shape: f32[1,4], index: 6, kind: input, shape index: {}]
  %s7 = inlined_call_operand.vmem [shape: f32[1,4], index: 7, kind: input, shape index: {}]
  %s8 = inlined_call_operand.vmem [shape: f32[2,4], index: 8, kind: input, shape index: {}]
  %s9 = inlined_call_operand.vmem [shape: f32[2,4], index: 9, kind: input, shape index: {}]
  %s10 = inlined_call_operand.hbm [shape: f32[2,6], index: 10, kind: output, shape index: {}]
  %s11 = sld [smem:[#allocation0]]
  $region54: #{tpu_custom_call.1} parent=0
    _
  %s13 = ssub.s32 1, %s11
  %s14 = scalar_select 0, %s13, %s11
  $region1: #{tpu_custom_call.1} parent=0
    #allocation2 [shape = 'u8[8192]{0}', space=vmem, size = 0x2000, scoped, tag = 'input window, operand 1, single buffered']
    #allocation3 [shape = 's32[1]{0}', space=sflag, size = 0x4, scoped, tag = 'scoped memory for tpu_custom_call.1']
    #allocation4 [shape = 's32[1]{0}', space=sflag, size = 0x4, scoped, tag = 'scoped memory for tpu_custom_call.1']
    #allocation5 [shape = 'u8[1024]{0}', space=vmem, size = 0x400, scoped, tag = 'output window, operand 0, single buffered']
    %15 = vsyncpa [#allocation3], 0
    %16 = vsyncpa [#allocation4], 0
    // Predicated region
    $region2: #{tpu_custom_call.1} parent=1 // pred_check
      _
    $region3: #{tpu_custom_call.1} parent=1 // pred_check_branch
      %18 = sbr.rel (0) target = $region5
    $region4: #{tpu_custom_call.1} parent=1 // pred_region
      _
    $region5: #{tpu_custom_call.1} parent=1 // pred_fallthru
      _
    // Predicated region
    $region6: #{tpu_custom_call.1} parent=1 // pred_check
      _
    $region7: #{tpu_custom_call.1} parent=1 // pred_check_branch
      %20 = sbr.rel (0) target = $region9
    $region8: #{tpu_custom_call.1} parent=1 // pred_region
      %s22 = ssub.s32 256, 256
      %23 = vsyncadd [#allocation3], %s22
      %s24 = sshll.u32 [#allocation2], 4
      %s25 = int_to_ptr.vmem [resolvable:$true] %s24
      %30 = dma.hbm_to_vmem [thread:$0]  %s1, 256, %s25, [#allocation3], 128, 128, 8
    $region9: #{tpu_custom_call.1} parent=1 // pred_fallthru
      _
    // Predicated region
    $region10: #{tpu_custom_call.1} parent=1 // pred_check
      _
    $region11: #{tpu_custom_call.1} parent=1 // pred_check_branch
      %32 = sbr.rel (0) target = $region13
    $region12: #{tpu_custom_call.1} parent=1 // pred_region
      _
    $region13: #{tpu_custom_call.1} parent=1 // pred_fallthru
      _
    // Predicated region
    $region14: #{tpu_custom_call.1} parent=1 // pred_check
      _
    $region15: #{tpu_custom_call.1} parent=1 // pred_check_branch
      %34 = sbr.rel (0) target = $region17
    $region16: #{tpu_custom_call.1} parent=1 // pred_region
      _
    $region17: #{tpu_custom_call.1} parent=1 // pred_fallthru
      _
    // Predicated region
    $region18: #{tpu_custom_call.1} parent=1 // pred_check
      _
    $region19: #{tpu_custom_call.1} parent=1 // pred_check_branch
      %36 = sbr.rel (0) target = $region21
    $region20: #{tpu_custom_call.1} parent=1 // pred_region
      _
    $region21: #{tpu_custom_call.1} parent=1 // pred_fallthru
      _
    // Predicated region
    $region22: #{tpu_custom_call.1} parent=1 // pred_check
      _
    $region23: #{tpu_custom_call.1} parent=1 // pred_check_branch
      %38 = sbr.rel (0) target = $region25
    $region24: #{tpu_custom_call.1} parent=1 // pred_region
      _
    $region25: #{tpu_custom_call.1} parent=1 // pred_fallthru
      _
    // Predicated region
    $region26: #{tpu_custom_call.1} parent=1 // pred_check
      _
    $region27: #{tpu_custom_call.1} parent=1 // pred_check_branch
      %40 = sbr.rel (0) target = $region29
    $region28: #{tpu_custom_call.1} parent=1 // pred_region
      _
    $region29: #{tpu_custom_call.1} parent=1 // pred_fallthru
      _
    // Predicated region
    $region30: #{tpu_custom_call.1} parent=1 // pred_check
      _
    $region31: #{tpu_custom_call.1} parent=1 // pred_check_branch
      %42 = sbr.rel (0) target = $region33
    $region32: #{tpu_custom_call.1} parent=1 // pred_region
      _
    $region33: #{tpu_custom_call.1} parent=1 // pred_fallthru
      _
    // Predicated region
    $region34: #{tpu_custom_call.1} parent=1 // pred_check
      _
    $region35: #{tpu_custom_call.1} parent=1 // pred_check_branch
      %44 = sbr.rel (0) target = $region37
    $region36: #{tpu_custom_call.1} parent=1 // pred_region
      _
    $region37: #{tpu_custom_call.1} parent=1 // pred_fallthru
      _
    // Predicated region
    $region38: #{tpu_custom_call.1} parent=1 // pred_check
      _
    $region39: #{tpu_custom_call.1} parent=1 // pred_check_branch
      %46 = sbr.rel (0) target = $region41
    $region40: #{tpu_custom_call.1} parent=1 // pred_region
      _
    $region41: #{tpu_custom_call.1} parent=1 // pred_fallthru
      _
    // Predicated region
    $region42: #{tpu_custom_call.1} parent=1 // pred_check
      _
    $region43: #{tpu_custom_call.1} parent=1 // pred_check_branch
      %48 = sbr.rel (0) target = $region45
    $region44: #{tpu_custom_call.1} parent=1 // pred_region
      %49 = dma.done [#allocation3], 256
    $region45: #{tpu_custom_call.1} parent=1 // pred_fallthru
      _
    %v50 = vld [vmem:[%s0] sm:$0x3]
    %v51 = vld [vmem:[#allocation2] sm:$0xff]
    %v52 = vld [vmem:[#allocation2 + $0x8] sm:$0xff]
    %v53 = vld [vmem:[%s2] sm:$0x1]
    %v55 = vlaneseq
    %v56 = vshrl.u32 %v55, 7
    %v57 = vsub.s32 0, %v56
    %v58 = vrot.slane %v53, %v57
    %vm60 = vcmask 130048
    %v62 = vsel %vm60, %v50, 0
    %64 = vmatprep.subr.mxu0 0.0
    %v65 = vand.u32 %v51, 4294901760
    %66 = vmatpush1.msra.mxu0 %v65
    %67 = vmatprep.subr.mxu0 0.0
    %v68 = vand.u32 %v52, 4294901760
    %69 = vmatpush1.msra.mxu0 %v68
    %70 = vmatprep.subr.mxu0 0.0
    %71 = vmatpush1.msra.mxu0 0.0
    %72 = vmatprep.subr.mxu0 0.0
    %73 = vmatpush1.msra.mxu0 0.0
    %74 = vmatprep.subr.mxu0 0.0
    %75 = vmatpush1.msra.mxu0 0.0
    %76 = vmatprep.subr.mxu0 0.0
    %77 = vmatpush1.msra.mxu0 0.0
    %78 = vmatprep.subr.mxu0 0.0
    %79 = vmatpush1.msra.mxu0 0.0
    %80 = vmatprep.subr.mxu0 0.0
    %81 = vmatpush1.msra.mxu0 0.0
    %82 = vmatprep.subr.mxu0 0.0
    %83 = vmatpush1.msra.mxu0 0.0
    %84 = vmatprep.subr.mxu0 0.0
    %85 = vmatpush1.msra.mxu0 0.0
    %86 = vmatprep.subr.mxu0 0.0
    %87 = vmatpush1.msra.mxu0 0.0
    %88 = vmatprep.subr.mxu0 0.0
    %89 = vmatpush1.msra.mxu0 0.0
    %90 = vmatprep.subr.mxu0 0.0
    %91 = vmatpush1.msra.mxu0 0.0
    %92 = vmatprep.subr.mxu0 0.0
    %93 = vmatpush1.msra.mxu0 0.0
    %94 = vmatprep.subr.mxu0 0.0
    %95 = vmatpush1.msra.mxu0 0.0
    %96 = vmatprep.subr.mxu0 0.0
    %97 = vmatpush1.msra.mxu0 0.0
    %98 = vmatprep.subr.mxu0 0.0
    %99 = vmatpush1.msra.mxu0 0.0
    %100 = vmatprep.subr.mxu0 0.0
    %101 = vmatpush1.msra.mxu0 0.0
    %102 = vmatprep.subr.mxu0 0.0
    %103 = vmatpush1.msra.mxu0 0.0
    %104 = vmatprep.subr.mxu0 0.0
    %105 = vmatpush1.msra.mxu0 0.0
    %106 = vmatprep.subr.mxu0 0.0
    %107 = vmatpush1.msra.mxu0 0.0
    %108 = vmatprep.subr.mxu0 0.0
    %109 = vmatpush1.msra.mxu0 0.0
    %110 = vmatprep.subr.mxu0 0.0
    %111 = vmatpush1.msra.mxu0 0.0
    %112 = vmatprep.subr.mxu0 0.0
    %113 = vmatpush1.msra.mxu0 0.0
    %114 = vmatprep.subr.mxu0 0.0
    %115 = vmatpush1.msra.mxu0 0.0
    %116 = vmatprep.subr.mxu0 0.0
    %117 = vmatpush1.msra.mxu0 0.0
    %118 = vmatprep.subr.mxu0 0.0
    %119 = vmatpush1.msra.mxu0 0.0
    %120 = vmatprep.subr.mxu0 0.0
    %121 = vmatpush1.msra.mxu0 0.0
    %122 = vmatprep.subr.mxu0 0.0
    %123 = vmatpush1.msra.mxu0 0.0
    %124 = vmatprep.subr.mxu0 0.0
    %125 = vmatpush1.msra.mxu0 0.0
    %126 = vmatprep.subr.mxu0 0.0
    %127 = vmatpush1.msra.mxu0 0.0
    %128 = vmatprep.subr.mxu0 0.0
    %129 = vmatpush1.msra.mxu0 0.0
    %130 = vmatprep.mubr.f32.mxu0 0.0
    %v131 = vand.u32 %v62, 4294901760
    %v132 = vsub.f32 %v62, %v131
    %v133 = vand.u32 %v132, 4294901760
    %v134 = vsub.f32 %v132, %v133
    %v135 = vand.u32 %v134, 4294901760
    %136 = vmatmul.mubr.f32.gmra.mrb[0].mxu0 %v135
    %v137 = vpop.f32.mrb[0].mxu0
    %v138 = vadd.f32 %v58, %v137
    %v139 = vpop.f32.mrb[0].mxu0
    %140 = vdwg.mxu0
    %141 = vmatprep.subr.mxu0 0.0
    %v142 = vand.u32 %v51, 4294901760
    %v143 = vsub.f32 %v51, %v142
    %v144 = vand.u32 %v143, 4294901760
    %v145 = vsub.f32 %v143, %v144
    %v146 = vand.u32 %v145, 4294901760
    %147 = vmatpush1.msra.mxu0 %v146
    %148 = vmatprep.subr.mxu0 0.0
    %v149 = vand.u32 %v52, 4294901760
    %v150 = vsub.f32 %v52, %v149
    %v151 = vand.u32 %v150, 4294901760
    %v152 = vsub.f32 %v150, %v151
    %v153 = vand.u32 %v152, 4294901760
    %154 = vmatpush1.msra.mxu0 %v153
    %155 = vmatprep.subr.mxu0 0.0
    %156 = vmatpush1.msra.mxu0 0.0
    %157 = vmatprep.subr.mxu0 0.0
    %158 = vmatpush1.msra.mxu0 0.0
    %159 = vmatprep.subr.mxu0 0.0
    %160 = vmatpush1.msra.mxu0 0.0
    %161 = vmatprep.subr.mxu0 0.0
    %162 = vmatpush1.msra.mxu0 0.0
    %163 = vmatprep.subr.mxu0 0.0
    %164 = vmatpush1.msra.mxu0 0.0
    %165 = vmatprep.subr.mxu0 0.0
    %166 = vmatpush1.msra.mxu0 0.0
    %167 = vmatprep.subr.mxu0 0.0
    %168 = vmatpush1.msra.mxu0 0.0
    %169 = vmatprep.subr.mxu0 0.0
    %170 = vmatpush1.msra.mxu0 0.0
    %171 = vmatprep.subr.mxu0 0.0
    %172 = vmatpush1.msra.mxu0 0.0
    %173 = vmatprep.subr.mxu0 0.0
    %174 = vmatpush1.msra.mxu0 0.0
    %175 = vmatprep.subr.mxu0 0.0
    %176 = vmatpush1.msra.mxu0 0.0
    %177 = vmatprep.subr.mxu0 0.0
    %178 = vmatpush1.msra.mxu0 0.0
    %179 = vmatprep.subr.mxu0 0.0
    %180 = vmatpush1.msra.mxu0 0.0
    %181 = vmatprep.subr.mxu0 0.0
    %182 = vmatpush1.msra.mxu0 0.0
    %183 = vmatprep.subr.mxu0 0.0
    %184 = vmatpush1.msra.mxu0 0.0
    %185 = vmatprep.subr.mxu0 0.0
    %186 = vmatpush1.msra.mxu0 0.0
    %187 = vmatprep.subr.mxu0 0.0
    %188 = vmatpush1.msra.mxu0 0.0
    %189 = vmatprep.subr.mxu0 0.0
    %190 = vmatpush1.msra.mxu0 0.0
    %191 = vmatprep.subr.mxu0 0.0
    %192 = vmatpush1.msra.mxu0 0.0
    %193 = vmatprep.subr.mxu0 0.0
    %194 = vmatpush1.msra.mxu0 0.0
    %195 = vmatprep.subr.mxu0 0.0
    %196 = vmatpush1.msra.mxu0 0.0
    %197 = vmatprep.subr.mxu0 0.0
    %198 = vmatpush1.msra.mxu0 0.0
    %199 = vmatprep.subr.mxu0 0.0
    %200 = vmatpush1.msra.mxu0 0.0
    %201 = vmatprep.subr.mxu0 0.0
    %202 = vmatpush1.msra.mxu0 0.0
    %203 = vmatprep.subr.mxu0 0.0
    %204 = vmatpush1.msra.mxu0 0.0
    %205 = vmatprep.subr.mxu0 0.0
    %206 = vmatpush1.msra.mxu0 0.0
    %207 = vmatprep.subr.mxu0 0.0
    %208 = vmatpush1.msra.mxu0 0.0
    %209 = vmatprep.subr.mxu0 0.0
    %210 = vmatpush1.msra.mxu0 0.0
    %211 = vmatprep.subr.mxu0 0.0
    %212 = vmatpush1.msra.mxu0 0.0
    %213 = vmatprep.subr.mxu0 0.0
    %214 = vmatpush1.msra.mxu0 0.0
    %215 = vmatprep.mubr.f32.mxu0 0.0
    %v216 = vand.u32 %v62, 4294901760
    %217 = vmatmul.mubr.f32.gmra.mrb[0].mxu0 %v216
    %v218 = vpop.f32.mrb[0].mxu0
    %v219 = vadd.f32 %v138, %v218
    %v220 = vpop.f32.mrb[0].mxu0
    %221 = vdwg.mxu0
    %222 = vmatprep.subr.mxu0 0.0
    %v223 = vand.u32 %v51, 4294901760
    %v224 = vsub.f32 %v51, %v223
    %225 = vmatpush1.msra.mxu0 %v224
    %226 = vmatprep.subr.mxu0 0.0
    %v227 = vand.u32 %v52, 4294901760
    %v228 = vsub.f32 %v52, %v227
    %229 = vmatpush1.msra.mxu0 %v228
    %230 = vmatprep.subr.mxu0 0.0
    %231 = vmatpush1.msra.mxu0 0.0
    %232 = vmatprep.subr.mxu0 0.0
    %233 = vmatpush1.msra.mxu0 0.0
    %234 = vmatprep.subr.mxu0 0.0
    %235 = vmatpush1.msra.mxu0 0.0
    %236 = vmatprep.subr.mxu0 0.0
    %237 = vmatpush1.msra.mxu0 0.0
    %238 = vmatprep.subr.mxu0 0.0
    %239 = vmatpush1.msra.mxu0 0.0
    %240 = vmatprep.subr.mxu0 0.0
    %241 = vmatpush1.msra.mxu0 0.0
    %242 = vmatprep.subr.mxu0 0.0
    %243 = vmatpush1.msra.mxu0 0.0
    %244 = vmatprep.subr.mxu0 0.0
    %245 = vmatpush1.msra.mxu0 0.0
    %246 = vmatprep.subr.mxu0 0.0
    %247 = vmatpush1.msra.mxu0 0.0
    %248 = vmatprep.subr.mxu0 0.0
    %249 = vmatpush1.msra.mxu0 0.0
    %250 = vmatprep.subr.mxu0 0.0
    %251 = vmatpush1.msra.mxu0 0.0
    %252 = vmatprep.subr.mxu0 0.0
    %253 = vmatpush1.msra.mxu0 0.0
    %254 = vmatprep.subr.mxu0 0.0
    %255 = vmatpush1.msra.mxu0 0.0
    %256 = vmatprep.subr.mxu0 0.0
    %257 = vmatpush1.msra.mxu0 0.0
    %258 = vmatprep.subr.mxu0 0.0
    %259 = vmatpush1.msra.mxu0 0.0
    %260 = vmatprep.subr.mxu0 0.0
    %261 = vmatpush1.msra.mxu0 0.0
    %262 = vmatprep.subr.mxu0 0.0
    %263 = vmatpush1.msra.mxu0 0.0
    %264 = vmatprep.subr.mxu0 0.0
    %265 = vmatpush1.msra.mxu0 0.0
    %266 = vmatprep.subr.mxu0 0.0
    %267 = vmatpush1.msra.mxu0 0.0
    %268 = vmatprep.subr.mxu0 0.0
    %269 = vmatpush1.msra.mxu0 0.0
    %270 = vmatprep.subr.mxu0 0.0
    %271 = vmatpush1.msra.mxu0 0.0
    %272 = vmatprep.subr.mxu0 0.0
    %273 = vmatpush1.msra.mxu0 0.0
    %274 = vmatprep.subr.mxu0 0.0
    %275 = vmatpush1.msra.mxu0 0.0
    %276 = vmatprep.subr.mxu0 0.0
    %277 = vmatpush1.msra.mxu0 0.0
    %278 = vmatprep.subr.mxu0 0.0
    %279 = vmatpush1.msra.mxu0 0.0
    %280 = vmatprep.subr.mxu0 0.0
    %281 = vmatpush1.msra.mxu0 0.0
    %282 = vmatprep.subr.mxu0 0.0
    %283 = vmatpush1.msra.mxu0 0.0
    %284 = vmatprep.subr.mxu0 0.0
    %285 = vmatpush1.msra.mxu0 0.0
    %286 = vmatprep.subr.mxu0 0.0
    %287 = vmatpush1.msra.mxu0 0.0
    %288 = vmatprep.subr.mxu0 0.0
    %289 = vmatpush1.msra.mxu0 0.0
    %290 = vmatprep.mubr.f32.mxu0 0.0
    %v291 = vand.u32 %v62, 4294901760
    %v292 = vsub.f32 %v62, %v291
    %293 = vmatmul.mubr.f32.gmra.mrb[0].mxu0 %v292
    %v294 = vpop.f32.mrb[0].mxu0
    %v295 = vadd.f32 %v219, %v294
    %v296 = vpop.f32.mrb[0].mxu0
    %297 = vdwg.mxu0
    %298 = vmatprep.subr.mxu0 0.0
    %v299 = vand.u32 %v51, 4294901760
    %300 = vmatpush1.msra.mxu0 %v299
    %301 = vmatprep.subr.mxu0 0.0
    %v302 = vand.u32 %v52, 4294901760
    %303 = vmatpush1.msra.mxu0 %v302
    %304 = vmatprep.subr.mxu0 0.0
    %305 = vmatpush1.msra.mxu0 0.0
    %306 = vmatprep.subr.mxu0 0.0
    %307 = vmatpush1.msra.mxu0 0.0
    %308 = vmatprep.subr.mxu0 0.0
    %309 = vmatpush1.msra.mxu0 0.0
    %310 = vmatprep.subr.mxu0 0.0
    %311 = vmatpush1.msra.mxu0 0.0
    %312 = vmatprep.subr.mxu0 0.0
    %313 = vmatpush1.msra.mxu0 0.0
    %314 = vmatprep.subr.mxu0 0.0
    %315 = vmatpush1.msra.mxu0 0.0
    %316 = vmatprep.subr.mxu0 0.0
    %317 = vmatpush1.msra.mxu0 0.0
    %318 = vmatprep.subr.mxu0 0.0
    %319 = vmatpush1.msra.mxu0 0.0
    %320 = vmatprep.subr.mxu0 0.0
    %321 = vmatpush1.msra.mxu0 0.0
    %322 = vmatprep.subr.mxu0 0.0
    %323 = vmatpush1.msra.mxu0 0.0
    %324 = vmatprep.subr.mxu0 0.0
    %325 = vmatpush1.msra.mxu0 0.0
    %326 = vmatprep.subr.mxu0 0.0
    %327 = vmatpush1.msra.mxu0 0.0
    %328 = vmatprep.subr.mxu0 0.0
    %329 = vmatpush1.msra.mxu0 0.0
    %330 = vmatprep.subr.mxu0 0.0
    %331 = vmatpush1.msra.mxu0 0.0
    %332 = vmatprep.subr.mxu0 0.0
    %333 = vmatpush1.msra.mxu0 0.0
    %334 = vmatprep.subr.mxu0 0.0
    %335 = vmatpush1.msra.mxu0 0.0
    %336 = vmatprep.subr.mxu0 0.0
    %337 = vmatpush1.msra.mxu0 0.0
    %338 = vmatprep.subr.mxu0 0.0
    %339 = vmatpush1.msra.mxu0 0.0
    %340 = vmatprep.subr.mxu0 0.0
    %341 = vmatpush1.msra.mxu0 0.0
    %342 = vmatprep.subr.mxu0 0.0
    %343 = vmatpush1.msra.mxu0 0.0
    %344 = vmatprep.subr.mxu0 0.0
    %345 = vmatpush1.msra.mxu0 0.0
    %346 = vmatprep.subr.mxu0 0.0
    %347 = vmatpush1.msra.mxu0 0.0
    %348 = vmatprep.subr.mxu0 0.0
    %349 = vmatpush1.msra.mxu0 0.0
    %350 = vmatprep.subr.mxu0 0.0
    %351 = vmatpush1.msra.mxu0 0.0
    %352 = vmatprep.subr.mxu0 0.0
    %353 = vmatpush1.msra.mxu0 0.0
    %354 = vmatprep.subr.mxu0 0.0
    %355 = vmatpush1.msra.mxu0 0.0
    %356 = vmatprep.subr.mxu0 0.0
    %357 = vmatpush1.msra.mxu0 0.0
    %358 = vmatprep.subr.mxu0 0.0
    %359 = vmatpush1.msra.mxu0 0.0
    %360 = vmatprep.subr.mxu0 0.0
    %361 = vmatpush1.msra.mxu0 0.0
    %362 = vmatprep.subr.mxu0 0.0
    %363 = vmatpush1.msra.mxu0 0.0
    %364 = vmatprep.mubr.f32.mxu0 0.0
    %v365 = vand.u32 %v62, 4294901760
    %v366 = vsub.f32 %v62, %v365
    %v367 = vand.u32 %v366, 4294901760
    %368 = vmatmul.mubr.f32.gmra.mrb[0].mxu0 %v367
    %v369 = vpop.f32.mrb[0].mxu0
    %v370 = vadd.f32 %v295, %v369
    %v371 = vpop.f32.mrb[0].mxu0
    %372 = vdwg.mxu0
    %373 = vmatprep.subr.mxu0 0.0
    %v374 = vand.u32 %v51, 4294901760
    %v375 = vsub.f32 %v51, %v374
    %v376 = vand.u32 %v375, 4294901760
    %377 = vmatpush1.msra.mxu0 %v376
    %378 = vmatprep.subr.mxu0 0.0
    %v379 = vand.u32 %v52, 4294901760
    %v380 = vsub.f32 %v52, %v379
    %v381 = vand.u32 %v380, 4294901760
    %382 = vmatpush1.msra.mxu0 %v381
    %383 = vmatprep.subr.mxu0 0.0
    %384 = vmatpush1.msra.mxu0 0.0
    %385 = vmatprep.subr.mxu0 0.0
    %386 = vmatpush1.msra.mxu0 0.0
    %387 = vmatprep.subr.mxu0 0.0
    %388 = vmatpush1.msra.mxu0 0.0
    %389 = vmatprep.subr.mxu0 0.0
    %390 = vmatpush1.msra.mxu0 0.0
    %391 = vmatprep.subr.mxu0 0.0
    %392 = vmatpush1.msra.mxu0 0.0
    %393 = vmatprep.subr.mxu0 0.0
    %394 = vmatpush1.msra.mxu0 0.0
    %395 = vmatprep.subr.mxu0 0.0
    %396 = vmatpush1.msra.mxu0 0.0
    %397 = vmatprep.subr.mxu0 0.0
    %398 = vmatpush1.msra.mxu0 0.0
    %399 = vmatprep.subr.mxu0 0.0
    %400 = vmatpush1.msra.mxu0 0.0
    %401 = vmatprep.subr.mxu0 0.0
    %402 = vmatpush1.msra.mxu0 0.0
    %403 = vmatprep.subr.mxu0 0.0
    %404 = vmatpush1.msra.mxu0 0.0
    %405 = vmatprep.subr.mxu0 0.0
    %406 = vmatpush1.msra.mxu0 0.0
    %407 = vmatprep.subr.mxu0 0.0
    %408 = vmatpush1.msra.mxu0 0.0
    %409 = vmatprep.subr.mxu0 0.0
    %410 = vmatpush1.msra.mxu0 0.0
    %411 = vmatprep.subr.mxu0 0.0
    %412 = vmatpush1.msra.mxu0 0.0
    %413 = vmatprep.subr.mxu0 0.0
    %414 = vmatpush1.msra.mxu0 0.0
    %415 = vmatprep.subr.mxu0 0.0
    %416 = vmatpush1.msra.mxu0 0.0
    %417 = vmatprep.subr.mxu0 0.0
    %418 = vmatpush1.msra.mxu0 0.0
    %419 = vmatprep.subr.mxu0 0.0
    %420 = vmatpush1.msra.mxu0 0.0
    %421 = vmatprep.subr.mxu0 0.0
    %422 = vmatpush1.msra.mxu0 0.0
    %423 = vmatprep.subr.mxu0 0.0
    %424 = vmatpush1.msra.mxu0 0.0
    %425 = vmatprep.subr.mxu0 0.0
    %426 = vmatpush1.msra.mxu0 0.0
    %427 = vmatprep.subr.mxu0 0.0
    %428 = vmatpush1.msra.mxu0 0.0
    %429 = vmatprep.subr.mxu0 0.0
    %430 = vmatpush1.msra.mxu0 0.0
    %431 = vmatprep.subr.mxu0 0.0
    %432 = vmatpush1.msra.mxu0 0.0
    %433 = vmatprep.subr.mxu0 0.0
    %434 = vmatpush1.msra.mxu0 0.0
    %435 = vmatprep.subr.mxu0 0.0
    %436 = vmatpush1.msra.mxu0 0.0
    %437 = vmatprep.subr.mxu0 0.0
    %438 = vmatpush1.msra.mxu0 0.0
    %439 = vmatprep.subr.mxu0 0.0
    %440 = vmatpush1.msra.mxu0 0.0
    %441 = vmatprep.subr.mxu0 0.0
    %442 = vmatpush1.msra.mxu0 0.0
    %443 = vmatprep.mubr.f32.mxu0 0.0
    %v444 = vand.u32 %v62, 4294901760
    %445 = vmatmul.mubr.f32.gmra.mrb[0].mxu0 %v444
    %v446 = vpop.f32.mrb[0].mxu0
    %v447 = vadd.f32 %v370, %v446
    %v448 = vpop.f32.mrb[0].mxu0
    %449 = vdwg.mxu0
    %450 = vmatprep.subr.mxu0 0.0
    %v451 = vand.u32 %v51, 4294901760
    %452 = vmatpush1.msra.mxu0 %v451
    %453 = vmatprep.subr.mxu0 0.0
    %v454 = vand.u32 %v52, 4294901760
    %455 = vmatpush1.msra.mxu0 %v454
    %456 = vmatprep.subr.mxu0 0.0
    %457 = vmatpush1.msra.mxu0 0.0
    %458 = vmatprep.subr.mxu0 0.0
    %459 = vmatpush1.msra.mxu0 0.0
    %460 = vmatprep.subr.mxu0 0.0
    %461 = vmatpush1.msra.mxu0 0.0
    %462 = vmatprep.subr.mxu0 0.0
    %463 = vmatpush1.msra.mxu0 0.0
    %464 = vmatprep.subr.mxu0 0.0
    %465 = vmatpush1.msra.mxu0 0.0
    %466 = vmatprep.subr.mxu0 0.0
    %467 = vmatpush1.msra.mxu0 0.0
    %468 = vmatprep.subr.mxu0 0.0
    %469 = vmatpush1.msra.mxu0 0.0
    %470 = vmatprep.subr.mxu0 0.0
    %471 = vmatpush1.msra.mxu0 0.0
    %472 = vmatprep.subr.mxu0 0.0
    %473 = vmatpush1.msra.mxu0 0.0
    %474 = vmatprep.subr.mxu0 0.0
    %475 = vmatpush1.msra.mxu0 0.0
    %476 = vmatprep.subr.mxu0 0.0
    %477 = vmatpush1.msra.mxu0 0.0
    %478 = vmatprep.subr.mxu0 0.0
    %479 = vmatpush1.msra.mxu0 0.0
    %480 = vmatprep.subr.mxu0 0.0
    %481 = vmatpush1.msra.mxu0 0.0
    %482 = vmatprep.subr.mxu0 0.0
    %483 = vmatpush1.msra.mxu0 0.0
    %484 = vmatprep.subr.mxu0 0.0
    %485 = vmatpush1.msra.mxu0 0.0
    %486 = vmatprep.subr.mxu0 0.0
    %487 = vmatpush1.msra.mxu0 0.0
    %488 = vmatprep.subr.mxu0 0.0
    %489 = vmatpush1.msra.mxu0 0.0
    %490 = vmatprep.subr.mxu0 0.0
    %491 = vmatpush1.msra.mxu0 0.0
    %492 = vmatprep.subr.mxu0 0.0
    %493 = vmatpush1.msra.mxu0 0.0
    %494 = vmatprep.subr.mxu0 0.0
    %495 = vmatpush1.msra.mxu0 0.0
    %496 = vmatprep.subr.mxu0 0.0
    %497 = vmatpush1.msra.mxu0 0.0
    %498 = vmatprep.subr.mxu0 0.0
    %499 = vmatpush1.msra.mxu0 0.0
    %500 = vmatprep.subr.mxu0 0.0
    %501 = vmatpush1.msra.mxu0 0.0
    %502 = vmatprep.subr.mxu0 0.0
    %503 = vmatpush1.msra.mxu0 0.0
    %504 = vmatprep.subr.mxu0 0.0
    %505 = vmatpush1.msra.mxu0 0.0
    %506 = vmatprep.subr.mxu0 0.0
    %507 = vmatpush1.msra.mxu0 0.0
    %508 = vmatprep.subr.mxu0 0.0
    %509 = vmatpush1.msra.mxu0 0.0
    %510 = vmatprep.subr.mxu0 0.0
    %511 = vmatpush1.msra.mxu0 0.0
    %512 = vmatprep.subr.mxu0 0.0
    %513 = vmatpush1.msra.mxu0 0.0
    %514 = vmatprep.subr.mxu0 0.0
    %515 = vmatpush1.msra.mxu0 0.0
    %516 = vmatprep.mubr.f32.mxu0 0.0
    %v517 = vand.u32 %v62, 4294901760
    %518 = vmatmul.mubr.f32.gmra.mrb[0].mxu0 %v517
    %v519 = vpop.f32.mrb[0].mxu0
    %v520 = vadd.f32 %v447, %v519
    %v521 = vpop.f32.mrb[0].mxu0
    %522 = vdwg.mxu0
    %v523 = vtanh.pop %v520
    %v524 = vld [vmem:[%s3] sm:$0xff]
    %v525 = vld [vmem:[%s3 + $0x8] sm:$0xff]
    %v526 = vld [vmem:[%s3 + $0x10] sm:$0xff]
    %v527 = vld [vmem:[%s3 + $0x18] sm:$0xff]
    %v528 = vld [vmem:[%s4] sm:$0x1]
    %v530 = vlaneseq
    %v531 = vshrl.u32 %v530, 7
    %v532 = vsub.s32 0, %v531
    %v533 = vrot.slane %v528, %v532
    %vm535 = vcmask 261120
    %v537 = vsel %vm535, %v523, 0
    %539 = vmatprep.subr.mxu0 0.0
    %v540 = vand.u32 %v524, 4294901760
    %541 = vmatpush1.msra.mxu0 %v540
    %542 = vmatprep.subr.mxu0 0.0
    %v543 = vand.u32 %v525, 4294901760
    %544 = vmatpush1.msra.mxu0 %v543
    %545 = vmatprep.subr.mxu0 0.0
    %v546 = vand.u32 %v526, 4294901760
    %547 = vmatpush1.msra.mxu0 %v546
    %548 = vmatprep.subr.mxu0 0.0
    %v549 = vand.u32 %v527, 4294901760
    %550 = vmatpush1.msra.mxu0 %v549
    %551 = vmatprep.subr.mxu0 0.0
    %552 = vmatpush1.msra.mxu0 0.0
    %553 = vmatprep.subr.mxu0 0.0
    %554 = vmatpush1.msra.mxu0 0.0
    %555 = vmatprep.subr.mxu0 0.0
    %556 = vmatpush1.msra.mxu0 0.0
    %557 = vmatprep.subr.mxu0 0.0
    %558 = vmatpush1.msra.mxu0 0.0
    %559 = vmatprep.subr.mxu0 0.0
    %560 = vmatpush1.msra.mxu0 0.0
    %561 = vmatprep.subr.mxu0 0.0
    %562 = vmatpush1.msra.mxu0 0.0
    %563 = vmatprep.subr.mxu0 0.0
    %564 = vmatpush1.msra.mxu0 0.0
    %565 = vmatprep.subr.mxu0 0.0
    %566 = vmatpush1.msra.mxu0 0.0
    %567 = vmatprep.subr.mxu0 0.0
    %568 = vmatpush1.msra.mxu0 0.0
    %569 = vmatprep.subr.mxu0 0.0
    %570 = vmatpush1.msra.mxu0 0.0
    %571 = vmatprep.subr.mxu0 0.0
    %572 = vmatpush1.msra.mxu0 0.0
    %573 = vmatprep.subr.mxu0 0.0
    %574 = vmatpush1.msra.mxu0 0.0
    %575 = vmatprep.subr.mxu0 0.0
    %576 = vmatpush1.msra.mxu0 0.0
    %577 = vmatprep.subr.mxu0 0.0
    %578 = vmatpush1.msra.mxu0 0.0
    %579 = vmatprep.subr.mxu0 0.0
    %580 = vmatpush1.msra.mxu0 0.0
    %581 = vmatprep.subr.mxu0 0.0
    %582 = vmatpush1.msra.mxu0 0.0
    %583 = vmatprep.subr.mxu0 0.0
    %584 = vmatpush1.msra.mxu0 0.0
    %585 = vmatprep.subr.mxu0 0.0
    %586 = vmatpush1.msra.mxu0 0.0
    %587 = vmatprep.subr.mxu0 0.0
    %588 = vmatpush1.msra.mxu0 0.0
    %589 = vmatprep.subr.mxu0 0.0
    %590 = vmatpush1.msra.mxu0 0.0
    %591 = vmatprep.subr.mxu0 0.0
    %592 = vmatpush1.msra.mxu0 0.0
    %593 = vmatprep.subr.mxu0 0.0
    %594 = vmatpush1.msra.mxu0 0.0
    %595 = vmatprep.subr.mxu0 0.0
    %596 = vmatpush1.msra.mxu0 0.0
    %597 = vmatprep.subr.mxu0 0.0
    %598 = vmatpush1.msra.mxu0 0.0
    %599 = vmatprep.subr.mxu0 0.0
    %600 = vmatpush1.msra.mxu0 0.0
    %601 = vmatprep.subr.mxu0 0.0
    %602 = vmatpush1.msra.mxu0 0.0
    %603 = vmatprep.subr.mxu0 0.0
    %604 = vmatpush1.msra.mxu0 0.0
    %605 = vmatprep.subr.mxu0 0.0
    %606 = vmatpush1.msra.mxu0 0.0
    %607 = vmatprep.mubr.f32.mxu0 0.0
    %v608 = vand.u32 %v537, 4294901760
    %v609 = vsub.f32 %v537, %v608
    %v610 = vand.u32 %v609, 4294901760
    %v611 = vsub.f32 %v609, %v610
    %v612 = vand.u32 %v611, 4294901760
    %613 = vmatmul.mubr.f32.gmra.mrb[0].mxu0 %v612
    %v614 = vpop.f32.mrb[0].mxu0
    %v615 = vadd.f32 %v533, %v614
    %v616 = vpop.f32.mrb[0].mxu0
    %617 = vdwg.mxu0
    %618 = vmatprep.subr.mxu0 0.0
    %v619 = vand.u32 %v524, 4294901760
    %v620 = vsub.f32 %v524, %v619
    %v621 = vand.u32 %v620, 4294901760
    %v622 = vsub.f32 %v620, %v621
    %v623 = vand.u32 %v622, 4294901760
    %624 = vmatpush1.msra.mxu0 %v623
    %625 = vmatprep.subr.mxu0 0.0
    %v626 = vand.u32 %v525, 4294901760
    %v627 = vsub.f32 %v525, %v626
    %v628 = vand.u32 %v627, 4294901760
    %v629 = vsub.f32 %v627, %v628
    %v630 = vand.u32 %v629, 4294901760
    %631 = vmatpush1.msra.mxu0 %v630
    %632 = vmatprep.subr.mxu0 0.0
    %v633 = vand.u32 %v526, 4294901760
    %v634 = vsub.f32 %v526, %v633
    %v635 = vand.u32 %v634, 4294901760
    %v636 = vsub.f32 %v634, %v635
    %v637 = vand.u32 %v636, 4294901760
    %638 = vmatpush1.msra.mxu0 %v637
    %639 = vmatprep.subr.mxu0 0.0
    %v640 = vand.u32 %v527, 4294901760
    %v641 = vsub.f32 %v527, %v640
    %v642 = vand.u32 %v641, 4294901760
    %v643 = vsub.f32 %v641, %v642
    %v644 = vand.u32 %v643, 4294901760
    %645 = vmatpush1.msra.mxu0 %v644
    %646 = vmatprep.subr.mxu0 0.0
    %647 = vmatpush1.msra.mxu0 0.0
    %648 = vmatprep.subr.mxu0 0.0
    %649 = vmatpush1.msra.mxu0 0.0
    %650 = vmatprep.subr.mxu0 0.0
    %651 = vmatpush1.msra.mxu0 0.0
    %652 = vmatprep.subr.mxu0 0.0
    %653 = vmatpush1.msra.mxu0 0.0
    %654 = vmatprep.subr.mxu0 0.0
    %655 = vmatpush1.msra.mxu0 0.0
    %656 = vmatprep.subr.mxu0 0.0
    %657 = vmatpush1.msra.mxu0 0.0
    %658 = vmatprep.subr.mxu0 0.0
    %659 = vmatpush1.msra.mxu0 0.0
    %660 = vmatprep.subr.mxu0 0.0
    %661 = vmatpush1.msra.mxu0 0.0
    %662 = vmatprep.subr.mxu0 0.0
    %663 = vmatpush1.msra.mxu0 0.0
    %664 = vmatprep.subr.mxu0 0.0
    %665 = vmatpush1.msra.mxu0 0.0
    %666 = vmatprep.subr.mxu0 0.0
    %667 = vmatpush1.msra.mxu0 0.0
    %668 = vmatprep.subr.mxu0 0.0
    %669 = vmatpush1.msra.mxu0 0.0
    %670 = vmatprep.subr.mxu0 0.0
    %671 = vmatpush1.msra.mxu0 0.0
    %672 = vmatprep.subr.mxu0 0.0
    %673 = vmatpush1.msra.mxu0 0.0
    %674 = vmatprep.subr.mxu0 0.0
    %675 = vmatpush1.msra.mxu0 0.0
    %676 = vmatprep.subr.mxu0 0.0
    %677 = vmatpush1.msra.mxu0 0.0
    %678 = vmatprep.subr.mxu0 0.0
    %679 = vmatpush1.msra.mxu0 0.0
    %680 = vmatprep.subr.mxu0 0.0
    %681 = vmatpush1.msra.mxu0 0.0
    %682 = vmatprep.subr.mxu0 0.0
    %683 = vmatpush1.msra.mxu0 0.0
    %684 = vmatprep.subr.mxu0 0.0
    %685 = vmatpush1.msra.mxu0 0.0
    %686 = vmatprep.subr.mxu0 0.0
    %687 = vmatpush1.msra.mxu0 0.0
    %688 = vmatprep.subr.mxu0 0.0
    %689 = vmatpush1.msra.mxu0 0.0
    %690 = vmatprep.subr.mxu0 0.0
    %691 = vmatpush1.msra.mxu0 0.0
    %692 = vmatprep.subr.mxu0 0.0
    %693 = vmatpush1.msra.mxu0 0.0
    %694 = vmatprep.subr.mxu0 0.0
    %695 = vmatpush1.msra.mxu0 0.0
    %696 = vmatprep.subr.mxu0 0.0
    %697 = vmatpush1.msra.mxu0 0.0
    %698 = vmatprep.subr.mxu0 0.0
    %699 = vmatpush1.msra.mxu0 0.0
    %700 = vmatprep.subr.mxu0 0.0
    %701 = vmatpush1.msra.mxu0 0.0
    %702 = vmatprep.mubr.f32.mxu0 0.0
    %v703 = vand.u32 %v537, 4294901760
    %704 = vmatmul.mubr.f32.gmra.mrb[0].mxu0 %v703
    %v705 = vpop.f32.mrb[0].mxu0
    %v706 = vadd.f32 %v615, %v705
    %v707 = vpop.f32.mrb[0].mxu0
    %708 = vdwg.mxu0
    %709 = vmatprep.subr.mxu0 0.0
    %v710 = vand.u32 %v524, 4294901760
    %v711 = vsub.f32 %v524, %v710
    %712 = vmatpush1.msra.mxu0 %v711
    %713 = vmatprep.subr.mxu0 0.0
    %v714 = vand.u32 %v525, 4294901760
    %v715 = vsub.f32 %v525, %v714
    %716 = vmatpush1.msra.mxu0 %v715
    %717 = vmatprep.subr.mxu0 0.0
    %v718 = vand.u32 %v526, 4294901760
    %v719 = vsub.f32 %v526, %v718
    %720 = vmatpush1.msra.mxu0 %v719
    %721 = vmatprep.subr.mxu0 0.0
    %v722 = vand.u32 %v527, 4294901760
    %v723 = vsub.f32 %v527, %v722
    %724 = vmatpush1.msra.mxu0 %v723
    %725 = vmatprep.subr.mxu0 0.0
    %726 = vmatpush1.msra.mxu0 0.0
    %727 = vmatprep.subr.mxu0 0.0
    %728 = vmatpush1.msra.mxu0 0.0
    %729 = vmatprep.subr.mxu0 0.0
    %730 = vmatpush1.msra.mxu0 0.0
    %731 = vmatprep.subr.mxu0 0.0
    %732 = vmatpush1.msra.mxu0 0.0
    %733 = vmatprep.subr.mxu0 0.0
    %734 = vmatpush1.msra.mxu0 0.0
    %735 = vmatprep.subr.mxu0 0.0
    %736 = vmatpush1.msra.mxu0 0.0
    %737 = vmatprep.subr.mxu0 0.0
    %738 = vmatpush1.msra.mxu0 0.0
    %739 = vmatprep.subr.mxu0 0.0
    %740 = vmatpush1.msra.mxu0 0.0
    %741 = vmatprep.subr.mxu0 0.0
    %742 = vmatpush1.msra.mxu0 0.0
    %743 = vmatprep.subr.mxu0 0.0
    %744 = vmatpush1.msra.mxu0 0.0
    %745 = vmatprep.subr.mxu0 0.0
    %746 = vmatpush1.msra.mxu0 0.0
    %747 = vmatprep.subr.mxu0 0.0
    %748 = vmatpush1.msra.mxu0 0.0
    %749 = vmatprep.subr.mxu0 0.0
    %750 = vmatpush1.msra.mxu0 0.0
    %751 = vmatprep.subr.mxu0 0.0
    %752 = vmatpush1.msra.mxu0 0.0
    %753 = vmatprep.subr.mxu0 0.0
    %754 = vmatpush1.msra.mxu0 0.0
    %755 = vmatprep.subr.mxu0 0.0
    %756 = vmatpush1.msra.mxu0 0.0
    %757 = vmatprep.subr.mxu0 0.0
    %758 = vmatpush1.msra.mxu0 0.0
    %759 = vmatprep.subr.mxu0 0.0
    %760 = vmatpush1.msra.mxu0 0.0
    %761 = vmatprep.subr.mxu0 0.0
    %762 = vmatpush1.msra.mxu0 0.0
    %763 = vmatprep.subr.mxu0 0.0
    %764 = vmatpush1.msra.mxu0 0.0
    %765 = vmatprep.subr.mxu0 0.0
    %766 = vmatpush1.msra.mxu0 0.0
    %767 = vmatprep.subr.mxu0 0.0
    %768 = vmatpush1.msra.mxu0 0.0
    %769 = vmatprep.subr.mxu0 0.0
    %770 = vmatpush1.msra.mxu0 0.0
    %771 = vmatprep.subr.mxu0 0.0
    %772 = vmatpush1.msra.mxu0 0.0
    %773 = vmatprep.subr.mxu0 0.0
    %774 = vmatpush1.msra.mxu0 0.0
    %775 = vmatprep.subr.mxu0 0.0
    %776 = vmatpush1.msra.mxu0 0.0
    %777 = vmatprep.subr.mxu0 0.0
    %778 = vmatpush1.msra.mxu0 0.0
    %779 = vmatprep.subr.mxu0 0.0
    %780 = vmatpush1.msra.mxu0 0.0
    %781 = vmatprep.mubr.f32.mxu0 0.0
    %v782 = vand.u32 %v537, 4294901760
    %v783 = vsub.f32 %v537, %v782
    %784 = vmatmul.mubr.f32.gmra.mrb[0].mxu0 %v783
    %v785 = vpop.f32.mrb[0].mxu0
    %v786 = vadd.f32 %v706, %v785
    %v787 = vpop.f32.mrb[0].mxu0
    %788 = vdwg.mxu0
    %789 = vmatprep.subr.mxu0 0.0
    %v790 = vand.u32 %v524, 4294901760
    %791 = vmatpush1.msra.mxu0 %v790
    %792 = vmatprep.subr.mxu0 0.0
    %v793 = vand.u32 %v525, 4294901760
    %794 = vmatpush1.msra.mxu0 %v793
    %795 = vmatprep.subr.mxu0 0.0
    %v796 = vand.u32 %v526, 4294901760
    %797 = vmatpush1.msra.mxu0 %v796
    %798 = vmatprep.subr.mxu0 0.0
    %v799 = vand.u32 %v527, 4294901760
    %800 = vmatpush1.msra.mxu0 %v799
    %801 = vmatprep.subr.mxu0 0.0
    %802 = vmatpush1.msra.mxu0 0.0
    %803 = vmatprep.subr.mxu0 0.0
    %804 = vmatpush1.msra.mxu0 0.0
    %805 = vmatprep.subr.mxu0 0.0
    %806 = vmatpush1.msra.mxu0 0.0
    %807 = vmatprep.subr.mxu0 0.0
    %808 = vmatpush1.msra.mxu0 0.0
    %809 = vmatprep.subr.mxu0 0.0
    %810 = vmatpush1.msra.mxu0 0.0
    %811 = vmatprep.subr.mxu0 0.0
    %812 = vmatpush1.msra.mxu0 0.0
    %813 = vmatprep.subr.mxu0 0.0
    %814 = vmatpush1.msra.mxu0 0.0
    %815 = vmatprep.subr.mxu0 0.0
    %816 = vmatpush1.msra.mxu0 0.0
    %817 = vmatprep.subr.mxu0 0.0
    %818 = vmatpush1.msra.mxu0 0.0
    %819 = vmatprep.subr.mxu0 0.0
    %820 = vmatpush1.msra.mxu0 0.0
    %821 = vmatprep.subr.mxu0 0.0
    %822 = vmatpush1.msra.mxu0 0.0
    %823 = vmatprep.subr.mxu0 0.0
    %824 = vmatpush1.msra.mxu0 0.0
    %825 = vmatprep.subr.mxu0 0.0
    %826 = vmatpush1.msra.mxu0 0.0
    %827 = vmatprep.subr.mxu0 0.0
    %828 = vmatpush1.msra.mxu0 0.0
    %829 = vmatprep.subr.mxu0 0.0
    %830 = vmatpush1.msra.mxu0 0.0
    %831 = vmatprep.subr.mxu0 0.0
    %832 = vmatpush1.msra.mxu0 0.0
    %833 = vmatprep.subr.mxu0 0.0
    %834 = vmatpush1.msra.mxu0 0.0
    %835 = vmatprep.subr.mxu0 0.0
    %836 = vmatpush1.msra.mxu0 0.0
    %837 = vmatprep.subr.mxu0 0.0
    %838 = vmatpush1.msra.mxu0 0.0
    %839 = vmatprep.subr.mxu0 0.0
    %840 = vmatpush1.msra.mxu0 0.0
    %841 = vmatprep.subr.mxu0 0.0
    %842 = vmatpush1.msra.mxu0 0.0
    %843 = vmatprep.subr.mxu0 0.0
    %844 = vmatpush1.msra.mxu0 0.0
    %845 = vmatprep.subr.mxu0 0.0
    %846 = vmatpush1.msra.mxu0 0.0
    %847 = vmatprep.subr.mxu0 0.0
    %848 = vmatpush1.msra.mxu0 0.0
    %849 = vmatprep.subr.mxu0 0.0
    %850 = vmatpush1.msra.mxu0 0.0
    %851 = vmatprep.subr.mxu0 0.0
    %852 = vmatpush1.msra.mxu0 0.0
    %853 = vmatprep.subr.mxu0 0.0
    %854 = vmatpush1.msra.mxu0 0.0
    %855 = vmatprep.subr.mxu0 0.0
    %856 = vmatpush1.msra.mxu0 0.0
    %857 = vmatprep.mubr.f32.mxu0 0.0
    %v858 = vand.u32 %v537, 4294901760
    %v859 = vsub.f32 %v537, %v858
    %v860 = vand.u32 %v859, 4294901760
    %861 = vmatmul.mubr.f32.gmra.mrb[0].mxu0 %v860
    %v862 = vpop.f32.mrb[0].mxu0
    %v863 = vadd.f32 %v786, %v862
    %v864 = vpop.f32.mrb[0].mxu0
    %865 = vdwg.mxu0
    %866 = vmatprep.subr.mxu0 0.0
    %v867 = vand.u32 %v524, 4294901760
    %v868 = vsub.f32 %v524, %v867
    %v869 = vand.u32 %v868, 4294901760
    %870 = vmatpush1.msra.mxu0 %v869
    %871 = vmatprep.subr.mxu0 0.0
    %v872 = vand.u32 %v525, 4294901760
    %v873 = vsub.f32 %v525, %v872
    %v874 = vand.u32 %v873, 4294901760
    %875 = vmatpush1.msra.mxu0 %v874
    %876 = vmatprep.subr.mxu0 0.0
    %v877 = vand.u32 %v526, 4294901760
    %v878 = vsub.f32 %v526, %v877
    %v879 = vand.u32 %v878, 4294901760
    %880 = vmatpush1.msra.mxu0 %v879
    %881 = vmatprep.subr.mxu0 0.0
    %v882 = vand.u32 %v527, 4294901760
    %v883 = vsub.f32 %v527, %v882
    %v884 = vand.u32 %v883, 4294901760
    %885 = vmatpush1.msra.mxu0 %v884
    %886 = vmatprep.subr.mxu0 0.0
    %887 = vmatpush1.msra.mxu0 0.0
    %888 = vmatprep.subr.mxu0 0.0
    %889 = vmatpush1.msra.mxu0 0.0
    %890 = vmatprep.subr.mxu0 0.0
    %891 = vmatpush1.msra.mxu0 0.0
    %892 = vmatprep.subr.mxu0 0.0
    %893 = vmatpush1.msra.mxu0 0.0
    %894 = vmatprep.subr.mxu0 0.0
    %895 = vmatpush1.msra.mxu0 0.0
    %896 = vmatprep.subr.mxu0 0.0
    %897 = vmatpush1.msra.mxu0 0.0
    %898 = vmatprep.subr.mxu0 0.0
    %899 = vmatpush1.msra.mxu0 0.0
    %900 = vmatprep.subr.mxu0 0.0
    %901 = vmatpush1.msra.mxu0 0.0
    %902 = vmatprep.subr.mxu0 0.0
    %903 = vmatpush1.msra.mxu0 0.0
    %904 = vmatprep.subr.mxu0 0.0
    %905 = vmatpush1.msra.mxu0 0.0
    %906 = vmatprep.subr.mxu0 0.0
    %907 = vmatpush1.msra.mxu0 0.0
    %908 = vmatprep.subr.mxu0 0.0
    %909 = vmatpush1.msra.mxu0 0.0
    %910 = vmatprep.subr.mxu0 0.0
    %911 = vmatpush1.msra.mxu0 0.0
    %912 = vmatprep.subr.mxu0 0.0
    %913 = vmatpush1.msra.mxu0 0.0
    %914 = vmatprep.subr.mxu0 0.0
    %915 = vmatpush1.msra.mxu0 0.0
    %916 = vmatprep.subr.mxu0 0.0
    %917 = vmatpush1.msra.mxu0 0.0
    %918 = vmatprep.subr.mxu0 0.0
    %919 = vmatpush1.msra.mxu0 0.0
    %920 = vmatprep.subr.mxu0 0.0
    %921 = vmatpush1.msra.mxu0 0.0
    %922 = vmatprep.subr.mxu0 0.0
    %923 = vmatpush1.msra.mxu0 0.0
    %924 = vmatprep.subr.mxu0 0.0
    %925 = vmatpush1.msra.mxu0 0.0
    %926 = vmatprep.subr.mxu0 0.0
    %927 = vmatpush1.msra.mxu0 0.0
    %928 = vmatprep.subr.mxu0 0.0
    %929 = vmatpush1.msra.mxu0 0.0
    %930 = vmatprep.subr.mxu0 0.0
    %931 = vmatpush1.msra.mxu0 0.0
    %932 = vmatprep.subr.mxu0 0.0
    %933 = vmatpush1.msra.mxu0 0.0
    %934 = vmatprep.subr.mxu0 0.0
    %935 = vmatpush1.msra.mxu0 0.0
    %936 = vmatprep.subr.mxu0 0.0
    %937 = vmatpush1.msra.mxu0 0.0
    %938 = vmatprep.subr.mxu0 0.0
    %939 = vmatpush1.msra.mxu0 0.0
    %940 = vmatprep.subr.mxu0 0.0
    %941 = vmatpush1.msra.mxu0 0.0
    %942 = vmatprep.mubr.f32.mxu0 0.0
    %v943 = vand.u32 %v537, 4294901760
    %944 = vmatmul.mubr.f32.gmra.mrb[0].mxu0 %v943
    %v945 = vpop.f32.mrb[0].mxu0
    %v946 = vadd.f32 %v863, %v945
    %v947 = vpop.f32.mrb[0].mxu0
    %948 = vdwg.mxu0
    %949 = vmatprep.subr.mxu0 0.0
    %v950 = vand.u32 %v524, 4294901760
    %951 = vmatpush1.msra.mxu0 %v950
    %952 = vmatprep.subr.mxu0 0.0
    %v953 = vand.u32 %v525, 4294901760
    %954 = vmatpush1.msra.mxu0 %v953
    %955 = vmatprep.subr.mxu0 0.0
    %v956 = vand.u32 %v526, 4294901760
    %957 = vmatpush1.msra.mxu0 %v956
    %958 = vmatprep.subr.mxu0 0.0
    %v959 = vand.u32 %v527, 4294901760
    %960 = vmatpush1.msra.mxu0 %v959
    %961 = vmatprep.subr.mxu0 0.0
    %962 = vmatpush1.msra.mxu0 0.0
    %963 = vmatprep.subr.mxu0 0.0
    %964 = vmatpush1.msra.mxu0 0.0
    %965 = vmatprep.subr.mxu0 0.0
    %966 = vmatpush1.msra.mxu0 0.0
    %967 = vmatprep.subr.mxu0 0.0
    %968 = vmatpush1.msra.mxu0 0.0
    %969 = vmatprep.subr.mxu0 0.0
    %970 = vmatpush1.msra.mxu0 0.0
    %971 = vmatprep.subr.mxu0 0.0
    %972 = vmatpush1.msra.mxu0 0.0
    %973 = vmatprep.subr.mxu0 0.0
    %974 = vmatpush1.msra.mxu0 0.0
    %975 = vmatprep.subr.mxu0 0.0
    %976 = vmatpush1.msra.mxu0 0.0
    %977 = vmatprep.subr.mxu0 0.0
    %978 = vmatpush1.msra.mxu0 0.0
    %979 = vmatprep.subr.mxu0 0.0
    %980 = vmatpush1.msra.mxu0 0.0
    %981 = vmatprep.subr.mxu0 0.0
    %982 = vmatpush1.msra.mxu0 0.0
    %983 = vmatprep.subr.mxu0 0.0
    %984 = vmatpush1.msra.mxu0 0.0
    %985 = vmatprep.subr.mxu0 0.0
    %986 = vmatpush1.msra.mxu0 0.0
    %987 = vmatprep.subr.mxu0 0.0
    %988 = vmatpush1.msra.mxu0 0.0
    %989 = vmatprep.subr.mxu0 0.0
    %990 = vmatpush1.msra.mxu0 0.0
    %991 = vmatprep.subr.mxu0 0.0
    %992 = vmatpush1.msra.mxu0 0.0
    %993 = vmatprep.subr.mxu0 0.0
    %994 = vmatpush1.msra.mxu0 0.0
    %995 = vmatprep.subr.mxu0 0.0
    %996 = vmatpush1.msra.mxu0 0.0
    %997 = vmatprep.subr.mxu0 0.0
    %998 = vmatpush1.msra.mxu0 0.0
    %999 = vmatprep.subr.mxu0 0.0
    %1000 = vmatpush1.msra.mxu0 0.0
    %1001 = vmatprep.subr.mxu0 0.0
    %1002 = vmatpush1.msra.mxu0 0.0
    %1003 = vmatprep.subr.mxu0 0.0
    %1004 = vmatpush1.msra.mxu0 0.0
    %1005 = vmatprep.subr.mxu0 0.0
    %1006 = vmatpush1.msra.mxu0 0.0
    %1007 = vmatprep.subr.mxu0 0.0
    %1008 = vmatpush1.msra.mxu0 0.0
    %1009 = vmatprep.subr.mxu0 0.0
    %1010 = vmatpush1.msra.mxu0 0.0
    %1011 = vmatprep.subr.mxu0 0.0
    %1012 = vmatpush1.msra.mxu0 0.0
    %1013 = vmatprep.subr.mxu0 0.0
    %1014 = vmatpush1.msra.mxu0 0.0
    %1015 = vmatprep.subr.mxu0 0.0
    %1016 = vmatpush1.msra.mxu0 0.0
    %1017 = vmatprep.mubr.f32.mxu0 0.0
    %v1018 = vand.u32 %v537, 4294901760
    %1019 = vmatmul.mubr.f32.gmra.mrb[0].mxu0 %v1018
    %v1020 = vpop.f32.mrb[0].mxu0
    %v1021 = vadd.f32 %v946, %v1020
    %v1022 = vpop.f32.mrb[0].mxu0
    %1023 = vdwg.mxu0
    %v1024 = vtanh.pop %v1021
    %v1025 = vld [vmem:[%s5] sm:$0xff]
    %v1026 = vld [vmem:[%s5 + $0x8] sm:$0xff]
    %v1027 = vld [vmem:[%s5 + $0x10] sm:$0xff]
    %v1028 = vld [vmem:[%s5 + $0x18] sm:$0xff]
    %v1029 = vld [vmem:[%s6] sm:$0x1]
    %v1031 = vlaneseq
    %v1032 = vshrl.u32 %v1031, 7
    %v1033 = vsub.s32 0, %v1032
    %v1034 = vrot.slane %v1029, %v1033
    %v1037 = vsel %vm535, %v1024, 0
    %1039 = vmatprep.subr.mxu0 0.0
    %v1040 = vand.u32 %v1025, 4294901760
    %1041 = vmatpush1.msra.mxu0 %v1040
    %1042 = vmatprep.subr.mxu0 0.0
    %v1043 = vand.u32 %v1026, 4294901760
    %1044 = vmatpush1.msra.mxu0 %v1043
    %1045 = vmatprep.subr.mxu0 0.0
    %v1046 = vand.u32 %v1027, 4294901760
    %1047 = vmatpush1.msra.mxu0 %v1046
    %1048 = vmatprep.subr.mxu0 0.0
    %v1049 = vand.u32 %v1028, 4294901760
    %1050 = vmatpush1.msra.mxu0 %v1049
    %1051 = vmatprep.subr.mxu0 0.0
    %1052 = vmatpush1.msra.mxu0 0.0
    %1053 = vmatprep.subr.mxu0 0.0
    %1054 = vmatpush1.msra.mxu0 0.0
    %1055 = vmatprep.subr.mxu0 0.0
    %1056 = vmatpush1.msra.mxu0 0.0
    %1057 = vmatprep.subr.mxu0 0.0
    %1058 = vmatpush1.msra.mxu0 0.0
    %1059 = vmatprep.subr.mxu0 0.0
    %1060 = vmatpush1.msra.mxu0 0.0
    %1061 = vmatprep.subr.mxu0 0.0
    %1062 = vmatpush1.msra.mxu0 0.0
    %1063 = vmatprep.subr.mxu0 0.0
    %1064 = vmatpush1.msra.mxu0 0.0
    %1065 = vmatprep.subr.mxu0 0.0
    %1066 = vmatpush1.msra.mxu0 0.0
    %1067 = vmatprep.subr.mxu0 0.0
    %1068 = vmatpush1.msra.mxu0 0.0
    %1069 = vmatprep.subr.mxu0 0.0
    %1070 = vmatpush1.msra.mxu0 0.0
    %1071 = vmatprep.subr.mxu0 0.0
    %1072 = vmatpush1.msra.mxu0 0.0
    %1073 = vmatprep.subr.mxu0 0.0
    %1074 = vmatpush1.msra.mxu0 0.0
    %1075 = vmatprep.subr.mxu0 0.0
    %1076 = vmatpush1.msra.mxu0 0.0
    %1077 = vmatprep.subr.mxu0 0.0
    %1078 = vmatpush1.msra.mxu0 0.0
    %1079 = vmatprep.subr.mxu0 0.0
    %1080 = vmatpush1.msra.mxu0 0.0
    %1081 = vmatprep.subr.mxu0 0.0
    %1082 = vmatpush1.msra.mxu0 0.0
    %1083 = vmatprep.subr.mxu0 0.0
    %1084 = vmatpush1.msra.mxu0 0.0
    %1085 = vmatprep.subr.mxu0 0.0
    %1086 = vmatpush1.msra.mxu0 0.0
    %1087 = vmatprep.subr.mxu0 0.0
    %1088 = vmatpush1.msra.mxu0 0.0
    %1089 = vmatprep.subr.mxu0 0.0
    %1090 = vmatpush1.msra.mxu0 0.0
    %1091 = vmatprep.subr.mxu0 0.0
    %1092 = vmatpush1.msra.mxu0 0.0
    %1093 = vmatprep.subr.mxu0 0.0
    %1094 = vmatpush1.msra.mxu0 0.0
    %1095 = vmatprep.subr.mxu0 0.0
    %1096 = vmatpush1.msra.mxu0 0.0
    %1097 = vmatprep.subr.mxu0 0.0
    %1098 = vmatpush1.msra.mxu0 0.0
    %1099 = vmatprep.subr.mxu0 0.0
    %1100 = vmatpush1.msra.mxu0 0.0
    %1101 = vmatprep.subr.mxu0 0.0
    %1102 = vmatpush1.msra.mxu0 0.0
    %1103 = vmatprep.subr.mxu0 0.0
    %1104 = vmatpush1.msra.mxu0 0.0
    %1105 = vmatprep.subr.mxu0 0.0
    %1106 = vmatpush1.msra.mxu0 0.0
    %1107 = vmatprep.mubr.f32.mxu0 0.0
    %v1108 = vand.u32 %v1037, 4294901760
    %v1109 = vsub.f32 %v1037, %v1108
    %v1110 = vand.u32 %v1109, 4294901760
    %v1111 = vsub.f32 %v1109, %v1110
    %v1112 = vand.u32 %v1111, 4294901760
    %1113 = vmatmul.mubr.f32.gmra.mrb[0].mxu0 %v1112
    %v1114 = vpop.f32.mrb[0].mxu0
    %v1115 = vadd.f32 %v1034, %v1114
    %v1116 = vpop.f32.mrb[0].mxu0
    %1117 = vdwg.mxu0
    %1118 = vmatprep.subr.mxu0 0.0
    %v1119 = vand.u32 %v1025, 4294901760
    %v1120 = vsub.f32 %v1025, %v1119
    %v1121 = vand.u32 %v1120, 4294901760
    %v1122 = vsub.f32 %v1120, %v1121
    %v1123 = vand.u32 %v1122, 4294901760
    %1124 = vmatpush1.msra.mxu0 %v1123
    %1125 = vmatprep.subr.mxu0 0.0
    %v1126 = vand.u32 %v1026, 4294901760
    %v1127 = vsub.f32 %v1026, %v1126
    %v1128 = vand.u32 %v1127, 4294901760
    %v1129 = vsub.f32 %v1127, %v1128
    %v1130 = vand.u32 %v1129, 4294901760
    %1131 = vmatpush1.msra.mxu0 %v1130
    %1132 = vmatprep.subr.mxu0 0.0
    %v1133 = vand.u32 %v1027, 4294901760
    %v1134 = vsub.f32 %v1027, %v1133
    %v1135 = vand.u32 %v1134, 4294901760
    %v1136 = vsub.f32 %v1134, %v1135
    %v1137 = vand.u32 %v1136, 4294901760
    %1138 = vmatpush1.msra.mxu0 %v1137
    %1139 = vmatprep.subr.mxu0 0.0
    %v1140 = vand.u32 %v1028, 4294901760
    %v1141 = vsub.f32 %v1028, %v1140
    %v1142 = vand.u32 %v1141, 4294901760
    %v1143 = vsub.f32 %v1141, %v1142
    %v1144 = vand.u32 %v1143, 4294901760
    %1145 = vmatpush1.msra.mxu0 %v1144
    %1146 = vmatprep.subr.mxu0 0.0
    %1147 = vmatpush1.msra.mxu0 0.0
    %1148 = vmatprep.subr.mxu0 0.0
    %1149 = vmatpush1.msra.mxu0 0.0
    %1150 = vmatprep.subr.mxu0 0.0
    %1151 = vmatpush1.msra.mxu0 0.0
    %1152 = vmatprep.subr.mxu0 0.0
    %1153 = vmatpush1.msra.mxu0 0.0
    %1154 = vmatprep.subr.mxu0 0.0
    %1155 = vmatpush1.msra.mxu0 0.0
    %1156 = vmatprep.subr.mxu0 0.0
    %1157 = vmatpush1.msra.mxu0 0.0
    %1158 = vmatprep.subr.mxu0 0.0
    %1159 = vmatpush1.msra.mxu0 0.0
    %1160 = vmatprep.subr.mxu0 0.0
    %1161 = vmatpush1.msra.mxu0 0.0
    %1162 = vmatprep.subr.mxu0 0.0
    %1163 = vmatpush1.msra.mxu0 0.0
    %1164 = vmatprep.subr.mxu0 0.0
    %1165 = vmatpush1.msra.mxu0 0.0
    %1166 = vmatprep.subr.mxu0 0.0
    %1167 = vmatpush1.msra.mxu0 0.0
    %1168 = vmatprep.subr.mxu0 0.0
    %1169 = vmatpush1.msra.mxu0 0.0
    %1170 = vmatprep.subr.mxu0 0.0
    %1171 = vmatpush1.msra.mxu0 0.0
    %1172 = vmatprep.subr.mxu0 0.0
    %1173 = vmatpush1.msra.mxu0 0.0
    %1174 = vmatprep.subr.mxu0 0.0
    %1175 = vmatpush1.msra.mxu0 0.0
    %1176 = vmatprep.subr.mxu0 0.0
    %1177 = vmatpush1.msra.mxu0 0.0
    %1178 = vmatprep.subr.mxu0 0.0
    %1179 = vmatpush1.msra.mxu0 0.0
    %1180 = vmatprep.subr.mxu0 0.0
    %1181 = vmatpush1.msra.mxu0 0.0
    %1182 = vmatprep.subr.mxu0 0.0
    %1183 = vmatpush1.msra.mxu0 0.0
    %1184 = vmatprep.subr.mxu0 0.0
    %1185 = vmatpush1.msra.mxu0 0.0
    %1186 = vmatprep.subr.mxu0 0.0
    %1187 = vmatpush1.msra.mxu0 0.0
    %1188 = vmatprep.subr.mxu0 0.0
    %1189 = vmatpush1.msra.mxu0 0.0
    %1190 = vmatprep.subr.mxu0 0.0
    %1191 = vmatpush1.msra.mxu0 0.0
    %1192 = vmatprep.subr.mxu0 0.0
    %1193 = vmatpush1.msra.mxu0 0.0
    %1194 = vmatprep.subr.mxu0 0.0
    %1195 = vmatpush1.msra.mxu0 0.0
    %1196 = vmatprep.subr.mxu0 0.0
    %1197 = vmatpush1.msra.mxu0 0.0
    %1198 = vmatprep.subr.mxu0 0.0
    %1199 = vmatpush1.msra.mxu0 0.0
    %1200 = vmatprep.subr.mxu0 0.0
    %1201 = vmatpush1.msra.mxu0 0.0
    %1202 = vmatprep.mubr.f32.mxu0 0.0
    %v1203 = vand.u32 %v1037, 4294901760
    %1204 = vmatmul.mubr.f32.gmra.mrb[0].mxu0 %v1203
    %v1205 = vpop.f32.mrb[0].mxu0
    %v1206 = vadd.f32 %v1115, %v1205
    %v1207 = vpop.f32.mrb[0].mxu0
    %1208 = vdwg.mxu0
    %1209 = vmatprep.subr.mxu0 0.0
    %v1210 = vand.u32 %v1025, 4294901760
    %v1211 = vsub.f32 %v1025, %v1210
    %1212 = vmatpush1.msra.mxu0 %v1211
    %1213 = vmatprep.subr.mxu0 0.0
    %v1214 = vand.u32 %v1026, 4294901760
    %v1215 = vsub.f32 %v1026, %v1214
    %1216 = vmatpush1.msra.mxu0 %v1215
    %1217 = vmatprep.subr.mxu0 0.0
    %v1218 = vand.u32 %v1027, 4294901760
    %v1219 = vsub.f32 %v1027, %v1218
    %1220 = vmatpush1.msra.mxu0 %v1219
    %1221 = vmatprep.subr.mxu0 0.0
    %v1222 = vand.u32 %v1028, 4294901760
    %v1223 = vsub.f32 %v1028, %v1222
    %1224 = vmatpush1.msra.mxu0 %v1223
    %1225 = vmatprep.subr.mxu0 0.0
    %1226 = vmatpush1.msra.mxu0 0.0
    %1227 = vmatprep.subr.mxu0 0.0
    %1228 = vmatpush1.msra.mxu0 0.0
    %1229 = vmatprep.subr.mxu0 0.0
    %1230 = vmatpush1.msra.mxu0 0.0
    %1231 = vmatprep.subr.mxu0 0.0
    %1232 = vmatpush1.msra.mxu0 0.0
    %1233 = vmatprep.subr.mxu0 0.0
    %1234 = vmatpush1.msra.mxu0 0.0
    %1235 = vmatprep.subr.mxu0 0.0
    %1236 = vmatpush1.msra.mxu0 0.0
    %1237 = vmatprep.subr.mxu0 0.0
    %1238 = vmatpush1.msra.mxu0 0.0
    %1239 = vmatprep.subr.mxu0 0.0
    %1240 = vmatpush1.msra.mxu0 0.0
    %1241 = vmatprep.subr.mxu0 0.0
    %1242 = vmatpush1.msra.mxu0 0.0
    %1243 = vmatprep.subr.mxu0 0.0
    %1244 = vmatpush1.msra.mxu0 0.0
    %1245 = vmatprep.subr.mxu0 0.0
    %1246 = vmatpush1.msra.mxu0 0.0
    %1247 = vmatprep.subr.mxu0 0.0
    %1248 = vmatpush1.msra.mxu0 0.0
    %1249 = vmatprep.subr.mxu0 0.0
    %1250 = vmatpush1.msra.mxu0 0.0
    %1251 = vmatprep.subr.mxu0 0.0
    %1252 = vmatpush1.msra.mxu0 0.0
    %1253 = vmatprep.subr.mxu0 0.0
    %1254 = vmatpush1.msra.mxu0 0.0
    %1255 = vmatprep.subr.mxu0 0.0
    %1256 = vmatpush1.msra.mxu0 0.0
    %1257 = vmatprep.subr.mxu0 0.0
    %1258 = vmatpush1.msra.mxu0 0.0
    %1259 = vmatprep.subr.mxu0 0.0
    %1260 = vmatpush1.msra.mxu0 0.0
    %1261 = vmatprep.subr.mxu0 0.0
    %1262 = vmatpush1.msra.mxu0 0.0
    %1263 = vmatprep.subr.mxu0 0.0
    %1264 = vmatpush1.msra.mxu0 0.0
    %1265 = vmatprep.subr.mxu0 0.0
    %1266 = vmatpush1.msra.mxu0 0.0
    %1267 = vmatprep.subr.mxu0 0.0
    %1268 = vmatpush1.msra.mxu0 0.0
    %1269 = vmatprep.subr.mxu0 0.0
    %1270 = vmatpush1.msra.mxu0 0.0
    %1271 = vmatprep.subr.mxu0 0.0
    %1272 = vmatpush1.msra.mxu0 0.0
    %1273 = vmatprep.subr.mxu0 0.0
    %1274 = vmatpush1.msra.mxu0 0.0
    %1275 = vmatprep.subr.mxu0 0.0
    %1276 = vmatpush1.msra.mxu0 0.0
    %1277 = vmatprep.subr.mxu0 0.0
    %1278 = vmatpush1.msra.mxu0 0.0
    %1279 = vmatprep.subr.mxu0 0.0
    %1280 = vmatpush1.msra.mxu0 0.0
    %1281 = vmatprep.mubr.f32.mxu0 0.0
    %v1282 = vand.u32 %v1037, 4294901760
    %v1283 = vsub.f32 %v1037, %v1282
    %1284 = vmatmul.mubr.f32.gmra.mrb[0].mxu0 %v1283
    %v1285 = vpop.f32.mrb[0].mxu0
    %v1286 = vadd.f32 %v1206, %v1285
    %v1287 = vpop.f32.mrb[0].mxu0
    %1288 = vdwg.mxu0
    %1289 = vmatprep.subr.mxu0 0.0
    %v1290 = vand.u32 %v1025, 4294901760
    %1291 = vmatpush1.msra.mxu0 %v1290
    %1292 = vmatprep.subr.mxu0 0.0
    %v1293 = vand.u32 %v1026, 4294901760
    %1294 = vmatpush1.msra.mxu0 %v1293
    %1295 = vmatprep.subr.mxu0 0.0
    %v1296 = vand.u32 %v1027, 4294901760
    %1297 = vmatpush1.msra.mxu0 %v1296
    %1298 = vmatprep.subr.mxu0 0.0
    %v1299 = vand.u32 %v1028, 4294901760
    %1300 = vmatpush1.msra.mxu0 %v1299
    %1301 = vmatprep.subr.mxu0 0.0
    %1302 = vmatpush1.msra.mxu0 0.0
    %1303 = vmatprep.subr.mxu0 0.0
    %1304 = vmatpush1.msra.mxu0 0.0
    %1305 = vmatprep.subr.mxu0 0.0
    %1306 = vmatpush1.msra.mxu0 0.0
    %1307 = vmatprep.subr.mxu0 0.0
    %1308 = vmatpush1.msra.mxu0 0.0
    %1309 = vmatprep.subr.mxu0 0.0
    %1310 = vmatpush1.msra.mxu0 0.0
    %1311 = vmatprep.subr.mxu0 0.0
    %1312 = vmatpush1.msra.mxu0 0.0
    %1313 = vmatprep.subr.mxu0 0.0
    %1314 = vmatpush1.msra.mxu0 0.0
    %1315 = vmatprep.subr.mxu0 0.0
    %1316 = vmatpush1.msra.mxu0 0.0
    %1317 = vmatprep.subr.mxu0 0.0
    %1318 = vmatpush1.msra.mxu0 0.0
    %1319 = vmatprep.subr.mxu0 0.0
    %1320 = vmatpush1.msra.mxu0 0.0
    %1321 = vmatprep.subr.mxu0 0.0
    %1322 = vmatpush1.msra.mxu0 0.0
    %1323 = vmatprep.subr.mxu0 0.0
    %1324 = vmatpush1.msra.mxu0 0.0
    %1325 = vmatprep.subr.mxu0 0.0
    %1326 = vmatpush1.msra.mxu0 0.0
    %1327 = vmatprep.subr.mxu0 0.0
    %1328 = vmatpush1.msra.mxu0 0.0
    %1329 = vmatprep.subr.mxu0 0.0
    %1330 = vmatpush1.msra.mxu0 0.0
    %1331 = vmatprep.subr.mxu0 0.0
    %1332 = vmatpush1.msra.mxu0 0.0
    %1333 = vmatprep.subr.mxu0 0.0
    %1334 = vmatpush1.msra.mxu0 0.0
    %1335 = vmatprep.subr.mxu0 0.0
    %1336 = vmatpush1.msra.mxu0 0.0
    %1337 = vmatprep.subr.mxu0 0.0
    %1338 = vmatpush1.msra.mxu0 0.0
    %1339 = vmatprep.subr.mxu0 0.0
    %1340 = vmatpush1.msra.mxu0 0.0
    %1341 = vmatprep.subr.mxu0 0.0
    %1342 = vmatpush1.msra.mxu0 0.0
    %1343 = vmatprep.subr.mxu0 0.0
    %1344 = vmatpush1.msra.mxu0 0.0
    %1345 = vmatprep.subr.mxu0 0.0
    %1346 = vmatpush1.msra.mxu0 0.0
    %1347 = vmatprep.subr.mxu0 0.0
    %1348 = vmatpush1.msra.mxu0 0.0
    %1349 = vmatprep.subr.mxu0 0.0
    %1350 = vmatpush1.msra.mxu0 0.0
    %1351 = vmatprep.subr.mxu0 0.0
    %1352 = vmatpush1.msra.mxu0 0.0
    %1353 = vmatprep.subr.mxu0 0.0
    %1354 = vmatpush1.msra.mxu0 0.0
    %1355 = vmatprep.subr.mxu0 0.0
    %1356 = vmatpush1.msra.mxu0 0.0
    %1357 = vmatprep.mubr.f32.mxu0 0.0
    %v1358 = vand.u32 %v1037, 4294901760
    %v1359 = vsub.f32 %v1037, %v1358
    %v1360 = vand.u32 %v1359, 4294901760
    %1361 = vmatmul.mubr.f32.gmra.mrb[0].mxu0 %v1360
    %v1362 = vpop.f32.mrb[0].mxu0
    %v1363 = vadd.f32 %v1286, %v1362
    %v1364 = vpop.f32.mrb[0].mxu0
    %1365 = vdwg.mxu0
    %1366 = vmatprep.subr.mxu0 0.0
    %v1367 = vand.u32 %v1025, 4294901760
    %v1368 = vsub.f32 %v1025, %v1367
    %v1369 = vand.u32 %v1368, 4294901760
    %1370 = vmatpush1.msra.mxu0 %v1369
    %1371 = vmatprep.subr.mxu0 0.0
    %v1372 = vand.u32 %v1026, 4294901760
    %v1373 = vsub.f32 %v1026, %v1372
    %v1374 = vand.u32 %v1373, 4294901760
    %1375 = vmatpush1.msra.mxu0 %v1374
    %1376 = vmatprep.subr.mxu0 0.0
    %v1377 = vand.u32 %v1027, 4294901760
    %v1378 = vsub.f32 %v1027, %v1377
    %v1379 = vand.u32 %v1378, 4294901760
    %1380 = vmatpush1.msra.mxu0 %v1379
    %1381 = vmatprep.subr.mxu0 0.0
    %v1382 = vand.u32 %v1028, 4294901760
    %v1383 = vsub.f32 %v1028, %v1382
    %v1384 = vand.u32 %v1383, 4294901760
    %1385 = vmatpush1.msra.mxu0 %v1384
    %1386 = vmatprep.subr.mxu0 0.0
    %1387 = vmatpush1.msra.mxu0 0.0
    %1388 = vmatprep.subr.mxu0 0.0
    %1389 = vmatpush1.msra.mxu0 0.0
    %1390 = vmatprep.subr.mxu0 0.0
    %1391 = vmatpush1.msra.mxu0 0.0
    %1392 = vmatprep.subr.mxu0 0.0
    %1393 = vmatpush1.msra.mxu0 0.0
    %1394 = vmatprep.subr.mxu0 0.0
    %1395 = vmatpush1.msra.mxu0 0.0
    %1396 = vmatprep.subr.mxu0 0.0
    %1397 = vmatpush1.msra.mxu0 0.0
    %1398 = vmatprep.subr.mxu0 0.0
    %1399 = vmatpush1.msra.mxu0 0.0
    %1400 = vmatprep.subr.mxu0 0.0
    %1401 = vmatpush1.msra.mxu0 0.0
    %1402 = vmatprep.subr.mxu0 0.0
    %1403 = vmatpush1.msra.mxu0 0.0
    %1404 = vmatprep.subr.mxu0 0.0
    %1405 = vmatpush1.msra.mxu0 0.0
    %1406 = vmatprep.subr.mxu0 0.0
    %1407 = vmatpush1.msra.mxu0 0.0
    %1408 = vmatprep.subr.mxu0 0.0
    %1409 = vmatpush1.msra.mxu0 0.0
    %1410 = vmatprep.subr.mxu0 0.0
    %1411 = vmatpush1.msra.mxu0 0.0
    %1412 = vmatprep.subr.mxu0 0.0
    %1413 = vmatpush1.msra.mxu0 0.0
    %1414 = vmatprep.subr.mxu0 0.0
    %1415 = vmatpush1.msra.mxu0 0.0
    %1416 = vmatprep.subr.mxu0 0.0
    %1417 = vmatpush1.msra.mxu0 0.0
    %1418 = vmatprep.subr.mxu0 0.0
    %1419 = vmatpush1.msra.mxu0 0.0
    %1420 = vmatprep.subr.mxu0 0.0
    %1421 = vmatpush1.msra.mxu0 0.0
    %1422 = vmatprep.subr.mxu0 0.0
    %1423 = vmatpush1.msra.mxu0 0.0
    %1424 = vmatprep.subr.mxu0 0.0
    %1425 = vmatpush1.msra.mxu0 0.0
    %1426 = vmatprep.subr.mxu0 0.0
    %1427 = vmatpush1.msra.mxu0 0.0
    %1428 = vmatprep.subr.mxu0 0.0
    %1429 = vmatpush1.msra.mxu0 0.0
    %1430 = vmatprep.subr.mxu0 0.0
    %1431 = vmatpush1.msra.mxu0 0.0
    %1432 = vmatprep.subr.mxu0 0.0
    %1433 = vmatpush1.msra.mxu0 0.0
    %1434 = vmatprep.subr.mxu0 0.0
    %1435 = vmatpush1.msra.mxu0 0.0
    %1436 = vmatprep.subr.mxu0 0.0
    %1437 = vmatpush1.msra.mxu0 0.0
    %1438 = vmatprep.subr.mxu0 0.0
    %1439 = vmatpush1.msra.mxu0 0.0
    %1440 = vmatprep.subr.mxu0 0.0
    %1441 = vmatpush1.msra.mxu0 0.0
    %1442 = vmatprep.mubr.f32.mxu0 0.0
    %v1443 = vand.u32 %v1037, 4294901760
    %1444 = vmatmul.mubr.f32.gmra.mrb[0].mxu0 %v1443
    %v1445 = vpop.f32.mrb[0].mxu0
    %v1446 = vadd.f32 %v1363, %v1445
    %v1447 = vpop.f32.mrb[0].mxu0
    %1448 = vdwg.mxu0
    %1449 = vmatprep.subr.mxu0 0.0
    %v1450 = vand.u32 %v1025, 4294901760
    %1451 = vmatpush1.msra.mxu0 %v1450
    %1452 = vmatprep.subr.mxu0 0.0
    %v1453 = vand.u32 %v1026, 4294901760
    %1454 = vmatpush1.msra.mxu0 %v1453
    %1455 = vmatprep.subr.mxu0 0.0
    %v1456 = vand.u32 %v1027, 4294901760
    %1457 = vmatpush1.msra.mxu0 %v1456
    %1458 = vmatprep.subr.mxu0 0.0
    %v1459 = vand.u32 %v1028, 4294901760
    %1460 = vmatpush1.msra.mxu0 %v1459
    %1461 = vmatprep.subr.mxu0 0.0
    %1462 = vmatpush1.msra.mxu0 0.0
    %1463 = vmatprep.subr.mxu0 0.0
    %1464 = vmatpush1.msra.mxu0 0.0
    %1465 = vmatprep.subr.mxu0 0.0
    %1466 = vmatpush1.msra.mxu0 0.0
    %1467 = vmatprep.subr.mxu0 0.0
    %1468 = vmatpush1.msra.mxu0 0.0
    %1469 = vmatprep.subr.mxu0 0.0
    %1470 = vmatpush1.msra.mxu0 0.0
    %1471 = vmatprep.subr.mxu0 0.0
    %1472 = vmatpush1.msra.mxu0 0.0
    %1473 = vmatprep.subr.mxu0 0.0
    %1474 = vmatpush1.msra.mxu0 0.0
    %1475 = vmatprep.subr.mxu0 0.0
    %1476 = vmatpush1.msra.mxu0 0.0
    %1477 = vmatprep.subr.mxu0 0.0
    %1478 = vmatpush1.msra.mxu0 0.0
    %1479 = vmatprep.subr.mxu0 0.0
    %1480 = vmatpush1.msra.mxu0 0.0
    %1481 = vmatprep.subr.mxu0 0.0
    %1482 = vmatpush1.msra.mxu0 0.0
    %1483 = vmatprep.subr.mxu0 0.0
    %1484 = vmatpush1.msra.mxu0 0.0
    %1485 = vmatprep.subr.mxu0 0.0
    %1486 = vmatpush1.msra.mxu0 0.0
    %1487 = vmatprep.subr.mxu0 0.0
    %1488 = vmatpush1.msra.mxu0 0.0
    %1489 = vmatprep.subr.mxu0 0.0
    %1490 = vmatpush1.msra.mxu0 0.0
    %1491 = vmatprep.subr.mxu0 0.0
    %1492 = vmatpush1.msra.mxu0 0.0
    %1493 = vmatprep.subr.mxu0 0.0
    %1494 = vmatpush1.msra.mxu0 0.0
    %1495 = vmatprep.subr.mxu0 0.0
    %1496 = vmatpush1.msra.mxu0 0.0
    %1497 = vmatprep.subr.mxu0 0.0
    %1498 = vmatpush1.msra.mxu0 0.0
    %1499 = vmatprep.subr.mxu0 0.0
    %1500 = vmatpush1.msra.mxu0 0.0
    %1501 = vmatprep.subr.mxu0 0.0
    %1502 = vmatpush1.msra.mxu0 0.0
    %1503 = vmatprep.subr.mxu0 0.0
    %1504 = vmatpush1.msra.mxu0 0.0
    %1505 = vmatprep.subr.mxu0 0.0
    %1506 = vmatpush1.msra.mxu0 0.0
    %1507 = vmatprep.subr.mxu0 0.0
    %1508 = vmatpush1.msra.mxu0 0.0
    %1509 = vmatprep.subr.mxu0 0.0
    %1510 = vmatpush1.msra.mxu0 0.0
    %1511 = vmatprep.subr.mxu0 0.0
    %1512 = vmatpush1.msra.mxu0 0.0
    %1513 = vmatprep.subr.mxu0 0.0
    %1514 = vmatpush1.msra.mxu0 0.0
    %1515 = vmatprep.subr.mxu0 0.0
    %1516 = vmatpush1.msra.mxu0 0.0
    %1517 = vmatprep.mubr.f32.mxu0 0.0
    %v1518 = vand.u32 %v1037, 4294901760
    %1519 = vmatmul.mubr.f32.gmra.mrb[0].mxu0 %v1518
    %v1520 = vpop.f32.mrb[0].mxu0
    %v1521 = vadd.f32 %v1446, %v1520
    %v1522 = vpop.f32.mrb[0].mxu0
    %1523 = vdwg.mxu0
    %v1524 = vld [vmem:[%s7] sm:$0x1]
    %v1525 = vmul.f32 %v1524, 1.442695
    %v1526 = vpow.pop %v1525
    %v1527 = vld [vmem:[%s8] sm:$0x3]
    %v1529 = vlaneseq
    %v1530 = vshrl.u32 %v1529, 7
    %v1531 = vsub.s32 0, %v1530
    %v1532 = vrot.slane %v1526, %v1531
    %v1534 = vmul.f32 %v1532, %v1527
    %v1535 = vadd.f32 %v1521, %v1534
    %vm1536 = vcmask 24576
    %v1537 = vsel %vm1536, %v1524, 0.0
    %1538 = vadd.xlane.f32.xlu0 %v1537
    %v1539 = vpop.xlane.xlu0 %1538
    %v1540 = vsub.f32 0.0, %v1539
    %v1541 = vsub.f32 %v1540, 3.675754
    %v1542 = vmul.f32 %v1527, %v1527
    %vm1543 = vcmask 25600
    %v1544 = vsel %vm1543, %v1542, 0.0
    %1545 = vadd.xlane.f32.xlu0 %v1544
    %v1546 = vpop.xlane.xlu0 %1545
    %v1547 = vmul.f32 %v1546, -0.5
    %v1548 = vlaneseq
    %v1549 = vshrl.u32 %v1548, 7
    %v1550 = vsub.s32 0, %v1549
    %v1551 = vrot.slane %v1541, %v1550
    %v1552 = vadd.f32 %v1547, %v1551
    %v1553 = vsub.f32 0.0, %v1524
    %v1554 = vmul.f32 %v1553, 1.442695
    %v1555 = vpow.pop %v1554
    %v1556 = vld [vmem:[%s9] sm:$0x3]
    %v1557 = vsub.f32 %v1556, %v1521
    %v1559 = vlaneseq
    %v1560 = vshrl.u32 %v1559, 7
    %v1561 = vsub.s32 0, %v1560
    %v1562 = vrot.slane %v1555, %v1561
    %v1564 = vmul.f32 %v1557, %v1562
    %v1565 = vmul.f32 %v1564, %v1564
    %v1566 = vsel %vm1543, %v1565, 0.0
    %1567 = vadd.xlane.f32.xlu0 %v1566
    %v1568 = vpop.xlane.xlu0 %1567
    %v1569 = vmul.f32 %v1568, -0.5
    %v1570 = vadd.f32 %v1569, %v1551
    %vm1571 = vcmask 31744
    %v1572 = vsel %vm1571, %v1535, %v1570
    %vm1573 = vcmask 39936
    %v1574 = vsel %vm1573, %v1572, %v1552
    %vm1575 = vcmask 41984
    %1576 = vst.msk [vmem:[#allocation5] sm:$0x3] %vm1575, %v1574
    // Predicated region
    $region46: #{tpu_custom_call.1} parent=1 // pred_check
      _
    $region47: #{tpu_custom_call.1} parent=1 // pred_check_branch
      %1578 = sbr.rel (0) target = $region49
    $region48: #{tpu_custom_call.1} parent=1 // pred_region
      %s1580 = ssub.s32 32, 32
      %1581 = vsyncadd [#allocation4], %s1580
      %s1583 = sshll.u32 [#allocation5], 4
      %s1584 = int_to_ptr.vmem [resolvable:$true] %s1583
      %1586 = dma.vmem_to_hbm [thread:$0]  %s1584, 32, %s10, [#allocation4]
    $region49: #{tpu_custom_call.1} parent=1 // pred_fallthru
      _
    // Predicated region
    $region50: #{tpu_custom_call.1} parent=1 // pred_check
      _
    $region51: #{tpu_custom_call.1} parent=1 // pred_check_branch
      %1588 = sbr.rel (0) target = $region53
    $region52: #{tpu_custom_call.1} parent=1 // pred_region
      %1589 = dma.done [#allocation4], 32
    $region53: #{tpu_custom_call.1} parent=1 // pred_fallthru
      _
    %1590 = vsyncpa [#allocation3], 1
    %1591 = vsyncpa [#allocation4], 1

</llo_original>
